<compile_context>
chip_gen: v7x
topology: tpu7x:2x2x1
jax: 0.10.0
libtpu: 0.0.40
codegen_flags: <defaults>
</compile_context>

<pallas_src>
import functools

import jax
import jax.numpy as jnp
from jax import lax
from jax.experimental import pallas as pl
from jax.experimental.pallas import tpu as pltpu


# ----------------------------------------------------------------------------- kernel
def _posenet_kernel(a_ref,
                    wa_ref, ba_ref, wb_ref, bb_ref,
                    w1_ref, b1_ref, w2_ref, b2_ref, w3_ref, b3_ref,
                    emb1_ref, emb2_ref, ap_ref,
                    p_ee, p_eo, p_oe, p_oo, im_ref,
                    *, H4, W4):
    C = wa_ref.shape[-1]        # 128
    N = H4 * W4                 # number of positions of the final feature map

    def elu(y):
        # exp(min(y,0)) avoids spurious overflow on the (discarded) positive branch.
        return jnp.where(y > 0, y, jnp.exp(jnp.minimum(y, 0.0)) - 1.0)

    # ---- sep_cov[0]: 3x3 stride-2 conv == one deep-K (K=1152) matmul over the glue
    # im2col whose rows are grouped by output-(row,col) parity.
    y1 = elu(jnp.dot(a_ref[0], wa_ref[...], preferred_element_type=jnp.float32)
             + ba_ref[...])                                     # (4N, 128) f32

    # ---- scatter conv_a's output into the four parity planes of the zero-padded map.
    # Interiors are fully overwritten each grid step; the zero fill only supplies the
    # "same"-padding border (tiny here; zero only the border ring at real resolutions).
    p_ee[...] = jnp.zeros(p_ee.shape, p_ee.dtype)
    p_eo[...] = jnp.zeros(p_eo.shape, p_eo.dtype)
    p_oe[...] = jnp.zeros(p_oe.shape, p_oe.dtype)
    p_oo[...] = jnp.zeros(p_oo.shape, p_oo.dtype)
    p_oo[0:H4,     0:W4,     :] = y1[0 * N:1 * N].reshape(H4, W4, C)   # (even row, even col)
    p_oe[0:H4,     1:W4 + 1, :] = y1[1 * N:2 * N].reshape(H4, W4, C)   # (even row, odd  col)
    p_eo[1:H4 + 1, 0:W4,     :] = y1[2 * N:3 * N].reshape(H4, W4, C)   # (odd  row, even col)
    p_ee[1:H4 + 1, 1:W4 + 1, :] = y1[3 * N:4 * N].reshape(H4, W4, C)   # (odd  row, odd  col)

    # ---- sep_cov[1]: stride-2 im2col from contiguous slices of the parity planes,
    # then again a single K=1152 matmul (lane-aligned 128-wide column blocks).
    planes = {(0, 0): p_ee, (0, 1): p_eo, (1, 0): p_oe, (1, 1): p_oo}
    for ky in range(3):
        for kx in range(3):
            src = planes[(ky % 2, kx % 2)]
            r0, c0 = ky // 2, kx // 2
            t = 3 * ky + kx
            im_ref[:, t * C:(t + 1) * C] = (
                src[r0:r0 + H4, c0:c0 + W4, :].reshape(N, C).astype(im_ref.dtype))
    y2 = elu(jnp.dot(im_ref[...], wb_ref[...], preferred_element_type=jnp.float32)
             + bb_ref[...])                                     # (N, 128) == feat_map_1d^T

    # ---- 1x1 conv1d stack: (N, Cin) @ (Cin, Cout), fully lane-dense outputs.
    emb1 = elu(jnp.dot(y2.astype(w1_ref.dtype), w1_ref[...],
                       preferred_element_type=jnp.float32) + b1_ref[...])    # (N, 256)
    emb2 = elu(jnp.dot(emb1.astype(w2_ref.dtype), w2_ref[...],
                       preferred_element_type=jnp.float32) + b2_ref[...])    # (N, 512)
    emb3 = elu(jnp.dot(emb2.astype(w3_ref.dtype), w3_ref[...],
                       preferred_element_type=jnp.float32) + b3_ref[...])    # (N, 1024)

    emb1_ref[0] = emb1
    emb2_ref[0] = emb2
    ap_ref[0] = jnp.mean(emb3, axis=0, keepdims=True)           # avg_pool1d over all N


# ----------------------------------------------------------------------------- glue
def posenet_feat_forward(feat_map, params):
    """feat_map: (B, 128, H, W) f32.  Returns (emb1, emb2, ap_x) in PyTorch NCW layout."""
    (wa, ba), (wb, bb), (w1, b1), (w2, b2), (w3, b3) = params
    B, C, H, W = feat_map.shape
    H2, W2 = (H - 1) // 2 + 1, (W - 1) // 2 + 1
    assert H2 % 2 == 0 and W2 % 2 == 0, "kernel assumes even sep_cov[0] output size"
    H4, W4 = H2 // 2, W2 // 2
    N = H4 * W4

    # glue: NHWC, zero pad, stride-2 im2col for sep_cov[0]; rows grouped by output parity.
    x = feat_map.transpose(0, 2, 3, 1)
    xp = jnp.pad(x, ((0, 0), (1, 1), (1, 1), (0, 0)))
    taps = [lax.slice(xp, (0, ky, kx, 0),
                      (B, ky + 2 * H2 - 1, kx + 2 * W2 - 1, C), (1, 2, 2, 1))
            for ky in range(3) for kx in range(3)]
    a = jnp.concatenate(taps, axis=-1)                                     # (B, H2, W2, 9C)
    a = a.reshape(B, H4, 2, W4, 2, 9 * C).transpose(0, 2, 4, 1, 3, 5)
    a = a.reshape(B, 4 * N, 9 * C).astype(wa.dtype)                        # parity-grouped

    wa_m = wa.reshape(9 * C, C)      # (ky, kx, cin) rows -> matches im2col tap order
    wb_m = wb.reshape(9 * C, C)

    kernel = functools.partial(_posenet_kernel, H4=H4, W4=W4)
    full = lambda b: (0, 0)
    grid_spec = pltpu.PrefetchScalarGridSpec(
        num_scalar_prefetch=0,
        grid=(B,),
        in_specs=[
            pl.BlockSpec((1, 4 * N, 9 * C), lambda b: (b, 0, 0)),
            pl.BlockSpec(wa_m.shape, full), pl.BlockSpec(ba.shape, full),
            pl.BlockSpec(wb_m.shape, full), pl.BlockSpec(bb.shape, full),
            pl.BlockSpec(w1.shape, full), pl.BlockSpec(b1.shape, full),
            pl.BlockSpec(w2.shape, full), pl.BlockSpec(b2.shape, full),
            pl.BlockSpec(w3.shape, full), pl.BlockSpec(b3.shape, full),
        ],
        out_specs=(
            pl.BlockSpec((1, N, 256), lambda b: (b, 0, 0)),
            pl.BlockSpec((1, N, 512), lambda b: (b, 0, 0)),
            pl.BlockSpec((1, 1, 1024), lambda b: (b, 0, 0)),
        ),
        scratch_shapes=[
            pltpu.VMEM((H4 + 1, W4 + 1, C), jnp.float32),    # parity plane (even, even)
            pltpu.VMEM((H4 + 1, W4 + 1, C), jnp.float32),    # parity plane (even, odd)
            pltpu.VMEM((H4 + 1, W4 + 1, C), jnp.float32),    # parity plane (odd,  even)
            pltpu.VMEM((H4 + 1, W4 + 1, C), jnp.float32),    # parity plane (odd,  odd)
            pltpu.VMEM((N, 9 * C), jnp.bfloat16),            # conv_b im2col
        ])

    emb1, emb2, ap = pl.pallas_call(
        kernel,
        out_shape=(jax.ShapeDtypeStruct((B, N, 256), jnp.float32),
                   jax.ShapeDtypeStruct((B, N, 512), jnp.float32),
                   jax.ShapeDtypeStruct((B, 1, 1024), jnp.float32)),
        grid_spec=grid_spec,
        compiler_params=pltpu.CompilerParams(
            dimension_semantics=("parallel",)),      # shard batch across v7x's 2 TCs
    )(a, wa_m, ba, wb_m, bb, w1, b1, w2, b2, w3, b3)

    ap_x = jnp.broadcast_to(ap, (B, N, 1024))        # .repeat(1,1,N) done in glue
    return (emb1.transpose(0, 2, 1),                 # (B, 256, N)
            emb2.transpose(0, 2, 1),                 # (B, 512, N)
            ap_x.transpose(0, 2, 1))                 # (B, 1024, N)


# ----------------------------------------------------------------------------- params
def init_params(key):
    """Synthetic Conv(+folded eval-mode BatchNorm) params; weights pre-cast to bf16."""
    def bn_fold(k, shape_w, fan_in, cout):
        k1, k2, k3, k4, k5 = jax.random.split(k, 5)
        w = jax.random.normal(k1, shape_w, jnp.float32) * (2.0 / fan_in) ** 0.5
        gamma = 1.0 + 0.1 * jax.random.normal(k2, (cout,), jnp.float32)
        beta = 0.1 * jax.random.normal(k3, (cout,), jnp.float32)
        mean = 0.1 * jax.random.normal(k4, (cout,), jnp.float32)
        var = jnp.abs(1.0 + 0.1 * jax.random.normal(k5, (cout,), jnp.float32))
        scale = gamma / jnp.sqrt(var + 1e-5)
        bias = (beta - mean * scale).reshape(1, cout)
        w = (w * scale).astype(jnp.bfloat16)         # fold BN scale into conv weights
        return w, bias
    ks = jax.random.split(key, 5)
    wa, ba = bn_fold(ks[0], (3, 3, 128, 128), 9 * 128, 128)    # sep_cov[0] (HWIO)
    wb, bb = bn_fold(ks[1], (3, 3, 128, 128), 9 * 128, 128)    # sep_cov[1] (HWIO)
    w1, b1 = bn_fold(ks[2], (128, 256), 128, 256)              # conv1 (1x1)
    w2, b2 = bn_fold(ks[3], (256, 512), 256, 512)              # conv2 (1x1)
    w3, b3 = bn_fold(ks[4], (512, 1024), 512, 1024)            # conv3 (1x1)
    return ((wa, ba), (wb, bb), (w1, b1), (w2, b2), (w3, b3))


# ----------------------------------------------------------------------------- reference
def reference_forward(feat_map, params):
    (wa, ba), (wb, bb), (w1, b1), (w2, b2), (w3, b3) = params

    def elu(y):
        return jnp.where(y > 0, y, jnp.exp(jnp.minimum(y, 0.0)) - 1.0)

    def conv_s2(x, w, b):
        y = lax.conv_general_dilated(x.astype(jnp.bfloat16), w, (2, 2), [(1, 1), (1, 1)],
                                     dimension_numbers=('NHWC', 'HWIO', 'NHWC'),
                                     preferred_element_type=jnp.float32)
        return elu(y + b.reshape(1, 1, 1, -1))

    def dense(x, w, b):
        y = jnp.einsum('bnc,cd->bnd', x.astype(jnp.bfloat16), w,
                       preferred_element_type=jnp.float32)
        return elu(y + b.reshape(1, 1, -1))

    x = feat_map.transpose(0, 2, 3, 1)
    x = conv_s2(x, wa, ba)
    x = conv_s2(x, wb, bb)
    B = x.shape[0]
    xm = x.reshape(B, -1, x.shape[-1])               # (B, N, 128), raster over (h, w)
    emb1 = dense(xm, w1, b1)
    emb2 = dense(emb1, w2, b2)
    emb3 = dense(emb2, w3, b3)
    ap = jnp.mean(emb3, axis=1, keepdims=True)       # (B, 1, 1024)
    return emb1, emb2, ap


# ----------------------------------------------------------------------------- main
if __name__ == "__main__":
    key = jax.random.PRNGKey(0)
    kx, kp = jax.random.split(key)
    B, Cin, H, W = 2, 128, 16, 16
    feat_map = jax.random.normal(kx, (B, Cin, H, W), jnp.float32)
    params = init_params(kp)

    emb1, emb2, ap_x = jax.jit(posenet_feat_forward)(feat_map, params)
    emb1, emb2, ap_x = jax.block_until_ready((emb1, emb2, ap_x))

    N = (H // 4) * (W // 4)
    assert emb1.shape == (B, 256, N), emb1.shape
    assert emb2.shape == (B, 512, N), emb2.shape
    assert ap_x.shape == (B, 1024, N), ap_x.shape

    r1, r2, rap = reference_forward(feat_map, params)
    r1 = r1.transpose(0, 2, 1)
    r2 = r2.transpose(0, 2, 1)
    rapx = jnp.broadcast_to(rap, (B, N, 1024)).transpose(0, 2, 1)

    for got, ref in ((emb1, r1), (emb2, r2), (ap_x, rapx)):
        assert bool(jnp.isfinite(got).all())
        err = float(jnp.max(jnp.abs(got - ref)))
        assert bool(jnp.allclose(got, ref, atol=2e-3, rtol=2e-3)), err

    print("KERNEL_OK")
</pallas_src>

<mosaic_0001>
module attributes {stable_mosaic.version = 11 : i64} {
  func.func @_posenet_kernel(%arg0: i32, %arg1: memref<1x64x1152xbf16, #tpu.memory_space<vmem>>, %arg2: memref<1152x128xbf16, #tpu.memory_space<vmem>>, %arg3: memref<1x128xf32, #tpu.memory_space<vmem>>, %arg4: memref<1152x128xbf16, #tpu.memory_space<vmem>>, %arg5: memref<1x128xf32, #tpu.memory_space<vmem>>, %arg6: memref<128x256xbf16, #tpu.memory_space<vmem>>, %arg7: memref<1x256xf32, #tpu.memory_space<vmem>>, %arg8: memref<256x512xbf16, #tpu.memory_space<vmem>>, %arg9: memref<1x512xf32, #tpu.memory_space<vmem>>, %arg10: memref<512x1024xbf16, #tpu.memory_space<vmem>>, %arg11: memref<1x1024xf32, #tpu.memory_space<vmem>>, %arg12: memref<1x16x256xf32, #tpu.memory_space<vmem>>, %arg13: memref<1x16x512xf32, #tpu.memory_space<vmem>>, %arg14: memref<1x1x1024xf32, #tpu.memory_space<vmem>>, %arg15: memref<5x5x128xf32, #tpu.memory_space<vmem>>, %arg16: memref<5x5x128xf32, #tpu.memory_space<vmem>>, %arg17: memref<5x5x128xf32, #tpu.memory_space<vmem>>, %arg18: memref<5x5x128xf32, #tpu.memory_space<vmem>>, %arg19: memref<16x1152xbf16, #tpu.memory_space<vmem>>) attributes {dimension_semantics = [#tpu.dimension_semantics<parallel>], iteration_bounds = array<i64: 2>, scalar_prefetch = 0 : i64, scratch_operands = 5 : i64, tpu.core_type = #tpu.core_type<tc>, window_params = [{transform_indices = @transform_0, window_bounds = array<i64: 1, 64, 1152>}, {pipeline_mode = #tpu.pipeline_mode<synchronous>, transform_indices = @transform_1, window_bounds = array<i64: 1152, 128>}, {pipeline_mode = #tpu.pipeline_mode<synchronous>, transform_indices = @transform_2, window_bounds = array<i64: 1, 128>}, {pipeline_mode = #tpu.pipeline_mode<synchronous>, transform_indices = @transform_3, window_bounds = array<i64: 1152, 128>}, {pipeline_mode = #tpu.pipeline_mode<synchronous>, transform_indices = @transform_4, window_bounds = array<i64: 1, 128>}, {pipeline_mode = #tpu.pipeline_mode<synchronous>, transform_indices = @transform_5, window_bounds = array<i64: 128, 256>}, {pipeline_mode = #tpu.pipeline_mode<synchronous>, transform_indices = @transform_6, window_bounds = array<i64: 1, 256>}, {pipeline_mode = #tpu.pipeline_mode<synchronous>, transform_indices = @transform_7, window_bounds = array<i64: 256, 512>}, {pipeline_mode = #tpu.pipeline_mode<synchronous>, transform_indices = @transform_8, window_bounds = array<i64: 1, 512>}, {pipeline_mode = #tpu.pipeline_mode<synchronous>, transform_indices = @transform_9, window_bounds = array<i64: 512, 1024>}, {pipeline_mode = #tpu.pipeline_mode<synchronous>, transform_indices = @transform_10, window_bounds = array<i64: 1, 1024>}, {transform_indices = @transform_11, window_bounds = array<i64: 1, 16, 256>}, {transform_indices = @transform_12, window_bounds = array<i64: 1, 16, 512>}, {transform_indices = @transform_13, window_bounds = array<i64: 1, 1, 1024>}]} {
    %c0 = arith.constant 0 : index
    %c0_0 = arith.constant 0 : index
    %c0_1 = arith.constant 0 : index
    %0 = vector.load %arg1[%c0, %c0_0, %c0_1] : memref<1x64x1152xbf16, #tpu.memory_space<vmem>>, vector<1x64x1152xbf16>
    %1 = vector.shape_cast %0 : vector<1x64x1152xbf16> to vector<64x1152xbf16>
    %c0_2 = arith.constant 0 : index
    %c0_3 = arith.constant 0 : index
    %2 = vector.load %arg2[%c0_2, %c0_3] : memref<1152x128xbf16, #tpu.memory_space<vmem>>, vector<1152x128xbf16>
    %cst = arith.constant dense<0.000000e+00> : vector<64x128xf32>
    %3 = tpu.matmul %1, %2, %cst {dimension_numbers = #tpu.dot_dimension_numbers<[1], [0], [0], [1], [0, 0, 1, 1], [], []>} : vector<64x1152xbf16>, vector<1152x128xbf16>, vector<64x128xf32> -> vector<64x128xf32>
    %c0_4 = arith.constant 0 : index
    %c0_5 = arith.constant 0 : index
    %4 = vector.load %arg3[%c0_4, %c0_5] : memref<1x128xf32, #tpu.memory_space<vmem>>, vector<1x128xf32>
    %5 = vector.broadcast %4 : vector<1x128xf32> to vector<64x128xf32>
    %6 = arith.addf %3, %5 : vector<64x128xf32>
    %cst_6 = arith.constant 0.000000e+00 : f32
    %7 = vector.broadcast %cst_6 : f32 to vector<64x128xf32>
    %8 = arith.cmpf ogt, %6, %7 : vector<64x128xf32>
    %cst_7 = arith.constant 0.000000e+00 : f32
    %9 = vector.broadcast %cst_7 : f32 to vector<64x128xf32>
    %10 = arith.minimumf %6, %9 : vector<64x128xf32>
    %11 = math.exp %10 : vector<64x128xf32>
    %cst_8 = arith.constant 1.000000e+00 : f32
    %12 = vector.broadcast %cst_8 : f32 to vector<64x128xf32>
    %13 = arith.subf %11, %12 : vector<64x128xf32>
    %14 = arith.select %8, %6, %13 : vector<64x128xi1>, vector<64x128xf32>
    %cst_9 = arith.constant 0.000000e+00 : f32
    %15 = vector.broadcast %cst_9 : f32 to vector<5x5x128xf32>
    %c0_10 = arith.constant 0 : index
    %c0_11 = arith.constant 0 : index
    %c0_12 = arith.constant 0 : index
    %16 = vector.load %arg15[%c0_10, %c0_11, %c0_12] : memref<5x5x128xf32, #tpu.memory_space<vmem>>, vector<5x5x128xf32>
    tpu.vector_store %arg15[%c0_10, %c0_11, %c0_12], %15 {strides = array<i32>} : memref<5x5x128xf32, #tpu.memory_space<vmem>>, vector<5x5x128xf32>,
    %cst_13 = arith.constant 0.000000e+00 : f32
    %17 = vector.broadcast %cst_13 : f32 to vector<5x5x128xf32>
    %c0_14 = arith.constant 0 : index
    %c0_15 = arith.constant 0 : index
    %c0_16 = arith.constant 0 : index
    %18 = vector.load %arg16[%c0_14, %c0_15, %c0_16] : memref<5x5x128xf32, #tpu.memory_space<vmem>>, vector<5x5x128xf32>
    tpu.vector_store %arg16[%c0_14, %c0_15, %c0_16], %17 {strides = array<i32>} : memref<5x5x128xf32, #tpu.memory_space<vmem>>, vector<5x5x128xf32>,
    %cst_17 = arith.constant 0.000000e+00 : f32
    %19 = vector.broadcast %cst_17 : f32 to vector<5x5x128xf32>
    %c0_18 = arith.constant 0 : index
    %c0_19 = arith.constant 0 : index
    %c0_20 = arith.constant 0 : index
    %20 = vector.load %arg17[%c0_18, %c0_19, %c0_20] : memref<5x5x128xf32, #tpu.memory_space<vmem>>, vector<5x5x128xf32>
    tpu.vector_store %arg17[%c0_18, %c0_19, %c0_20], %19 {strides = array<i32>} : memref<5x5x128xf32, #tpu.memory_space<vmem>>, vector<5x5x128xf32>,
    %cst_21 = arith.constant 0.000000e+00 : f32
    %21 = vector.broadcast %cst_21 : f32 to vector<5x5x128xf32>
    %c0_22 = arith.constant 0 : index
    %c0_23 = arith.constant 0 : index
    %c0_24 = arith.constant 0 : index
    %22 = vector.load %arg18[%c0_22, %c0_23, %c0_24] : memref<5x5x128xf32, #tpu.memory_space<vmem>>, vector<5x5x128xf32>
    tpu.vector_store %arg18[%c0_22, %c0_23, %c0_24], %21 {strides = array<i32>} : memref<5x5x128xf32, #tpu.memory_space<vmem>>, vector<5x5x128xf32>,
    %23 = vector.extract_strided_slice %14 {offsets = [0, 0], sizes = [16, 128], strides = [1, 1]} : vector<64x128xf32> to vector<16x128xf32>
    %24 = vector.shape_cast %23 : vector<16x128xf32> to vector<4x4x128xf32>
    %c0_25 = arith.constant 0 : index
    %c0_26 = arith.constant 0 : index
    %c0_27 = arith.constant 0 : index
    %25 = vector.load %arg18[%c0_25, %c0_26, %c0_27] : memref<5x5x128xf32, #tpu.memory_space<vmem>>, vector<4x4x128xf32>
    tpu.vector_store %arg18[%c0_25, %c0_26, %c0_27], %24 {strides = array<i32>} : memref<5x5x128xf32, #tpu.memory_space<vmem>>, vector<4x4x128xf32>,
    %26 = vector.extract_strided_slice %14 {offsets = [16, 0], sizes = [16, 128], strides = [1, 1]} : vector<64x128xf32> to vector<16x128xf32>
    %27 = vector.shape_cast %26 : vector<16x128xf32> to vector<4x4x128xf32>
    %c0_28 = arith.constant 0 : index
    %c1 = arith.constant 1 : index
    %c0_29 = arith.constant 0 : index
    %28 = vector.load %arg17[%c0_28, %c1, %c0_29] : memref<5x5x128xf32, #tpu.memory_space<vmem>>, vector<4x4x128xf32>
    tpu.vector_store %arg17[%c0_28, %c1, %c0_29], %27 {strides = array<i32>} : memref<5x5x128xf32, #tpu.memory_space<vmem>>, vector<4x4x128xf32>,
    %29 = vector.extract_strided_slice %14 {offsets = [32, 0], sizes = [16, 128], strides = [1, 1]} : vector<64x128xf32> to vector<16x128xf32>
    %30 = vector.shape_cast %29 : vector<16x128xf32> to vector<4x4x128xf32>
    %c1_30 = arith.constant 1 : index
    %c0_31 = arith.constant 0 : index
    %c0_32 = arith.constant 0 : index
    %31 = vector.load %arg16[%c1_30, %c0_31, %c0_32] : memref<5x5x128xf32, #tpu.memory_space<vmem>>, vector<4x4x128xf32>
    tpu.vector_store %arg16[%c1_30, %c0_31, %c0_32], %30 {strides = array<i32>} : memref<5x5x128xf32, #tpu.memory_space<vmem>>, vector<4x4x128xf32>,
    %32 = vector.extract_strided_slice %14 {offsets = [48, 0], sizes = [16, 128], strides = [1, 1]} : vector<64x128xf32> to vector<16x128xf32>
    %33 = vector.shape_cast %32 : vector<16x128xf32> to vector<4x4x128xf32>
    %c1_33 = arith.constant 1 : index
    %c1_34 = arith.constant 1 : index
    %c0_35 = arith.constant 0 : index
    %34 = vector.load %arg15[%c1_33, %c1_34, %c0_35] : memref<5x5x128xf32, #tpu.memory_space<vmem>>, vector<4x4x128xf32>
    tpu.vector_store %arg15[%c1_33, %c1_34, %c0_35], %33 {strides = array<i32>} : memref<5x5x128xf32, #tpu.memory_space<vmem>>, vector<4x4x128xf32>,
    %c0_36 = arith.constant 0 : index
    %c0_37 = arith.constant 0 : index
    %c0_38 = arith.constant 0 : index
    %35 = vector.load %arg15[%c0_36, %c0_37, %c0_38] : memref<5x5x128xf32, #tpu.memory_space<vmem>>, vector<4x4x128xf32>
    %36 = vector.shape_cast %35 : vector<4x4x128xf32> to vector<16x128xf32>
    %37 = arith.truncf %36 : vector<16x128xf32> to vector<16x128xbf16>
    %c0_39 = arith.constant 0 : index
    %c0_40 = arith.constant 0 : index
    %38 = vector.load %arg19[%c0_39, %c0_40] : memref<16x1152xbf16, #tpu.memory_space<vmem>>, vector<16x128xbf16>
    tpu.vector_store %arg19[%c0_39, %c0_40], %37 {strides = array<i32>} : memref<16x1152xbf16, #tpu.memory_space<vmem>>, vector<16x128xbf16>,
    %c0_41 = arith.constant 0 : index
    %c0_42 = arith.constant 0 : index
    %c0_43 = arith.constant 0 : index
    %39 = vector.load %arg16[%c0_41, %c0_42, %c0_43] : memref<5x5x128xf32, #tpu.memory_space<vmem>>, vector<4x4x128xf32>
    %40 = vector.shape_cast %39 : vector<4x4x128xf32> to vector<16x128xf32>
    %41 = arith.truncf %40 : vector<16x128xf32> to vector<16x128xbf16>
    %c0_44 = arith.constant 0 : index
    %c128 = arith.constant 128 : index
    %42 = vector.load %arg19[%c0_44, %c128] : memref<16x1152xbf16, #tpu.memory_space<vmem>>, vector<16x128xbf16>
    tpu.vector_store %arg19[%c0_44, %c128], %41 {strides = array<i32>} : memref<16x1152xbf16, #tpu.memory_space<vmem>>, vector<16x128xbf16>,
    %c0_45 = arith.constant 0 : index
    %c1_46 = arith.constant 1 : index
    %c0_47 = arith.constant 0 : index
    %43 = vector.load %arg15[%c0_45, %c1_46, %c0_47] : memref<5x5x128xf32, #tpu.memory_space<vmem>>, vector<4x4x128xf32>
    %44 = vector.shape_cast %43 : vector<4x4x128xf32> to vector<16x128xf32>
    %45 = arith.truncf %44 : vector<16x128xf32> to vector<16x128xbf16>
    %c0_48 = arith.constant 0 : index
    %c256 = arith.constant 256 : index
    %46 = vector.load %arg19[%c0_48, %c256] : memref<16x1152xbf16, #tpu.memory_space<vmem>>, vector<16x128xbf16>
    tpu.vector_store %arg19[%c0_48, %c256], %45 {strides = array<i32>} : memref<16x1152xbf16, #tpu.memory_space<vmem>>, vector<16x128xbf16>,
    %c0_49 = arith.constant 0 : index
    %c0_50 = arith.constant 0 : index
    %c0_51 = arith.constant 0 : index
    %47 = vector.load %arg17[%c0_49, %c0_50, %c0_51] : memref<5x5x128xf32, #tpu.memory_space<vmem>>, vector<4x4x128xf32>
    %48 = vector.shape_cast %47 : vector<4x4x128xf32> to vector<16x128xf32>
    %49 = arith.truncf %48 : vector<16x128xf32> to vector<16x128xbf16>
    %c0_52 = arith.constant 0 : index
    %c384 = arith.constant 384 : index
    %50 = vector.load %arg19[%c0_52, %c384] : memref<16x1152xbf16, #tpu.memory_space<vmem>>, vector<16x128xbf16>
    tpu.vector_store %arg19[%c0_52, %c384], %49 {strides = array<i32>} : memref<16x1152xbf16, #tpu.memory_space<vmem>>, vector<16x128xbf16>,
    %c0_53 = arith.constant 0 : index
    %c0_54 = arith.constant 0 : index
    %c0_55 = arith.constant 0 : index
    %51 = vector.load %arg18[%c0_53, %c0_54, %c0_55] : memref<5x5x128xf32, #tpu.memory_space<vmem>>, vector<4x4x128xf32>
    %52 = vector.shape_cast %51 : vector<4x4x128xf32> to vector<16x128xf32>
    %53 = arith.truncf %52 : vector<16x128xf32> to vector<16x128xbf16>
    %c0_56 = arith.constant 0 : index
    %c512 = arith.constant 512 : index
    %54 = vector.load %arg19[%c0_56, %c512] : memref<16x1152xbf16, #tpu.memory_space<vmem>>, vector<16x128xbf16>
    tpu.vector_store %arg19[%c0_56, %c512], %53 {strides = array<i32>} : memref<16x1152xbf16, #tpu.memory_space<vmem>>, vector<16x128xbf16>,
    %c0_57 = arith.constant 0 : index
    %c1_58 = arith.constant 1 : index
    %c0_59 = arith.constant 0 : index
    %55 = vector.load %arg17[%c0_57, %c1_58, %c0_59] : memref<5x5x128xf32, #tpu.memory_space<vmem>>, vector<4x4x128xf32>
    %56 = vector.shape_cast %55 : vector<4x4x128xf32> to vector<16x128xf32>
    %57 = arith.truncf %56 : vector<16x128xf32> to vector<16x128xbf16>
    %c0_60 = arith.constant 0 : index
    %c640 = arith.constant 640 : index
    %58 = vector.load %arg19[%c0_60, %c640] : memref<16x1152xbf16, #tpu.memory_space<vmem>>, vector<16x128xbf16>
    tpu.vector_store %arg19[%c0_60, %c640], %57 {strides = array<i32>} : memref<16x1152xbf16, #tpu.memory_space<vmem>>, vector<16x128xbf16>,
    %c1_61 = arith.constant 1 : index
    %c0_62 = arith.constant 0 : index
    %c0_63 = arith.constant 0 : index
    %59 = vector.load %arg15[%c1_61, %c0_62, %c0_63] : memref<5x5x128xf32, #tpu.memory_space<vmem>>, vector<4x4x128xf32>
    %60 = vector.shape_cast %59 : vector<4x4x128xf32> to vector<16x128xf32>
    %61 = arith.truncf %60 : vector<16x128xf32> to vector<16x128xbf16>
    %c0_64 = arith.constant 0 : index
    %c768 = arith.constant 768 : index
    %62 = vector.load %arg19[%c0_64, %c768] : memref<16x1152xbf16, #tpu.memory_space<vmem>>, vector<16x128xbf16>
    tpu.vector_store %arg19[%c0_64, %c768], %61 {strides = array<i32>} : memref<16x1152xbf16, #tpu.memory_space<vmem>>, vector<16x128xbf16>,
    %c1_65 = arith.constant 1 : index
    %c0_66 = arith.constant 0 : index
    %c0_67 = arith.constant 0 : index
    %63 = vector.load %arg16[%c1_65, %c0_66, %c0_67] : memref<5x5x128xf32, #tpu.memory_space<vmem>>, vector<4x4x128xf32>
    %64 = vector.shape_cast %63 : vector<4x4x128xf32> to vector<16x128xf32>
    %65 = arith.truncf %64 : vector<16x128xf32> to vector<16x128xbf16>
    %c0_68 = arith.constant 0 : index
    %c896 = arith.constant 896 : index
    %66 = vector.load %arg19[%c0_68, %c896] : memref<16x1152xbf16, #tpu.memory_space<vmem>>, vector<16x128xbf16>
    tpu.vector_store %arg19[%c0_68, %c896], %65 {strides = array<i32>} : memref<16x1152xbf16, #tpu.memory_space<vmem>>, vector<16x128xbf16>,
    %c1_69 = arith.constant 1 : index
    %c1_70 = arith.constant 1 : index
    %c0_71 = arith.constant 0 : index
    %67 = vector.load %arg15[%c1_69, %c1_70, %c0_71] : memref<5x5x128xf32, #tpu.memory_space<vmem>>, vector<4x4x128xf32>
    %68 = vector.shape_cast %67 : vector<4x4x128xf32> to vector<16x128xf32>
    %69 = arith.truncf %68 : vector<16x128xf32> to vector<16x128xbf16>
    %c0_72 = arith.constant 0 : index
    %c1024 = arith.constant 1024 : index
    %70 = vector.load %arg19[%c0_72, %c1024] : memref<16x1152xbf16, #tpu.memory_space<vmem>>, vector<16x128xbf16>
    tpu.vector_store %arg19[%c0_72, %c1024], %69 {strides = array<i32>} : memref<16x1152xbf16, #tpu.memory_space<vmem>>, vector<16x128xbf16>,
    %c0_73 = arith.constant 0 : index
    %c0_74 = arith.constant 0 : index
    %71 = vector.load %arg19[%c0_73, %c0_74] : memref<16x1152xbf16, #tpu.memory_space<vmem>>, vector<16x1152xbf16>
    %c0_75 = arith.constant 0 : index
    %c0_76 = arith.constant 0 : index
    %72 = vector.load %arg4[%c0_75, %c0_76] : memref<1152x128xbf16, #tpu.memory_space<vmem>>, vector<1152x128xbf16>
    %cst_77 = arith.constant dense<0.000000e+00> : vector<16x128xf32>
    %73 = tpu.matmul %71, %72, %cst_77 {dimension_numbers = #tpu.dot_dimension_numbers<[1], [0], [0], [1], [0, 0, 1, 1], [], []>} : vector<16x1152xbf16>, vector<1152x128xbf16>, vector<16x128xf32> -> vector<16x128xf32>
    %c0_78 = arith.constant 0 : index
    %c0_79 = arith.constant 0 : index
    %74 = vector.load %arg5[%c0_78, %c0_79] : memref<1x128xf32, #tpu.memory_space<vmem>>, vector<1x128xf32>
    %75 = vector.broadcast %74 : vector<1x128xf32> to vector<16x128xf32>
    %76 = arith.addf %73, %75 : vector<16x128xf32>
    %cst_80 = arith.constant 0.000000e+00 : f32
    %77 = vector.broadcast %cst_80 : f32 to vector<16x128xf32>
    %78 = arith.cmpf ogt, %76, %77 : vector<16x128xf32>
    %cst_81 = arith.constant 0.000000e+00 : f32
    %79 = vector.broadcast %cst_81 : f32 to vector<16x128xf32>
    %80 = arith.minimumf %76, %79 : vector<16x128xf32>
    %81 = math.exp %80 : vector<16x128xf32>
    %cst_82 = arith.constant 1.000000e+00 : f32
    %82 = vector.broadcast %cst_82 : f32 to vector<16x128xf32>
    %83 = arith.subf %81, %82 : vector<16x128xf32>
    %84 = arith.select %78, %76, %83 : vector<16x128xi1>, vector<16x128xf32>
    %85 = arith.truncf %84 : vector<16x128xf32> to vector<16x128xbf16>
    %c0_83 = arith.constant 0 : index
    %c0_84 = arith.constant 0 : index
    %86 = vector.load %arg6[%c0_83, %c0_84] : memref<128x256xbf16, #tpu.memory_space<vmem>>, vector<128x256xbf16>
    %cst_85 = arith.constant dense<0.000000e+00> : vector<16x256xf32>
    %87 = tpu.matmul %85, %86, %cst_85 {dimension_numbers = #tpu.dot_dimension_numbers<[1], [0], [0], [1], [0, 0, 1, 1], [], []>} : vector<16x128xbf16>, vector<128x256xbf16>, vector<16x256xf32> -> vector<16x256xf32>
    %c0_86 = arith.constant 0 : index
    %c0_87 = arith.constant 0 : index
    %88 = vector.load %arg7[%c0_86, %c0_87] : memref<1x256xf32, #tpu.memory_space<vmem>>, vector<1x256xf32>
    %89 = vector.broadcast %88 : vector<1x256xf32> to vector<16x256xf32>
    %90 = arith.addf %87, %89 : vector<16x256xf32>
    %cst_88 = arith.constant 0.000000e+00 : f32
    %91 = vector.broadcast %cst_88 : f32 to vector<16x256xf32>
    %92 = arith.cmpf ogt, %90, %91 : vector<16x256xf32>
    %cst_89 = arith.constant 0.000000e+00 : f32
    %93 = vector.broadcast %cst_89 : f32 to vector<16x256xf32>
    %94 = arith.minimumf %90, %93 : vector<16x256xf32>
    %95 = math.exp %94 : vector<16x256xf32>
    %cst_90 = arith.constant 1.000000e+00 : f32
    %96 = vector.broadcast %cst_90 : f32 to vector<16x256xf32>
    %97 = arith.subf %95, %96 : vector<16x256xf32>
    %98 = arith.select %92, %90, %97 : vector<16x256xi1>, vector<16x256xf32>
    %99 = arith.truncf %98 : vector<16x256xf32> to vector<16x256xbf16>
    %c0_91 = arith.constant 0 : index
    %c0_92 = arith.constant 0 : index
    %100 = vector.load %arg8[%c0_91, %c0_92] : memref<256x512xbf16, #tpu.memory_space<vmem>>, vector<256x512xbf16>
    %cst_93 = arith.constant dense<0.000000e+00> : vector<16x512xf32>
    %101 = tpu.matmul %99, %100, %cst_93 {dimension_numbers = #tpu.dot_dimension_numbers<[1], [0], [0], [1], [0, 0, 1, 1], [], []>} : vector<16x256xbf16>, vector<256x512xbf16>, vector<16x512xf32> -> vector<16x512xf32>
    %c0_94 = arith.constant 0 : index
    %c0_95 = arith.constant 0 : index
    %102 = vector.load %arg9[%c0_94, %c0_95] : memref<1x512xf32, #tpu.memory_space<vmem>>, vector<1x512xf32>
    %103 = vector.broadcast %102 : vector<1x512xf32> to vector<16x512xf32>
    %104 = arith.addf %101, %103 : vector<16x512xf32>
    %cst_96 = arith.constant 0.000000e+00 : f32
    %105 = vector.broadcast %cst_96 : f32 to vector<16x512xf32>
    %106 = arith.cmpf ogt, %104, %105 : vector<16x512xf32>
    %cst_97 = arith.constant 0.000000e+00 : f32
    %107 = vector.broadcast %cst_97 : f32 to vector<16x512xf32>
    %108 = arith.minimumf %104, %107 : vector<16x512xf32>
    %109 = math.exp %108 : vector<16x512xf32>
    %cst_98 = arith.constant 1.000000e+00 : f32
    %110 = vector.broadcast %cst_98 : f32 to vector<16x512xf32>
    %111 = arith.subf %109, %110 : vector<16x512xf32>
    %112 = arith.select %106, %104, %111 : vector<16x512xi1>, vector<16x512xf32>
    %113 = arith.truncf %112 : vector<16x512xf32> to vector<16x512xbf16>
    %c0_99 = arith.constant 0 : index
    %c0_100 = arith.constant 0 : index
    %114 = vector.load %arg10[%c0_99, %c0_100] : memref<512x1024xbf16, #tpu.memory_space<vmem>>, vector<512x1024xbf16>
    %cst_101 = arith.constant dense<0.000000e+00> : vector<16x1024xf32>
    %115 = tpu.matmul %113, %114, %cst_101 {dimension_numbers = #tpu.dot_dimension_numbers<[1], [0], [0], [1], [0, 0, 1, 1], [], []>} : vector<16x512xbf16>, vector<512x1024xbf16>, vector<16x1024xf32> -> vector<16x1024xf32>
    %c0_102 = arith.constant 0 : index
    %c0_103 = arith.constant 0 : index
    %116 = vector.load %arg11[%c0_102, %c0_103] : memref<1x1024xf32, #tpu.memory_space<vmem>>, vector<1x1024xf32>
    %117 = vector.broadcast %116 : vector<1x1024xf32> to vector<16x1024xf32>
    %118 = arith.addf %115, %117 : vector<16x1024xf32>
    %cst_104 = arith.constant 0.000000e+00 : f32
    %119 = vector.broadcast %cst_104 : f32 to vector<16x1024xf32>
    %120 = arith.cmpf ogt, %118, %119 : vector<16x1024xf32>
    %cst_105 = arith.constant 0.000000e+00 : f32
    %121 = vector.broadcast %cst_105 : f32 to vector<16x1024xf32>
    %122 = arith.minimumf %118, %121 : vector<16x1024xf32>
    %123 = math.exp %122 : vector<16x1024xf32>
    %cst_106 = arith.constant 1.000000e+00 : f32
    %124 = vector.broadcast %cst_106 : f32 to vector<16x1024xf32>
    %125 = arith.subf %123, %124 : vector<16x1024xf32>
    %126 = arith.select %120, %118, %125 : vector<16x1024xi1>, vector<16x1024xf32>
    %c0_107 = arith.constant 0 : index
    %c0_108 = arith.constant 0 : index
    %c0_109 = arith.constant 0 : index
    %127 = vector.load %arg12[%c0_107, %c0_108, %c0_109] : memref<1x16x256xf32, #tpu.memory_space<vmem>>, vector<1x16x256xf32>
    %128 = vector.shape_cast %127 : vector<1x16x256xf32> to vector<16x256xf32>
    %129 = vector.shape_cast %98 : vector<16x256xf32> to vector<1x16x256xf32>
    tpu.vector_store %arg12[%c0_107, %c0_108, %c0_109], %129 {strides = array<i32>} : memref<1x16x256xf32, #tpu.memory_space<vmem>>, vector<1x16x256xf32>,
    %c0_110 = arith.constant 0 : index
    %c0_111 = arith.constant 0 : index
    %c0_112 = arith.constant 0 : index
    %130 = vector.load %arg13[%c0_110, %c0_111, %c0_112] : memref<1x16x512xf32, #tpu.memory_space<vmem>>, vector<1x16x512xf32>
    %131 = vector.shape_cast %130 : vector<1x16x512xf32> to vector<16x512xf32>
    %132 = vector.shape_cast %112 : vector<16x512xf32> to vector<1x16x512xf32>
    tpu.vector_store %arg13[%c0_110, %c0_111, %c0_112], %132 {strides = array<i32>} : memref<1x16x512xf32, #tpu.memory_space<vmem>>, vector<1x16x512xf32>,
    %cst_113 = arith.constant dense<0.000000e+00> : vector<1024xf32>
    %133 = vector.multi_reduction <add>, %126, %cst_113 [0] : vector<16x1024xf32> to vector<1024xf32>
    %134 = vector.shape_cast %133 : vector<1024xf32> to vector<1x1024xf32>
    %cst_114 = arith.constant 1.600000e+01 : f32
    %135 = vector.broadcast %cst_114 : f32 to vector<1x1024xf32>
    %136 = arith.divf %134, %135 : vector<1x1024xf32>
    %c0_115 = arith.constant 0 : index
    %c0_116 = arith.constant 0 : index
    %c0_117 = arith.constant 0 : index
    %137 = vector.load %arg14[%c0_115, %c0_116, %c0_117] : memref<1x1x1024xf32, #tpu.memory_space<vmem>>, vector<1x1x1024xf32>
    %138 = vector.shape_cast %137 : vector<1x1x1024xf32> to vector<1x1024xf32>
    %139 = vector.shape_cast %136 : vector<1x1024xf32> to vector<1x1x1024xf32>
    tpu.vector_store %arg14[%c0_115, %c0_116, %c0_117], %139 {strides = array<i32>} : memref<1x1x1024xf32, #tpu.memory_space<vmem>>, vector<1x1x1024xf32>,
    return
  }
  func.func @transform_0(%arg0: i32) -> (i32, i32, i32) {
    %c0_i32 = arith.constant 0 : i32
    %c0_i32_0 = arith.constant 0 : i32
    %c0_i32_1 = arith.constant 0 : i32
    return %arg0, %c0_i32, %c0_i32_0 : i32, i32, i32
  }
  func.func @transform_1(%arg0: i32) -> (i32, i32) {
    %c0_i32 = arith.constant 0 : i32
    %c0_i32_0 = arith.constant 0 : i32
    %c0_i32_1 = arith.constant 0 : i32
    return %c0_i32, %c0_i32_0 : i32, i32
  }
  func.func @transform_2(%arg0: i32) -> (i32, i32) {
    %c0_i32 = arith.constant 0 : i32
    %c0_i32_0 = arith.constant 0 : i32
    %c0_i32_1 = arith.constant 0 : i32
    return %c0_i32, %c0_i32_0 : i32, i32
  }
  func.func @transform_3(%arg0: i32) -> (i32, i32) {
    %c0_i32 = arith.constant 0 : i32
    %c0_i32_0 = arith.constant 0 : i32
    %c0_i32_1 = arith.constant 0 : i32
    return %c0_i32, %c0_i32_0 : i32, i32
  }
  func.func @transform_4(%arg0: i32) -> (i32, i32) {
    %c0_i32 = arith.constant 0 : i32
    %c0_i32_0 = arith.constant 0 : i32
    %c0_i32_1 = arith.constant 0 : i32
    return %c0_i32, %c0_i32_0 : i32, i32
  }
  func.func @transform_5(%arg0: i32) -> (i32, i32) {
    %c0_i32 = arith.constant 0 : i32
    %c0_i32_0 = arith.constant 0 : i32
    %c0_i32_1 = arith.constant 0 : i32
    return %c0_i32, %c0_i32_0 : i32, i32
  }
  func.func @transform_6(%arg0: i32) -> (i32, i32) {
    %c0_i32 = arith.constant 0 : i32
    %c0_i32_0 = arith.constant 0 : i32
    %c0_i32_1 = arith.constant 0 : i32
    return %c0_i32, %c0_i32_0 : i32, i32
  }
  func.func @transform_7(%arg0: i32) -> (i32, i32) {
    %c0_i32 = arith.constant 0 : i32
    %c0_i32_0 = arith.constant 0 : i32
    %c0_i32_1 = arith.constant 0 : i32
    return %c0_i32, %c0_i32_0 : i32, i32
  }
  func.func @transform_8(%arg0: i32) -> (i32, i32) {
    %c0_i32 = arith.constant 0 : i32
    %c0_i32_0 = arith.constant 0 : i32
    %c0_i32_1 = arith.constant 0 : i32
    return %c0_i32, %c0_i32_0 : i32, i32
  }
  func.func @transform_9(%arg0: i32) -> (i32, i32) {
    %c0_i32 = arith.constant 0 : i32
    %c0_i32_0 = arith.constant 0 : i32
    %c0_i32_1 = arith.constant 0 : i32
    return %c0_i32, %c0_i32_0 : i32, i32
  }
  func.func @transform_10(%arg0: i32) -> (i32, i32) {
    %c0_i32 = arith.constant 0 : i32
    %c0_i32_0 = arith.constant 0 : i32
    %c0_i32_1 = arith.constant 0 : i32
    return %c0_i32, %c0_i32_0 : i32, i32
  }
  func.func @transform_11(%arg0: i32) -> (i32, i32, i32) {
    %c0_i32 = arith.constant 0 : i32
    %c0_i32_0 = arith.constant 0 : i32
    %c0_i32_1 = arith.constant 0 : i32
    return %arg0, %c0_i32, %c0_i32_0 : i32, i32, i32
  }
  func.func @transform_12(%arg0: i32) -> (i32, i32, i32) {
    %c0_i32 = arith.constant 0 : i32
    %c0_i32_0 = arith.constant 0 : i32
    %c0_i32_1 = arith.constant 0 : i32
    return %arg0, %c0_i32, %c0_i32_0 : i32, i32, i32
  }
  func.func @transform_13(%arg0: i32) -> (i32, i32, i32) {
    %c0_i32 = arith.constant 0 : i32
    %c0_i32_0 = arith.constant 0 : i32
    %c0_i32_1 = arith.constant 0 : i32
    return %arg0, %c0_i32, %c0_i32_0 : i32, i32, i32
  }
}

</mosaic_0001>

<llo_original>
// kernel: posenet_feat_forward.1
$region0: #{posenet_feat_forward.1}
  #allocation0 [shape = 'u32[]', space=smem, size = 0x4, offset = 0x4, fixed_abs, tag = 'smem constant byte address 0x4 - core index']
  #allocation1 [shape = 'u32[144,128]{1,0:T(1,128)}', space=vmem, size = 0x12000, scoped, tag = 'internal scratch']
  #allocation2 [shape = 'f32[5,5,128]{2,1,0:T(8,128)}', space=vmem, size = 0x5000, scoped, tag = 'scratch operand']
  #allocation3 [shape = 'f32[5,5,128]{2,1,0:T(8,128)}', space=vmem, size = 0x5000, scoped, tag = 'scratch operand']
  #allocation4 [shape = 'f32[5,5,128]{2,1,0:T(8,128)}', space=vmem, size = 0x5000, scoped, tag = 'scratch operand']
  #allocation5 [shape = 'f32[5,5,128]{2,1,0:T(8,128)}', space=vmem, size = 0x5000, scoped, tag = 'scratch operand']
  #allocation6 [shape = 'bf16[16,1152]{1,0:T(16,128)(2,1)}', space=vmem, size = 0x9000, scoped, tag = 'scratch operand']
  %s0 = inlined_call_operand.vmem [shape: bf16[2,64,1152], index: 0, kind: input, shape index: {}]
  %s1 = inlined_call_operand.vmem [shape: bf16[1152,128], index: 1, kind: input, shape index: {}]
  %s2 = inlined_call_operand.vmem [shape: f32[1,128], index: 2, kind: input, shape index: {}]
  %s3 = inlined_call_operand.vmem [shape: bf16[1152,128], index: 3, kind: input, shape index: {}]
  %s4 = inlined_call_operand.vmem [shape: f32[1,128], index: 4, kind: input, shape index: {}]
  %s5 = inlined_call_operand.vmem [shape: bf16[128,256], index: 5, kind: input, shape index: {}]
  %s6 = inlined_call_operand.vmem [shape: f32[1,256], index: 6, kind: input, shape index: {}]
  %s7 = inlined_call_operand.vmem [shape: bf16[256,512], index: 7, kind: input, shape index: {}]
  %s8 = inlined_call_operand.vmem [shape: f32[1,512], index: 8, kind: input, shape index: {}]
  %s9 = inlined_call_operand.vmem [shape: bf16[512,1024], index: 9, kind: input, shape index: {}]
  %s10 = inlined_call_operand.vmem [shape: f32[1,1024], index: 10, kind: input, shape index: {}]
  %s11 = inlined_call_operand.hbm [shape: f32[2,16,256], index: 11, kind: output, shape index: {0}]
  %s12 = inlined_call_operand.hbm [shape: f32[2,16,512], index: 12, kind: output, shape index: {1}]
  %s13 = inlined_call_operand.vmem [shape: f32[2,1,1024], index: 13, kind: output, shape index: {2}]
  %14 = xla_tuple %s11, %s12, %s13
  %s15 = sld [smem:[#allocation0]]
  $region93: #{posenet_feat_forward.1} parent=0
    _
  %s17 = ssub.s32 1, %s15
  %s18 = scalar_select 0, %s17, %s15
  $region1: #{posenet_feat_forward.1} parent=0
    #allocation7 [shape = 'u8[32768]{0}', space=vmem, size = 0x8000, scoped, tag = 'output window, operand 0']
    #allocation8 [shape = 's32[2]{0}', space=sflag, size = 0x8, scoped, tag = 'scoped memory for posenet_feat_forward.1']
    #allocation9 [shape = 'u8[65536]{0}', space=vmem, size = 0x10000, scoped, tag = 'output window, operand 1']
    #allocation10 [shape = 's32[2]{0}', space=sflag, size = 0x8, scoped, tag = 'scoped memory for posenet_feat_forward.1']
    %19 = vsyncpa [#allocation8], 0
    %s20 = scalar_lea.sflag [#allocation8], 1
    %21 = vsyncpa %s20, 0
    %22 = vsyncpa [#allocation10], 0
    %s23 = scalar_lea.sflag [#allocation10], 1
    %24 = vsyncpa %s23, 0
    loop: start=0, step=1, limit=4
    $region2: #{posenet_feat_forward.1} parent=1 // loop_pre_header
      _
    $region3: #{posenet_feat_forward.1} parent=1 // loop_header
      %s26 = sphi 0, %s30
      %p27 = scmp.ge.s32.totalorder %s26, 4
      %s36 = sphi 0, %s38
      %s39 = sphi 0, %s36
      %s40 = sphi 0, %s39
      %s56 = sphi 0, %s40
      %s60 = sphi 0, %s60
      %s62 = sphi 0, %s60
      %s63 = sphi 0, %s62
      %s77 = sphi 0, %s63
      %s81 = sphi 0, %s81
      %s83 = sphi 0, %s81
      %s84 = sphi 0, %s83
      %s98 = sphi 0, %s84
      %s102 = sphi 0, %s102
      %s104 = sphi 0, %s102
      %s105 = sphi 0, %s104
      %s119 = sphi 0, %s105
      %s123 = sphi 0, %s123
      %s125 = sphi 0, %s123
      %s126 = sphi 0, %s125
      %s140 = sphi 0, %s126
      %s144 = sphi 0, %s144
      %s146 = sphi 0, %s144
      %s147 = sphi 0, %s146
      %s161 = sphi 0, %s147
      %s165 = sphi 0, %s165
      %s167 = sphi 0, %s165
      %s168 = sphi 0, %s167
      %s182 = sphi 0, %s168
      %s186 = sphi 0, %s186
      %s188 = sphi 0, %s186
      %s189 = sphi 0, %s188
      %s203 = sphi 0, %s189
      %s207 = sphi 0, %s207
      %s209 = sphi 0, %s207
      %s210 = sphi 0, %s209
      %s224 = sphi 0, %s210
      %s228 = sphi 0, %s228
      %s230 = sphi 0, %s228
      %s231 = sphi 0, %s230
      %s245 = sphi 0, %s231
      %s249 = sphi 0, %s249
      %s251 = sphi 0, %s249
      %s252 = sphi 0, %s251
      %s266 = sphi 0, %s252
      %s272 = sphi 0, %s274
      %s275 = sphi 0, %s272
      %s276 = sphi 0, %s275
      %s292 = sphi 0, %s276
      %s298 = sphi 0, %s300
      %s301 = sphi 0, %s298
      %s302 = sphi 0, %s301
      %s318 = sphi 0, %s302
      %s324 = sphi 0, %s326
      %s327 = sphi 0, %s324
      %s328 = sphi 0, %s327
      %s344 = sphi 0, %s328
    $region4: #{posenet_feat_forward.1} parent=1 // loop_header_branch
      %29 = sbr.rel (%p27) target = $region8
    $region5: #{posenet_feat_forward.1} parent=1 // loop_body
      %s31 = ssub.s32 %s26, 1
      %s32 = ssub.s32 %s26, 2
      %s33 = sadd.s32 %s26, 1
      %s34 = ssub.s32 %s26, %s33
      %p35 = scmp.eq.s32.totalorder %s34, 0
      %s37 = sadd.s32 %s36, 1
      %s38 = scalar_select %p35, %s36, %s37
      %p41 = pneg %p35
      %p42 = scmp.eq.s32.totalorder %s26, 1
      %p43 = por %p41, %p42
      %p44 = scmp.ne.s32.totalorder %s36, %s39
      %p45 = scmp.eq.s32.totalorder %s26, 0
      %p46 = por %p44, %p45
      %p47 = scmp.ne.s32.totalorder %s36, %s39
      %p48 = scmp.eq.s32.totalorder %s31, 1
      %p49 = por %p47, %p48
      %p50 = scmp.ne.s32.totalorder %s39, %s40
      %p51 = scmp.eq.s32.totalorder %s31, 0
      %p52 = por %p50, %p51
      %p53 = scmp.ne.s32.totalorder %s39, %s40
      %p54 = scmp.eq.s32.totalorder %s32, 1
      %p55 = por %p53, %p54
      %p57 = scmp.ne.s32.totalorder %s40, %s56
      %p58 = scmp.eq.s32.totalorder %s32, 0
      %p59 = por %p57, %p58
      %s61 = sadd.s32 %s60, 1
      %p64 = scmp.eq.s32.totalorder %s26, 1
      %p65 = scmp.ne.s32.totalorder %s60, %s62
      %p66 = scmp.eq.s32.totalorder %s26, 0
      %p67 = por %p65, %p66
      %p68 = scmp.ne.s32.totalorder %s60, %s62
      %p69 = scmp.eq.s32.totalorder %s31, 1
      %p70 = por %p68, %p69
      %p71 = scmp.ne.s32.totalorder %s62, %s63
      %p72 = scmp.eq.s32.totalorder %s31, 0
      %p73 = por %p71, %p72
      %p74 = scmp.ne.s32.totalorder %s62, %s63
      %p75 = scmp.eq.s32.totalorder %s32, 1
      %p76 = por %p74, %p75
      %p78 = scmp.ne.s32.totalorder %s63, %s77
      %p79 = scmp.eq.s32.totalorder %s32, 0
      %p80 = por %p78, %p79
      %s82 = sadd.s32 %s81, 1
      %p85 = scmp.eq.s32.totalorder %s26, 1
      %p86 = scmp.ne.s32.totalorder %s81, %s83
      %p87 = scmp.eq.s32.totalorder %s26, 0
      %p88 = por %p86, %p87
      %p89 = scmp.ne.s32.totalorder %s81, %s83
      %p90 = scmp.eq.s32.totalorder %s31, 1
      %p91 = por %p89, %p90
      %p92 = scmp.ne.s32.totalorder %s83, %s84
      %p93 = scmp.eq.s32.totalorder %s31, 0
      %p94 = por %p92, %p93
      %p95 = scmp.ne.s32.totalorder %s83, %s84
      %p96 = scmp.eq.s32.totalorder %s32, 1
      %p97 = por %p95, %p96
      %p99 = scmp.ne.s32.totalorder %s84, %s98
      %p100 = scmp.eq.s32.totalorder %s32, 0
      %p101 = por %p99, %p100
      %s103 = sadd.s32 %s102, 1
      %p106 = scmp.eq.s32.totalorder %s26, 1
      %p107 = scmp.ne.s32.totalorder %s102, %s104
      %p108 = scmp.eq.s32.totalorder %s26, 0
      %p109 = por %p107, %p108
      %p110 = scmp.ne.s32.totalorder %s102, %s104
      %p111 = scmp.eq.s32.totalorder %s31, 1
      %p112 = por %p110, %p111
      %p113 = scmp.ne.s32.totalorder %s104, %s105
      %p114 = scmp.eq.s32.totalorder %s31, 0
      %p115 = por %p113, %p114
      %p116 = scmp.ne.s32.totalorder %s104, %s105
      %p117 = scmp.eq.s32.totalorder %s32, 1
      %p118 = por %p116, %p117
      %p120 = scmp.ne.s32.totalorder %s105, %s119
      %p121 = scmp.eq.s32.totalorder %s32, 0
      %p122 = por %p120, %p121
      %s124 = sadd.s32 %s123, 1
      %p127 = scmp.eq.s32.totalorder %s26, 1
      %p128 = scmp.ne.s32.totalorder %s123, %s125
      %p129 = scmp.eq.s32.totalorder %s26, 0
      %p130 = por %p128, %p129
      %p131 = scmp.ne.s32.totalorder %s123, %s125
      %p132 = scmp.eq.s32.totalorder %s31, 1
      %p133 = por %p131, %p132
      %p134 = scmp.ne.s32.totalorder %s125, %s126
      %p135 = scmp.eq.s32.totalorder %s31, 0
      %p136 = por %p134, %p135
      %p137 = scmp.ne.s32.totalorder %s125, %s126
      %p138 = scmp.eq.s32.totalorder %s32, 1
      %p139 = por %p137, %p138
      %p141 = scmp.ne.s32.totalorder %s126, %s140
      %p142 = scmp.eq.s32.totalorder %s32, 0
      %p143 = por %p141, %p142
      %s145 = sadd.s32 %s144, 1
      %p148 = scmp.eq.s32.totalorder %s26, 1
      %p149 = scmp.ne.s32.totalorder %s144, %s146
      %p150 = scmp.eq.s32.totalorder %s26, 0
      %p151 = por %p149, %p150
      %p152 = scmp.ne.s32.totalorder %s144, %s146
      %p153 = scmp.eq.s32.totalorder %s31, 1
      %p154 = por %p152, %p153
      %p155 = scmp.ne.s32.totalorder %s146, %s147
      %p156 = scmp.eq.s32.totalorder %s31, 0
      %p157 = por %p155, %p156
      %p158 = scmp.ne.s32.totalorder %s146, %s147
      %p159 = scmp.eq.s32.totalorder %s32, 1
      %p160 = por %p158, %p159
      %p162 = scmp.ne.s32.totalorder %s147, %s161
      %p163 = scmp.eq.s32.totalorder %s32, 0
      %p164 = por %p162, %p163
      %s166 = sadd.s32 %s165, 1
      %p169 = scmp.eq.s32.totalorder %s26, 1
      %p170 = scmp.ne.s32.totalorder %s165, %s167
      %p171 = scmp.eq.s32.totalorder %s26, 0
      %p172 = por %p170, %p171
      %p173 = scmp.ne.s32.totalorder %s165, %s167
      %p174 = scmp.eq.s32.totalorder %s31, 1
      %p175 = por %p173, %p174
      %p176 = scmp.ne.s32.totalorder %s167, %s168
      %p177 = scmp.eq.s32.totalorder %s31, 0
      %p178 = por %p176, %p177
      %p179 = scmp.ne.s32.totalorder %s167, %s168
      %p180 = scmp.eq.s32.totalorder %s32, 1
      %p181 = por %p179, %p180
      %p183 = scmp.ne.s32.totalorder %s168, %s182
      %p184 = scmp.eq.s32.totalorder %s32, 0
      %p185 = por %p183, %p184
      %s187 = sadd.s32 %s186, 1
      %p190 = scmp.eq.s32.totalorder %s26, 1
      %p191 = scmp.ne.s32.totalorder %s186, %s188
      %p192 = scmp.eq.s32.totalorder %s26, 0
      %p193 = por %p191, %p192
      %p194 = scmp.ne.s32.totalorder %s186, %s188
      %p195 = scmp.eq.s32.totalorder %s31, 1
      %p196 = por %p194, %p195
      %p197 = scmp.ne.s32.totalorder %s188, %s189
      %p198 = scmp.eq.s32.totalorder %s31, 0
      %p199 = por %p197, %p198
      %p200 = scmp.ne.s32.totalorder %s188, %s189
      %p201 = scmp.eq.s32.totalorder %s32, 1
      %p202 = por %p200, %p201
      %p204 = scmp.ne.s32.totalorder %s189, %s203
      %p205 = scmp.eq.s32.totalorder %s32, 0
      %p206 = por %p204, %p205
      %s208 = sadd.s32 %s207, 1
      %p211 = scmp.eq.s32.totalorder %s26, 1
      %p212 = scmp.ne.s32.totalorder %s207, %s209
      %p213 = scmp.eq.s32.totalorder %s26, 0
      %p214 = por %p212, %p213
      %p215 = scmp.ne.s32.totalorder %s207, %s209
      %p216 = scmp.eq.s32.totalorder %s31, 1
      %p217 = por %p215, %p216
      %p218 = scmp.ne.s32.totalorder %s209, %s210
      %p219 = scmp.eq.s32.totalorder %s31, 0
      %p220 = por %p218, %p219
      %p221 = scmp.ne.s32.totalorder %s209, %s210
      %p222 = scmp.eq.s32.totalorder %s32, 1
      %p223 = por %p221, %p222
      %p225 = scmp.ne.s32.totalorder %s210, %s224
      %p226 = scmp.eq.s32.totalorder %s32, 0
      %p227 = por %p225, %p226
      %s229 = sadd.s32 %s228, 1
      %p232 = scmp.eq.s32.totalorder %s26, 1
      %p233 = scmp.ne.s32.totalorder %s228, %s230
      %p234 = scmp.eq.s32.totalorder %s26, 0
      %p235 = por %p233, %p234
      %p236 = scmp.ne.s32.totalorder %s228, %s230
      %p237 = scmp.eq.s32.totalorder %s31, 1
      %p238 = por %p236, %p237
      %p239 = scmp.ne.s32.totalorder %s230, %s231
      %p240 = scmp.eq.s32.totalorder %s31, 0
      %p241 = por %p239, %p240
      %p242 = scmp.ne.s32.totalorder %s230, %s231
      %p243 = scmp.eq.s32.totalorder %s32, 1
      %p244 = por %p242, %p243
      %p246 = scmp.ne.s32.totalorder %s231, %s245
      %p247 = scmp.eq.s32.totalorder %s32, 0
      %p248 = por %p246, %p247
      %s250 = sadd.s32 %s249, 1
      %p253 = scmp.eq.s32.totalorder %s26, 1
      %p254 = scmp.ne.s32.totalorder %s249, %s251
      %p255 = scmp.eq.s32.totalorder %s26, 0
      %p256 = por %p254, %p255
      %p257 = scmp.ne.s32.totalorder %s249, %s251
      %p258 = scmp.eq.s32.totalorder %s31, 1
      %p259 = por %p257, %p258
      %p260 = scmp.ne.s32.totalorder %s251, %s252
      %p261 = scmp.eq.s32.totalorder %s31, 0
      %p262 = por %p260, %p261
      %p263 = scmp.ne.s32.totalorder %s251, %s252
      %p264 = scmp.eq.s32.totalorder %s32, 1
      %p265 = por %p263, %p264
      %p267 = scmp.ne.s32.totalorder %s252, %s266
      %p268 = scmp.eq.s32.totalorder %s32, 0
      %p269 = por %p267, %p268
      %s270 = ssub.s32 %s26, %s33
      %p271 = scmp.eq.s32.totalorder %s270, 0
      %s273 = sadd.s32 %s272, 1
      %s274 = scalar_select %p271, %s272, %s273
      %p277 = pneg %p271
      %p278 = scmp.eq.s32.totalorder %s26, 1
      %p279 = por %p277, %p278
      %p280 = scmp.ne.s32.totalorder %s272, %s275
      %p281 = scmp.eq.s32.totalorder %s26, 0
      %p282 = por %p280, %p281
      %p283 = scmp.ne.s32.totalorder %s272, %s275
      %p284 = scmp.eq.s32.totalorder %s31, 1
      %p285 = por %p283, %p284
      %p286 = scmp.ne.s32.totalorder %s275, %s276
      %p287 = scmp.eq.s32.totalorder %s31, 0
      %p288 = por %p286, %p287
      %p289 = scmp.ne.s32.totalorder %s275, %s276
      %p290 = scmp.eq.s32.totalorder %s32, 1
      %p291 = por %p289, %p290
      %p293 = scmp.ne.s32.totalorder %s276, %s292
      %p294 = scmp.eq.s32.totalorder %s32, 0
      %p295 = por %p293, %p294
      %s296 = ssub.s32 %s26, %s33
      %p297 = scmp.eq.s32.totalorder %s296, 0
      %s299 = sadd.s32 %s298, 1
      %s300 = scalar_select %p297, %s298, %s299
      %p303 = pneg %p297
      %p304 = scmp.eq.s32.totalorder %s26, 1
      %p305 = por %p303, %p304
      %p306 = scmp.ne.s32.totalorder %s298, %s301
      %p307 = scmp.eq.s32.totalorder %s26, 0
      %p308 = por %p306, %p307
      %p309 = scmp.ne.s32.totalorder %s298, %s301
      %p310 = scmp.eq.s32.totalorder %s31, 1
      %p311 = por %p309, %p310
      %p312 = scmp.ne.s32.totalorder %s301, %s302
      %p313 = scmp.eq.s32.totalorder %s31, 0
      %p314 = por %p312, %p313
      %p315 = scmp.ne.s32.totalorder %s301, %s302
      %p316 = scmp.eq.s32.totalorder %s32, 1
      %p317 = por %p315, %p316
      %p319 = scmp.ne.s32.totalorder %s302, %s318
      %p320 = scmp.eq.s32.totalorder %s32, 0
      %p321 = por %p319, %p320
      %s322 = ssub.s32 %s26, %s33
      %p323 = scmp.eq.s32.totalorder %s322, 0
      %s325 = sadd.s32 %s324, 1
      %s326 = scalar_select %p323, %s324, %s325
      %p329 = pneg %p323
      %p330 = scmp.eq.s32.totalorder %s26, 1
      %p331 = por %p329, %p330
      %p332 = scmp.ne.s32.totalorder %s324, %s327
      %p333 = scmp.eq.s32.totalorder %s26, 0
      %p334 = por %p332, %p333
      %p335 = scmp.ne.s32.totalorder %s324, %s327
      %p336 = scmp.eq.s32.totalorder %s31, 1
      %p337 = por %p335, %p336
      %p338 = scmp.ne.s32.totalorder %s327, %s328
      %p339 = scmp.eq.s32.totalorder %s31, 0
      %p340 = por %p338, %p339
      %p341 = scmp.ne.s32.totalorder %s327, %s328
      %p342 = scmp.eq.s32.totalorder %s32, 1
      %p343 = por %p341, %p342
      %p345 = scmp.ne.s32.totalorder %s328, %s344
      %p346 = scmp.eq.s32.totalorder %s32, 0
      %p347 = por %p345, %p346
      %p348 = scmp.le.s32.totalorder 1, %s26
      %p349 = scmp.lt.s32.totalorder %s26, 3
      %p350 = pnand %p348, %p349
      %p351 = pneg %p350
      // Predicated region
      $region9: #{posenet_feat_forward.1} parent=5 // pred_check
        _
      $region10: #{posenet_feat_forward.1} parent=5 // pred_check_branch
        %353 = sbr.rel (%p350) target = $region12
      $region11: #{posenet_feat_forward.1} parent=5 // pred_region
        %s354 = ssub.s32 %s26, 1
        // Predicated region
        $region13: #{posenet_feat_forward.1} parent=11 // pred_check
          %p355 = pneg %p73
        $region14: #{posenet_feat_forward.1} parent=11 // pred_check_branch
          %357 = sbr.rel (%p355) target = $region16
        $region15: #{posenet_feat_forward.1} parent=11 // pred_region
          _
        $region16: #{posenet_feat_forward.1} parent=11 // pred_fallthru
          _
        // Predicated region
        $region17: #{posenet_feat_forward.1} parent=11 // pred_check
          %p358 = pneg %p94
        $region18: #{posenet_feat_forward.1} parent=11 // pred_check_branch
          %360 = sbr.rel (%p358) target = $region20
        $region19: #{posenet_feat_forward.1} parent=11 // pred_region
          _
        $region20: #{posenet_feat_forward.1} parent=11 // pred_fallthru
          _
        // Predicated region
        $region21: #{posenet_feat_forward.1} parent=11 // pred_check
          %p361 = pneg %p115
        $region22: #{posenet_feat_forward.1} parent=11 // pred_check_branch
          %363 = sbr.rel (%p361) target = $region24
        $region23: #{posenet_feat_forward.1} parent=11 // pred_region
          _
        $region24: #{posenet_feat_forward.1} parent=11 // pred_fallthru
          _
        // Predicated region
        $region25: #{posenet_feat_forward.1} parent=11 // pred_check
          %p364 = pneg %p136
        $region26: #{posenet_feat_forward.1} parent=11 // pred_check_branch
          %366 = sbr.rel (%p364) target = $region28
        $region27: #{posenet_feat_forward.1} parent=11 // pred_region
          _
        $region28: #{posenet_feat_forward.1} parent=11 // pred_fallthru
          _
        // Predicated region
        $region29: #{posenet_feat_forward.1} parent=11 // pred_check
          %p367 = pneg %p157
        $region30: #{posenet_feat_forward.1} parent=11 // pred_check_branch
          %369 = sbr.rel (%p367) target = $region32
        $region31: #{posenet_feat_forward.1} parent=11 // pred_region
          _
        $region32: #{posenet_feat_forward.1} parent=11 // pred_fallthru
          _
        // Predicated region
        $region33: #{posenet_feat_forward.1} parent=11 // pred_check
          %p370 = pneg %p178
        $region34: #{posenet_feat_forward.1} parent=11 // pred_check_branch
          %372 = sbr.rel (%p370) target = $region36
        $region35: #{posenet_feat_forward.1} parent=11 // pred_region
          _
        $region36: #{posenet_feat_forward.1} parent=11 // pred_fallthru
          _
        // Predicated region
        $region37: #{posenet_feat_forward.1} parent=11 // pred_check
          %p373 = pneg %p199
        $region38: #{posenet_feat_forward.1} parent=11 // pred_check_branch
          %375 = sbr.rel (%p373) target = $region40
        $region39: #{posenet_feat_forward.1} parent=11 // pred_region
          _
        $region40: #{posenet_feat_forward.1} parent=11 // pred_fallthru
          _
        // Predicated region
        $region41: #{posenet_feat_forward.1} parent=11 // pred_check
          %p376 = pneg %p220
        $region42: #{posenet_feat_forward.1} parent=11 // pred_check_branch
          %378 = sbr.rel (%p376) target = $region44
        $region43: #{posenet_feat_forward.1} parent=11 // pred_region
          _
        $region44: #{posenet_feat_forward.1} parent=11 // pred_fallthru
          _
        // Predicated region
        $region45: #{posenet_feat_forward.1} parent=11 // pred_check
          %p379 = pneg %p241
        $region46: #{posenet_feat_forward.1} parent=11 // pred_check_branch
          %381 = sbr.rel (%p379) target = $region48
        $region47: #{posenet_feat_forward.1} parent=11 // pred_region
          _
        $region48: #{posenet_feat_forward.1} parent=11 // pred_fallthru
          _
        // Predicated region
        $region49: #{posenet_feat_forward.1} parent=11 // pred_check
          %p382 = pneg %p262
        $region50: #{posenet_feat_forward.1} parent=11 // pred_check_branch
          %384 = sbr.rel (%p382) target = $region52
        $region51: #{posenet_feat_forward.1} parent=11 // pred_region
          _
        $region52: #{posenet_feat_forward.1} parent=11 // pred_fallthru
          _
      $region12: #{posenet_feat_forward.1} parent=5 // pred_fallthru
        _
      %p385 = scmp.lt.s32.totalorder %s26, 2
      // Predicated region
      $region53: #{posenet_feat_forward.1} parent=5 // pred_check
        %p386 = pneg %p385
      $region54: #{posenet_feat_forward.1} parent=5 // pred_check_branch
        %388 = sbr.rel (%p386) target = $region56
      $region55: #{posenet_feat_forward.1} parent=5 // pred_region
        // Predicated region
        $region57: #{posenet_feat_forward.1} parent=55 // pred_check
          %p389 = pneg %p46
        $region58: #{posenet_feat_forward.1} parent=55 // pred_check_branch
          %391 = sbr.rel (%p389) target = $region60
        $region59: #{posenet_feat_forward.1} parent=55 // pred_region
          %p392 = scmp.lt.s32.totalorder %s26, 1
          %s393 = scalar_select %p392, %s26, 1
          %s394 = smul.addr %s393, 72
          %s395 = smul.addr %s394, 4
          %s396 = scalar_lea.vmem %s0, %s395
        $region60: #{posenet_feat_forward.1} parent=55 // pred_fallthru
          _
      $region56: #{posenet_feat_forward.1} parent=5 // pred_fallthru
        _
      %p397 = scmp.le.s32.totalorder 1, %s26
      %p398 = scmp.lt.s32.totalorder %s26, 3
      %p399 = pnand %p397, %p398
      %p400 = pneg %p399
      // Predicated region
      $region61: #{posenet_feat_forward.1} parent=5 // pred_check
        _
      $region62: #{posenet_feat_forward.1} parent=5 // pred_check_branch
        %402 = sbr.rel (%p399) target = $region64
      $region63: #{posenet_feat_forward.1} parent=5 // pred_region
        %s403 = ssub.s32 %s26, 1
        %p404 = scmp.lt.s32.totalorder %s31, 1
        %s405 = scalar_select %p404, %s31, 1
        %s406 = smul.addr %s405, 72
        %s407 = smul.addr %s406, 4
        %s408 = scalar_lea.vmem %s0, %s407
        %p409 = pneg %p52
        %p410 = pneg %p49
        %p411 = pneg %p73
        %p412 = pneg %p70
        %p413 = pneg %p94
        %p414 = pneg %p91
        %p415 = pneg %p115
        %p416 = pneg %p112
        %p417 = pneg %p136
        %p418 = pneg %p133
        %p419 = pneg %p157
        %p420 = pneg %p154
        %p421 = pneg %p178
        %p422 = pneg %p175
        %p423 = pneg %p199
        %p424 = pneg %p196
        %p425 = pneg %p220
        %p426 = pneg %p217
        %p427 = pneg %p241
        %p428 = pneg %p238
        %p429 = pneg %p262
        %p430 = pneg %p259
        %p431 = pneg %p288
        %p432 = pneg %p285
        %s433 = sand.u32 %s275, 1
        %s434 = scalar_lea.sflag [#allocation8], %s433
        %s435 = sand.u32 %s275, 1
        %s436 = smul.addr %s435, 32
        %s437 = scalar_lea.vmem [#allocation7], %s436
        %p438 = pneg %p314
        %p439 = pneg %p311
        %s440 = sand.u32 %s301, 1
        %s441 = scalar_lea.sflag [#allocation10], %s440
        %s442 = sand.u32 %s301, 1
        %s443 = smul.addr %s442, 64
        %s444 = scalar_lea.vmem [#allocation9], %s443
        %p445 = pneg %p340
        %p446 = pneg %p337
        %p447 = scmp.lt.s32.totalorder %s31, 1
        %s448 = scalar_select %p447, %s31, 1
        %s449 = smul.addr %s448, 8
        %s450 = scalar_lea.vmem %s13, %s449
        %p451 = scmp.lt.s32.totalorder %s31, 1
        %s452 = scalar_select %p451, %s31, 1
        %s453 = smul.addr %s452, 72
        %s454 = smul.addr %s453, 4
        %s455 = scalar_lea.vmem %s0, %s454
        %p456 = scmp.lt.s32.totalorder %s31, 1
        %s457 = scalar_select %p456, %s31, 1
        %s458 = smul.addr %s457, 8
        %s459 = scalar_lea.vmem %s13, %s458
        %v461 = vld [vmem:[%s455] sm:$0xff]
        %v462 = vld [vmem:[%s455 + $0x8] sm:$0xff]
        %v463 = vld [vmem:[%s455 + $0x10] sm:$0xff]
        %v464 = vld [vmem:[%s455 + $0x18] sm:$0xff]
        %v465 = vld [vmem:[%s455 + $0x20] sm:$0xf]
        %v466 = vld [vmem:[%s455 + $0x24] sm:$0xff]
        %v467 = vld [vmem:[%s455 + $0x2c] sm:$0xff]
        %v468 = vld [vmem:[%s455 + $0x34] sm:$0xff]
        %v469 = vld [vmem:[%s455 + $0x3c] sm:$0xff]
        %v470 = vld [vmem:[%s455 + $0x44] sm:$0xf]
        %v471 = vld [vmem:[%s455 + $0x48] sm:$0xff]
        %v472 = vld [vmem:[%s455 + $0x50] sm:$0xff]
        %v473 = vld [vmem:[%s455 + $0x58] sm:$0xff]
        %v474 = vld [vmem:[%s455 + $0x60] sm:$0xff]
        %v475 = vld [vmem:[%s455 + $0x68] sm:$0xf]
        %v476 = vld [vmem:[%s455 + $0x6c] sm:$0xff]
        %v477 = vld [vmem:[%s455 + $0x74] sm:$0xff]
        %v478 = vld [vmem:[%s455 + $0x7c] sm:$0xff]
        %v479 = vld [vmem:[%s455 + $0x84] sm:$0xff]
        %v480 = vld [vmem:[%s455 + $0x8c] sm:$0xf]
        %v481 = vld [vmem:[%s455 + $0x90] sm:$0xff]
        %v482 = vld [vmem:[%s455 + $0x98] sm:$0xff]
        %v483 = vld [vmem:[%s455 + $0xa0] sm:$0xff]
        %v484 = vld [vmem:[%s455 + $0xa8] sm:$0xff]
        %v485 = vld [vmem:[%s455 + $0xb0] sm:$0xf]
        %v486 = vld [vmem:[%s455 + $0xb4] sm:$0xff]
        %v487 = vld [vmem:[%s455 + $0xbc] sm:$0xff]
        %v488 = vld [vmem:[%s455 + $0xc4] sm:$0xff]
        %v489 = vld [vmem:[%s455 + $0xcc] sm:$0xff]
        %v490 = vld [vmem:[%s455 + $0xd4] sm:$0xf]
        %v491 = vld [vmem:[%s455 + $0xd8] sm:$0xff]
        %v492 = vld [vmem:[%s455 + $0xe0] sm:$0xff]
        %v493 = vld [vmem:[%s455 + $0xe8] sm:$0xff]
        %v494 = vld [vmem:[%s455 + $0xf0] sm:$0xff]
        %v495 = vld [vmem:[%s455 + $0xf8] sm:$0xf]
        %v496 = vld [vmem:[%s455 + $0xfc] sm:$0xff]
        %v497 = vld [vmem:[%s455 + $0x104] sm:$0xff]
        %v498 = vld [vmem:[%s455 + $0x10c] sm:$0xff]
        %v499 = vld [vmem:[%s455 + $0x114] sm:$0xff]
        %v500 = vld [vmem:[%s455 + $0x11c] sm:$0xf]
        %v501 = vld [vmem:[%s1] sm:$0xf]
        %v502 = vld [vmem:[%s1 + $0x4] sm:$0xf]
        %v503 = vld [vmem:[%s1 + $0x8] sm:$0xf]
        %v504 = vld [vmem:[%s1 + $0xc] sm:$0xf]
        %v505 = vld [vmem:[%s1 + $0x10] sm:$0xf]
        %v506 = vld [vmem:[%s1 + $0x14] sm:$0xf]
        %v507 = vld [vmem:[%s1 + $0x18] sm:$0xf]
        %v508 = vld [vmem:[%s1 + $0x1c] sm:$0xf]
        %v509 = vld [vmem:[%s1 + $0x20] sm:$0xf]
        %v510 = vld [vmem:[%s1 + $0x24] sm:$0xf]
        %v511 = vld [vmem:[%s1 + $0x28] sm:$0xf]
        %v512 = vld [vmem:[%s1 + $0x2c] sm:$0xf]
        %v513 = vld [vmem:[%s1 + $0x30] sm:$0xf]
        %v514 = vld [vmem:[%s1 + $0x34] sm:$0xf]
        %v515 = vld [vmem:[%s1 + $0x38] sm:$0xf]
        %v516 = vld [vmem:[%s1 + $0x3c] sm:$0xf]
        %v517 = vld [vmem:[%s1 + $0x40] sm:$0xf]
        %v518 = vld [vmem:[%s1 + $0x44] sm:$0xf]
        %v519 = vld [vmem:[%s1 + $0x48] sm:$0xf]
        %v520 = vld [vmem:[%s1 + $0x4c] sm:$0xf]
        %v521 = vld [vmem:[%s1 + $0x50] sm:$0xf]
        %v522 = vld [vmem:[%s1 + $0x54] sm:$0xf]
        %v523 = vld [vmem:[%s1 + $0x58] sm:$0xf]
        %v524 = vld [vmem:[%s1 + $0x5c] sm:$0xf]
        %v525 = vld [vmem:[%s1 + $0x60] sm:$0xf]
        %v526 = vld [vmem:[%s1 + $0x64] sm:$0xf]
        %v527 = vld [vmem:[%s1 + $0x68] sm:$0xf]
        %v528 = vld [vmem:[%s1 + $0x6c] sm:$0xf]
        %v529 = vld [vmem:[%s1 + $0x70] sm:$0xf]
        %v530 = vld [vmem:[%s1 + $0x74] sm:$0xf]
        %v531 = vld [vmem:[%s1 + $0x78] sm:$0xf]
        %v532 = vld [vmem:[%s1 + $0x7c] sm:$0xf]
        %v533 = vld [vmem:[%s1 + $0x80] sm:$0xf]
        %v534 = vld [vmem:[%s1 + $0x84] sm:$0xf]
        %v535 = vld [vmem:[%s1 + $0x88] sm:$0xf]
        %v536 = vld [vmem:[%s1 + $0x8c] sm:$0xf]
        %v537 = vld [vmem:[%s1 + $0x90] sm:$0xf]
        %v538 = vld [vmem:[%s1 + $0x94] sm:$0xf]
        %v539 = vld [vmem:[%s1 + $0x98] sm:$0xf]
        %v540 = vld [vmem:[%s1 + $0x9c] sm:$0xf]
        %v541 = vld [vmem:[%s1 + $0xa0] sm:$0xf]
        %v542 = vld [vmem:[%s1 + $0xa4] sm:$0xf]
        %v543 = vld [vmem:[%s1 + $0xa8] sm:$0xf]
        %v544 = vld [vmem:[%s1 + $0xac] sm:$0xf]
        %v545 = vld [vmem:[%s1 + $0xb0] sm:$0xf]
        %v546 = vld [vmem:[%s1 + $0xb4] sm:$0xf]
        %v547 = vld [vmem:[%s1 + $0xb8] sm:$0xf]
        %v548 = vld [vmem:[%s1 + $0xbc] sm:$0xf]
        %v549 = vld [vmem:[%s1 + $0xc0] sm:$0xf]
        %v550 = vld [vmem:[%s1 + $0xc4] sm:$0xf]
        %v551 = vld [vmem:[%s1 + $0xc8] sm:$0xf]
        %v552 = vld [vmem:[%s1 + $0xcc] sm:$0xf]
        %v553 = vld [vmem:[%s1 + $0xd0] sm:$0xf]
        %v554 = vld [vmem:[%s1 + $0xd4] sm:$0xf]
        %v555 = vld [vmem:[%s1 + $0xd8] sm:$0xf]
        %v556 = vld [vmem:[%s1 + $0xdc] sm:$0xf]
        %v557 = vld [vmem:[%s1 + $0xe0] sm:$0xf]
        %v558 = vld [vmem:[%s1 + $0xe4] sm:$0xf]
        %v559 = vld [vmem:[%s1 + $0xe8] sm:$0xf]
        %v560 = vld [vmem:[%s1 + $0xec] sm:$0xf]
        %v561 = vld [vmem:[%s1 + $0xf0] sm:$0xf]
        %v562 = vld [vmem:[%s1 + $0xf4] sm:$0xf]
        %v563 = vld [vmem:[%s1 + $0xf8] sm:$0xf]
        %v564 = vld [vmem:[%s1 + $0xfc] sm:$0xf]
        %v565 = vld [vmem:[%s1 + $0x100] sm:$0xf]
        %v566 = vld [vmem:[%s1 + $0x104] sm:$0xf]
        %v567 = vld [vmem:[%s1 + $0x108] sm:$0xf]
        %v568 = vld [vmem:[%s1 + $0x10c] sm:$0xf]
        %v569 = vld [vmem:[%s1 + $0x110] sm:$0xf]
        %v570 = vld [vmem:[%s1 + $0x114] sm:$0xf]
        %v571 = vld [vmem:[%s1 + $0x118] sm:$0xf]
        %v572 = vld [vmem:[%s1 + $0x11c] sm:$0xf]
        %v573 = vld [vmem:[%s1 + $0x120] sm:$0xf]
        %v574 = vld [vmem:[%s1 + $0x124] sm:$0xf]
        %v575 = vld [vmem:[%s1 + $0x128] sm:$0xf]
        %v576 = vld [vmem:[%s1 + $0x12c] sm:$0xf]
        %v577 = vld [vmem:[%s1 + $0x130] sm:$0xf]
        %v578 = vld [vmem:[%s1 + $0x134] sm:$0xf]
        %v579 = vld [vmem:[%s1 + $0x138] sm:$0xf]
        %v580 = vld [vmem:[%s1 + $0x13c] sm:$0xf]
        %v581 = vld [vmem:[%s1 + $0x140] sm:$0xf]
        %v582 = vld [vmem:[%s1 + $0x144] sm:$0xf]
        %v583 = vld [vmem:[%s1 + $0x148] sm:$0xf]
        %v584 = vld [vmem:[%s1 + $0x14c] sm:$0xf]
        %v585 = vld [vmem:[%s1 + $0x150] sm:$0xf]
        %v586 = vld [vmem:[%s1 + $0x154] sm:$0xf]
        %v587 = vld [vmem:[%s1 + $0x158] sm:$0xf]
        %v588 = vld [vmem:[%s1 + $0x15c] sm:$0xf]
        %v589 = vld [vmem:[%s1 + $0x160] sm:$0xf]
        %v590 = vld [vmem:[%s1 + $0x164] sm:$0xf]
        %v591 = vld [vmem:[%s1 + $0x168] sm:$0xf]
        %v592 = vld [vmem:[%s1 + $0x16c] sm:$0xf]
        %v593 = vld [vmem:[%s1 + $0x170] sm:$0xf]
        %v594 = vld [vmem:[%s1 + $0x174] sm:$0xf]
        %v595 = vld [vmem:[%s1 + $0x178] sm:$0xf]
        %v596 = vld [vmem:[%s1 + $0x17c] sm:$0xf]
        %v597 = vld [vmem:[%s1 + $0x180] sm:$0xf]
        %v598 = vld [vmem:[%s1 + $0x184] sm:$0xf]
        %v599 = vld [vmem:[%s1 + $0x188] sm:$0xf]
        %v600 = vld [vmem:[%s1 + $0x18c] sm:$0xf]
        %v601 = vld [vmem:[%s1 + $0x190] sm:$0xf]
        %v602 = vld [vmem:[%s1 + $0x194] sm:$0xf]
        %v603 = vld [vmem:[%s1 + $0x198] sm:$0xf]
        %v604 = vld [vmem:[%s1 + $0x19c] sm:$0xf]
        %v605 = vld [vmem:[%s1 + $0x1a0] sm:$0xf]
        %v606 = vld [vmem:[%s1 + $0x1a4] sm:$0xf]
        %v607 = vld [vmem:[%s1 + $0x1a8] sm:$0xf]
        %v608 = vld [vmem:[%s1 + $0x1ac] sm:$0xf]
        %v609 = vld [vmem:[%s1 + $0x1b0] sm:$0xf]
        %v610 = vld [vmem:[%s1 + $0x1b4] sm:$0xf]
        %v611 = vld [vmem:[%s1 + $0x1b8] sm:$0xf]
        %v612 = vld [vmem:[%s1 + $0x1bc] sm:$0xf]
        %v613 = vld [vmem:[%s1 + $0x1c0] sm:$0xf]
        %v614 = vld [vmem:[%s1 + $0x1c4] sm:$0xf]
        %v615 = vld [vmem:[%s1 + $0x1c8] sm:$0xf]
        %v616 = vld [vmem:[%s1 + $0x1cc] sm:$0xf]
        %v617 = vld [vmem:[%s1 + $0x1d0] sm:$0xf]
        %v618 = vld [vmem:[%s1 + $0x1d4] sm:$0xf]
        %v619 = vld [vmem:[%s1 + $0x1d8] sm:$0xf]
        %v620 = vld [vmem:[%s1 + $0x1dc] sm:$0xf]
        %v621 = vld [vmem:[%s1 + $0x1e0] sm:$0xf]
        %v622 = vld [vmem:[%s1 + $0x1e4] sm:$0xf]
        %v623 = vld [vmem:[%s1 + $0x1e8] sm:$0xf]
        %v624 = vld [vmem:[%s1 + $0x1ec] sm:$0xf]
        %v625 = vld [vmem:[%s1 + $0x1f0] sm:$0xf]
        %v626 = vld [vmem:[%s1 + $0x1f4] sm:$0xf]
        %v627 = vld [vmem:[%s1 + $0x1f8] sm:$0xf]
        %v628 = vld [vmem:[%s1 + $0x1fc] sm:$0xf]
        %v629 = vld [vmem:[%s1 + $0x200] sm:$0xf]
        %v630 = vld [vmem:[%s1 + $0x204] sm:$0xf]
        %v631 = vld [vmem:[%s1 + $0x208] sm:$0xf]
        %v632 = vld [vmem:[%s1 + $0x20c] sm:$0xf]
        %v633 = vld [vmem:[%s1 + $0x210] sm:$0xf]
        %v634 = vld [vmem:[%s1 + $0x214] sm:$0xf]
        %v635 = vld [vmem:[%s1 + $0x218] sm:$0xf]
        %v636 = vld [vmem:[%s1 + $0x21c] sm:$0xf]
        %v637 = vld [vmem:[%s1 + $0x220] sm:$0xf]
        %v638 = vld [vmem:[%s1 + $0x224] sm:$0xf]
        %v639 = vld [vmem:[%s1 + $0x228] sm:$0xf]
        %v640 = vld [vmem:[%s1 + $0x22c] sm:$0xf]
        %v641 = vld [vmem:[%s1 + $0x230] sm:$0xf]
        %v642 = vld [vmem:[%s1 + $0x234] sm:$0xf]
        %v643 = vld [vmem:[%s1 + $0x238] sm:$0xf]
        %v644 = vld [vmem:[%s1 + $0x23c] sm:$0xf]
        %v645 = vld [vmem:[%s2] sm:$0x1]
        %v647 = vlaneseq
        %v648 = vshrl.u32 %v647, 7
        %v649 = vsub.s32 0, %v648
        %v650 = vrot.slane %v645, %v649
        %v692 = vunpack.c.l.b16 %v461
        %v693 = vunpack.c.h.b16 %v461
        %v694 = vunpack.c.l.b16 %v462
        %v695 = vunpack.c.h.b16 %v462
        %v696 = vunpack.c.l.b16 %v463
        %v697 = vunpack.c.h.b16 %v463
        %v698 = vunpack.c.l.b16 %v464
        %v699 = vunpack.c.h.b16 %v464
        %v700 = vunpack.c.l.b16 %v465
        %v701 = vunpack.c.l.b16 %v466
        %v702 = vunpack.c.h.b16 %v466
        %v703 = vunpack.c.l.b16 %v467
        %v704 = vunpack.c.h.b16 %v467
        %v705 = vunpack.c.l.b16 %v468
        %v706 = vunpack.c.h.b16 %v468
        %v707 = vunpack.c.l.b16 %v469
        %v708 = vunpack.c.h.b16 %v469
        %v709 = vunpack.c.l.b16 %v470
        %v710 = vunpack.c.l.b16 %v471
        %v711 = vunpack.c.h.b16 %v471
        %v712 = vunpack.c.l.b16 %v472
        %v713 = vunpack.c.h.b16 %v472
        %v714 = vunpack.c.l.b16 %v473
        %v715 = vunpack.c.h.b16 %v473
        %v716 = vunpack.c.l.b16 %v474
        %v717 = vunpack.c.h.b16 %v474
        %v718 = vunpack.c.l.b16 %v475
        %v719 = vunpack.c.l.b16 %v476
        %v720 = vunpack.c.h.b16 %v476
        %v721 = vunpack.c.l.b16 %v477
        %v722 = vunpack.c.h.b16 %v477
        %v723 = vunpack.c.l.b16 %v478
        %v724 = vunpack.c.h.b16 %v478
        %v725 = vunpack.c.l.b16 %v479
        %v726 = vunpack.c.h.b16 %v479
        %v727 = vunpack.c.l.b16 %v480
        %v728 = vunpack.c.l.b16 %v481
        %v729 = vunpack.c.h.b16 %v481
        %v730 = vunpack.c.l.b16 %v482
        %v731 = vunpack.c.h.b16 %v482
        %v732 = vunpack.c.l.b16 %v483
        %v733 = vunpack.c.h.b16 %v483
        %v734 = vunpack.c.l.b16 %v484
        %v735 = vunpack.c.h.b16 %v484
        %v736 = vunpack.c.l.b16 %v485
        %v737 = vunpack.c.l.b16 %v486
        %v738 = vunpack.c.h.b16 %v486
        %v739 = vunpack.c.l.b16 %v487
        %v740 = vunpack.c.h.b16 %v487
        %v741 = vunpack.c.l.b16 %v488
        %v742 = vunpack.c.h.b16 %v488
        %v743 = vunpack.c.l.b16 %v489
        %v744 = vunpack.c.h.b16 %v489
        %v745 = vunpack.c.l.b16 %v490
        %v746 = vunpack.c.l.b16 %v491
        %v747 = vunpack.c.h.b16 %v491
        %v748 = vunpack.c.l.b16 %v492
        %v749 = vunpack.c.h.b16 %v492
        %v750 = vunpack.c.l.b16 %v493
        %v751 = vunpack.c.h.b16 %v493
        %v752 = vunpack.c.l.b16 %v494
        %v753 = vunpack.c.h.b16 %v494
        %v754 = vunpack.c.l.b16 %v495
        %v755 = vunpack.c.l.b16 %v496
        %v756 = vunpack.c.h.b16 %v496
        %v757 = vunpack.c.l.b16 %v497
        %v758 = vunpack.c.h.b16 %v497
        %v759 = vunpack.c.l.b16 %v498
        %v760 = vunpack.c.h.b16 %v498
        %v761 = vunpack.c.l.b16 %v499
        %v762 = vunpack.c.h.b16 %v499
        %v763 = vunpack.c.l.b16 %v500
        %v764 = vpack.c.b16 %v701, %v692
        %v765 = vpack.c.b16 %v702, %v693
        %v766 = vpack.c.b16 %v703, %v694
        %v767 = vpack.c.b16 %v704, %v695
        %v768 = vpack.c.b16 %v705, %v696
        %v769 = vpack.c.b16 %v706, %v697
        %v770 = vpack.c.b16 %v707, %v698
        %v771 = vpack.c.b16 %v708, %v699
        %v772 = vpack.c.b16 %v709, %v700
        %v773 = vpack.c.b16 %v719, %v710
        %v774 = vpack.c.b16 %v720, %v711
        %v775 = vpack.c.b16 %v721, %v712
        %v776 = vpack.c.b16 %v722, %v713
        %v777 = vpack.c.b16 %v723, %v714
        %v778 = vpack.c.b16 %v724, %v715
        %v779 = vpack.c.b16 %v725, %v716
        %v780 = vpack.c.b16 %v726, %v717
        %v781 = vpack.c.b16 %v727, %v718
        %v782 = vpack.c.b16 %v737, %v728
        %v783 = vpack.c.b16 %v738, %v729
        %v784 = vpack.c.b16 %v739, %v730
        %v785 = vpack.c.b16 %v740, %v731
        %v786 = vpack.c.b16 %v741, %v732
        %v787 = vpack.c.b16 %v742, %v733
        %v788 = vpack.c.b16 %v743, %v734
        %v789 = vpack.c.b16 %v744, %v735
        %v790 = vpack.c.b16 %v745, %v736
        %v791 = vpack.c.b16 %v755, %v746
        %v792 = vpack.c.b16 %v756, %v747
        %v793 = vpack.c.b16 %v757, %v748
        %v794 = vpack.c.b16 %v758, %v749
        %v795 = vpack.c.b16 %v759, %v750
        %v796 = vpack.c.b16 %v760, %v751
        %v797 = vpack.c.b16 %v761, %v752
        %v798 = vpack.c.b16 %v762, %v753
        %v799 = vpack.c.b16 %v763, %v754
        %v980 = vunpack.c.l.b16 %v501
        %v981 = vunpack.c.l.b16 %v502
        %v982 = vunpack.c.l.b16 %v503
        %v983 = vunpack.c.l.b16 %v504
        %v984 = vunpack.c.l.b16 %v505
        %v985 = vunpack.c.l.b16 %v506
        %v986 = vunpack.c.l.b16 %v507
        %v987 = vunpack.c.l.b16 %v508
        %v988 = vunpack.c.l.b16 %v509
        %v989 = vunpack.c.l.b16 %v510
        %v990 = vunpack.c.l.b16 %v511
        %v991 = vunpack.c.l.b16 %v512
        %v992 = vunpack.c.l.b16 %v513
        %v993 = vunpack.c.l.b16 %v514
        %v994 = vunpack.c.l.b16 %v515
        %v995 = vunpack.c.l.b16 %v516
        %v996 = vunpack.c.l.b16 %v517
        %v997 = vunpack.c.l.b16 %v518
        %v998 = vunpack.c.l.b16 %v519
        %v999 = vunpack.c.l.b16 %v520
        %v1000 = vunpack.c.l.b16 %v521
        %v1001 = vunpack.c.l.b16 %v522
        %v1002 = vunpack.c.l.b16 %v523
        %v1003 = vunpack.c.l.b16 %v524
        %v1004 = vunpack.c.l.b16 %v525
        %v1005 = vunpack.c.l.b16 %v526
        %v1006 = vunpack.c.l.b16 %v527
        %v1007 = vunpack.c.l.b16 %v528
        %v1008 = vunpack.c.l.b16 %v529
        %v1009 = vunpack.c.l.b16 %v530
        %v1010 = vunpack.c.l.b16 %v531
        %v1011 = vunpack.c.l.b16 %v532
        %v1012 = vunpack.c.l.b16 %v533
        %v1013 = vunpack.c.l.b16 %v534
        %v1014 = vunpack.c.l.b16 %v535
        %v1015 = vunpack.c.l.b16 %v536
        %v1016 = vunpack.c.l.b16 %v537
        %v1017 = vunpack.c.l.b16 %v538
        %v1018 = vunpack.c.l.b16 %v539
        %v1019 = vunpack.c.l.b16 %v540
        %v1020 = vunpack.c.l.b16 %v541
        %v1021 = vunpack.c.l.b16 %v542
        %v1022 = vunpack.c.l.b16 %v543
        %v1023 = vunpack.c.l.b16 %v544
        %v1024 = vunpack.c.l.b16 %v545
        %v1025 = vunpack.c.l.b16 %v546
        %v1026 = vunpack.c.l.b16 %v547
        %v1027 = vunpack.c.l.b16 %v548
        %v1028 = vunpack.c.l.b16 %v549
        %v1029 = vunpack.c.l.b16 %v550
        %v1030 = vunpack.c.l.b16 %v551
        %v1031 = vunpack.c.l.b16 %v552
        %v1032 = vunpack.c.l.b16 %v553
        %v1033 = vunpack.c.l.b16 %v554
        %v1034 = vunpack.c.l.b16 %v555
        %v1035 = vunpack.c.l.b16 %v556
        %v1036 = vunpack.c.l.b16 %v557
        %v1037 = vunpack.c.l.b16 %v558
        %v1038 = vunpack.c.l.b16 %v559
        %v1039 = vunpack.c.l.b16 %v560
        %v1040 = vunpack.c.l.b16 %v561
        %v1041 = vunpack.c.l.b16 %v562
        %v1042 = vunpack.c.l.b16 %v563
        %v1043 = vunpack.c.l.b16 %v564
        %v1044 = vunpack.c.l.b16 %v565
        %v1045 = vunpack.c.l.b16 %v566
        %v1046 = vunpack.c.l.b16 %v567
        %v1047 = vunpack.c.l.b16 %v568
        %v1048 = vunpack.c.l.b16 %v569
        %v1049 = vunpack.c.l.b16 %v570
        %v1050 = vunpack.c.l.b16 %v571
        %v1051 = vunpack.c.l.b16 %v572
        %v1052 = vunpack.c.l.b16 %v573
        %v1053 = vunpack.c.l.b16 %v574
        %v1054 = vunpack.c.l.b16 %v575
        %v1055 = vunpack.c.l.b16 %v576
        %v1056 = vunpack.c.l.b16 %v577
        %v1057 = vunpack.c.l.b16 %v578
        %v1058 = vunpack.c.l.b16 %v579
        %v1059 = vunpack.c.l.b16 %v580
        %v1060 = vunpack.c.l.b16 %v581
        %v1061 = vunpack.c.l.b16 %v582
        %v1062 = vunpack.c.l.b16 %v583
        %v1063 = vunpack.c.l.b16 %v584
        %v1064 = vunpack.c.l.b16 %v585
        %v1065 = vunpack.c.l.b16 %v586
        %v1066 = vunpack.c.l.b16 %v587
        %v1067 = vunpack.c.l.b16 %v588
        %v1068 = vunpack.c.l.b16 %v589
        %v1069 = vunpack.c.l.b16 %v590
        %v1070 = vunpack.c.l.b16 %v591
        %v1071 = vunpack.c.l.b16 %v592
        %v1072 = vunpack.c.l.b16 %v593
        %v1073 = vunpack.c.l.b16 %v594
        %v1074 = vunpack.c.l.b16 %v595
        %v1075 = vunpack.c.l.b16 %v596
        %v1076 = vunpack.c.l.b16 %v597
        %v1077 = vunpack.c.l.b16 %v598
        %v1078 = vunpack.c.l.b16 %v599
        %v1079 = vunpack.c.l.b16 %v600
        %v1080 = vunpack.c.l.b16 %v601
        %v1081 = vunpack.c.l.b16 %v602
        %v1082 = vunpack.c.l.b16 %v603
        %v1083 = vunpack.c.l.b16 %v604
        %v1084 = vunpack.c.l.b16 %v605
        %v1085 = vunpack.c.l.b16 %v606
        %v1086 = vunpack.c.l.b16 %v607
        %v1087 = vunpack.c.l.b16 %v608
        %v1088 = vunpack.c.l.b16 %v609
        %v1089 = vunpack.c.l.b16 %v610
        %v1090 = vunpack.c.l.b16 %v611
        %v1091 = vunpack.c.l.b16 %v612
        %v1092 = vunpack.c.l.b16 %v613
        %v1093 = vunpack.c.l.b16 %v614
        %v1094 = vunpack.c.l.b16 %v615
        %v1095 = vunpack.c.l.b16 %v616
        %v1096 = vunpack.c.l.b16 %v617
        %v1097 = vunpack.c.l.b16 %v618
        %v1098 = vunpack.c.l.b16 %v619
        %v1099 = vunpack.c.l.b16 %v620
        %v1100 = vunpack.c.l.b16 %v621
        %v1101 = vunpack.c.l.b16 %v622
        %v1102 = vunpack.c.l.b16 %v623
        %v1103 = vunpack.c.l.b16 %v624
        %v1104 = vunpack.c.l.b16 %v625
        %v1105 = vunpack.c.l.b16 %v626
        %v1106 = vunpack.c.l.b16 %v627
        %v1107 = vunpack.c.l.b16 %v628
        %v1108 = vunpack.c.l.b16 %v629
        %v1109 = vunpack.c.l.b16 %v630
        %v1110 = vunpack.c.l.b16 %v631
        %v1111 = vunpack.c.l.b16 %v632
        %v1112 = vunpack.c.l.b16 %v633
        %v1113 = vunpack.c.l.b16 %v634
        %v1114 = vunpack.c.l.b16 %v635
        %v1115 = vunpack.c.l.b16 %v636
        %v1116 = vunpack.c.l.b16 %v637
        %v1117 = vunpack.c.l.b16 %v638
        %v1118 = vunpack.c.l.b16 %v639
        %v1119 = vunpack.c.l.b16 %v640
        %v1120 = vunpack.c.l.b16 %v641
        %v1121 = vunpack.c.l.b16 %v642
        %v1122 = vunpack.c.l.b16 %v643
        %v1123 = vunpack.c.l.b16 %v644
        %v1124 = vpack.c.b16 %v981, %v980
        %v1125 = vpack.c.b16 %v983, %v982
        %v1126 = vpack.c.b16 %v985, %v984
        %v1127 = vpack.c.b16 %v987, %v986
        %v1128 = vpack.c.b16 %v989, %v988
        %v1129 = vpack.c.b16 %v991, %v990
        %v1130 = vpack.c.b16 %v993, %v992
        %v1131 = vpack.c.b16 %v995, %v994
        %v1132 = vpack.c.b16 %v997, %v996
        %v1133 = vpack.c.b16 %v999, %v998
        %v1134 = vpack.c.b16 %v1001, %v1000
        %v1135 = vpack.c.b16 %v1003, %v1002
        %v1136 = vpack.c.b16 %v1005, %v1004
        %v1137 = vpack.c.b16 %v1007, %v1006
        %v1138 = vpack.c.b16 %v1009, %v1008
        %v1139 = vpack.c.b16 %v1011, %v1010
        %v1140 = vpack.c.b16 %v1013, %v1012
        %v1141 = vpack.c.b16 %v1015, %v1014
        %v1142 = vpack.c.b16 %v1017, %v1016
        %v1143 = vpack.c.b16 %v1019, %v1018
        %v1144 = vpack.c.b16 %v1021, %v1020
        %v1145 = vpack.c.b16 %v1023, %v1022
        %v1146 = vpack.c.b16 %v1025, %v1024
        %v1147 = vpack.c.b16 %v1027, %v1026
        %v1148 = vpack.c.b16 %v1029, %v1028
        %v1149 = vpack.c.b16 %v1031, %v1030
        %v1150 = vpack.c.b16 %v1033, %v1032
        %v1151 = vpack.c.b16 %v1035, %v1034
        %v1152 = vpack.c.b16 %v1037, %v1036
        %v1153 = vpack.c.b16 %v1039, %v1038
        %v1154 = vpack.c.b16 %v1041, %v1040
        %v1155 = vpack.c.b16 %v1043, %v1042
        %v1156 = vpack.c.b16 %v1045, %v1044
        %v1157 = vpack.c.b16 %v1047, %v1046
        %v1158 = vpack.c.b16 %v1049, %v1048
        %v1159 = vpack.c.b16 %v1051, %v1050
        %v1160 = vpack.c.b16 %v1053, %v1052
        %v1161 = vpack.c.b16 %v1055, %v1054
        %v1162 = vpack.c.b16 %v1057, %v1056
        %v1163 = vpack.c.b16 %v1059, %v1058
        %v1164 = vpack.c.b16 %v1061, %v1060
        %v1165 = vpack.c.b16 %v1063, %v1062
        %v1166 = vpack.c.b16 %v1065, %v1064
        %v1167 = vpack.c.b16 %v1067, %v1066
        %v1168 = vpack.c.b16 %v1069, %v1068
        %v1169 = vpack.c.b16 %v1071, %v1070
        %v1170 = vpack.c.b16 %v1073, %v1072
        %v1171 = vpack.c.b16 %v1075, %v1074
        %v1172 = vpack.c.b16 %v1077, %v1076
        %v1173 = vpack.c.b16 %v1079, %v1078
        %v1174 = vpack.c.b16 %v1081, %v1080
        %v1175 = vpack.c.b16 %v1083, %v1082
        %v1176 = vpack.c.b16 %v1085, %v1084
        %v1177 = vpack.c.b16 %v1087, %v1086
        %v1178 = vpack.c.b16 %v1089, %v1088
        %v1179 = vpack.c.b16 %v1091, %v1090
        %v1180 = vpack.c.b16 %v1093, %v1092
        %v1181 = vpack.c.b16 %v1095, %v1094
        %v1182 = vpack.c.b16 %v1097, %v1096
        %v1183 = vpack.c.b16 %v1099, %v1098
        %v1184 = vpack.c.b16 %v1101, %v1100
        %v1185 = vpack.c.b16 %v1103, %v1102
        %v1186 = vpack.c.b16 %v1105, %v1104
        %v1187 = vpack.c.b16 %v1107, %v1106
        %v1188 = vpack.c.b16 %v1109, %v1108
        %v1189 = vpack.c.b16 %v1111, %v1110
        %v1190 = vpack.c.b16 %v1113, %v1112
        %v1191 = vpack.c.b16 %v1115, %v1114
        %v1192 = vpack.c.b16 %v1117, %v1116
        %v1193 = vpack.c.b16 %v1119, %v1118
        %v1194 = vpack.c.b16 %v1121, %v1120
        %v1195 = vpack.c.b16 %v1123, %v1122
        %1268 = vmatprep.subr.bf16.mxu0 0
        %1269 = vmatpush1.bf16.msra.mxu0 %v1124
        %1270 = vmatprep.subr.bf16.mxu0 0
        %1271 = vmatpush1.bf16.msra.mxu0 %v1125
        %1272 = vmatprep.subr.bf16.mxu0 0
        %1273 = vmatpush1.bf16.msra.mxu0 %v1126
        %1274 = vmatprep.subr.bf16.mxu0 0
        %1275 = vmatpush1.bf16.msra.mxu0 %v1127
        %1276 = vmatprep.subr.bf16.mxu0 0
        %1277 = vmatpush1.bf16.msra.mxu0 %v1128
        %1278 = vmatprep.subr.bf16.mxu0 0
        %1279 = vmatpush1.bf16.msra.mxu0 %v1129
        %1280 = vmatprep.subr.bf16.mxu0 0
        %1281 = vmatpush1.bf16.msra.mxu0 %v1130
        %1282 = vmatprep.subr.bf16.mxu0 0
        %1283 = vmatpush1.bf16.msra.mxu0 %v1131
        %1284 = vmatprep.subr.bf16.mxu0 0
        %1285 = vmatpush1.bf16.msra.mxu0 %v1132
        %1286 = vmatprep.subr.bf16.mxu0 0
        %1287 = vmatpush1.bf16.msra.mxu0 %v1133
        %1288 = vmatprep.subr.bf16.mxu0 0
        %1289 = vmatpush1.bf16.msra.mxu0 %v1134
        %1290 = vmatprep.subr.bf16.mxu0 0
        %1291 = vmatpush1.bf16.msra.mxu0 %v1135
        %1292 = vmatprep.subr.bf16.mxu0 0
        %1293 = vmatpush1.bf16.msra.mxu0 %v1136
        %1294 = vmatprep.subr.bf16.mxu0 0
        %1295 = vmatpush1.bf16.msra.mxu0 %v1137
        %1296 = vmatprep.subr.bf16.mxu0 0
        %1297 = vmatpush1.bf16.msra.mxu0 %v1138
        %1298 = vmatprep.subr.bf16.mxu0 0
        %1299 = vmatpush1.bf16.msra.mxu0 %v1139
        %1300 = vmatprep.mubr.bf16.mxu0 %v765
        %1301 = vmatmul.mubr.bf16.gmra.mrb[0].mxu0 %v764
        %v1302 = vpop.f32.mrb[0].mxu0
        %v1303 = vadd.f32 %v650, %v1302
        %v1304 = vpop.f32.mrb[0].mxu0
        %v1305 = vpop.f32.mrb[0].mxu0
        %v1306 = vadd.f32 %v650, %v1305
        %v1307 = vpop.f32.mrb[0].mxu0
        %1308 = vmatprep.mubr.bf16.mxu0 %v774
        %1309 = vmatmul.mubr.bf16.gmra.mrb[0].mxu0 %v773
        %v1310 = vpop.f32.mrb[0].mxu0
        %v1311 = vadd.f32 %v650, %v1310
        %v1312 = vpop.f32.mrb[0].mxu0
        %v1313 = vpop.f32.mrb[0].mxu0
        %v1314 = vadd.f32 %v650, %v1313
        %v1315 = vpop.f32.mrb[0].mxu0
        %1316 = vmatprep.mubr.bf16.mxu0 %v783
        %1317 = vmatmul.mubr.bf16.gmra.mrb[0].mxu0 %v782
        %v1318 = vpop.f32.mrb[0].mxu0
        %v1319 = vadd.f32 %v650, %v1318
        %v1320 = vpop.f32.mrb[0].mxu0
        %v1321 = vpop.f32.mrb[0].mxu0
        %v1322 = vadd.f32 %v650, %v1321
        %v1323 = vpop.f32.mrb[0].mxu0
        %1324 = vmatprep.mubr.bf16.mxu0 %v792
        %1325 = vmatmul.mubr.bf16.gmra.mrb[0].mxu0 %v791
        %v1326 = vpop.f32.mrb[0].mxu0
        %v1327 = vadd.f32 %v650, %v1326
        %v1328 = vpop.f32.mrb[0].mxu0
        %v1329 = vpop.f32.mrb[0].mxu0
        %v1330 = vadd.f32 %v650, %v1329
        %v1331 = vpop.f32.mrb[0].mxu0
        %1332 = vdwg.mxu0
        %1333 = vmatprep.subr.bf16.mxu0 0
        %1334 = vmatpush1.bf16.msra.mxu0 %v1140
        %1335 = vmatprep.subr.bf16.mxu0 0
        %1336 = vmatpush1.bf16.msra.mxu0 %v1141
        %1337 = vmatprep.subr.bf16.mxu0 0
        %1338 = vmatpush1.bf16.msra.mxu0 %v1142
        %1339 = vmatprep.subr.bf16.mxu0 0
        %1340 = vmatpush1.bf16.msra.mxu0 %v1143
        %1341 = vmatprep.subr.bf16.mxu0 0
        %1342 = vmatpush1.bf16.msra.mxu0 %v1144
        %1343 = vmatprep.subr.bf16.mxu0 0
        %1344 = vmatpush1.bf16.msra.mxu0 %v1145
        %1345 = vmatprep.subr.bf16.mxu0 0
        %1346 = vmatpush1.bf16.msra.mxu0 %v1146
        %1347 = vmatprep.subr.bf16.mxu0 0
        %1348 = vmatpush1.bf16.msra.mxu0 %v1147
        %1349 = vmatprep.subr.bf16.mxu0 0
        %1350 = vmatpush1.bf16.msra.mxu0 %v1148
        %1351 = vmatprep.subr.bf16.mxu0 0
        %1352 = vmatpush1.bf16.msra.mxu0 %v1149
        %1353 = vmatprep.subr.bf16.mxu0 0
        %1354 = vmatpush1.bf16.msra.mxu0 %v1150
        %1355 = vmatprep.subr.bf16.mxu0 0
        %1356 = vmatpush1.bf16.msra.mxu0 %v1151
        %1357 = vmatprep.subr.bf16.mxu0 0
        %1358 = vmatpush1.bf16.msra.mxu0 %v1152
        %1359 = vmatprep.subr.bf16.mxu0 0
        %1360 = vmatpush1.bf16.msra.mxu0 %v1153
        %1361 = vmatprep.subr.bf16.mxu0 0
        %1362 = vmatpush1.bf16.msra.mxu0 %v1154
        %1363 = vmatprep.subr.bf16.mxu0 0
        %1364 = vmatpush1.bf16.msra.mxu0 %v1155
        %1365 = vmatprep.mubr.bf16.mxu0 %v767
        %1366 = vmatmul.mubr.bf16.gmra.mrb[0].mxu0 %v766
        %v1367 = vpop.f32.mrb[0].mxu0
        %v1368 = vadd.f32 %v1303, %v1367
        %v1369 = vpop.f32.mrb[0].mxu0
        %v1370 = vpop.f32.mrb[0].mxu0
        %v1371 = vadd.f32 %v1306, %v1370
        %v1372 = vpop.f32.mrb[0].mxu0
        %1373 = vmatprep.mubr.bf16.mxu0 %v776
        %1374 = vmatmul.mubr.bf16.gmra.mrb[0].mxu0 %v775
        %v1375 = vpop.f32.mrb[0].mxu0
        %v1376 = vadd.f32 %v1311, %v1375
        %v1377 = vpop.f32.mrb[0].mxu0
        %v1378 = vpop.f32.mrb[0].mxu0
        %v1379 = vadd.f32 %v1314, %v1378
        %v1380 = vpop.f32.mrb[0].mxu0
        %1381 = vmatprep.mubr.bf16.mxu0 %v785
        %1382 = vmatmul.mubr.bf16.gmra.mrb[0].mxu0 %v784
        %v1383 = vpop.f32.mrb[0].mxu0
        %v1384 = vadd.f32 %v1319, %v1383
        %v1385 = vpop.f32.mrb[0].mxu0
        %v1386 = vpop.f32.mrb[0].mxu0
        %v1387 = vadd.f32 %v1322, %v1386
        %v1388 = vpop.f32.mrb[0].mxu0
        %1389 = vmatprep.mubr.bf16.mxu0 %v794
        %1390 = vmatmul.mubr.bf16.gmra.mrb[0].mxu0 %v793
        %v1391 = vpop.f32.mrb[0].mxu0
        %v1392 = vadd.f32 %v1327, %v1391
        %v1393 = vpop.f32.mrb[0].mxu0
        %v1394 = vpop.f32.mrb[0].mxu0
        %v1395 = vadd.f32 %v1330, %v1394
        %v1396 = vpop.f32.mrb[0].mxu0
        %1397 = vdwg.mxu0
        %1398 = vmatprep.subr.bf16.mxu0 0
        %1399 = vmatpush1.bf16.msra.mxu0 %v1156
        %1400 = vmatprep.subr.bf16.mxu0 0
        %1401 = vmatpush1.bf16.msra.mxu0 %v1157
        %1402 = vmatprep.subr.bf16.mxu0 0
        %1403 = vmatpush1.bf16.msra.mxu0 %v1158
        %1404 = vmatprep.subr.bf16.mxu0 0
        %1405 = vmatpush1.bf16.msra.mxu0 %v1159
        %1406 = vmatprep.subr.bf16.mxu0 0
        %1407 = vmatpush1.bf16.msra.mxu0 %v1160
        %1408 = vmatprep.subr.bf16.mxu0 0
        %1409 = vmatpush1.bf16.msra.mxu0 %v1161
        %1410 = vmatprep.subr.bf16.mxu0 0
        %1411 = vmatpush1.bf16.msra.mxu0 %v1162
        %1412 = vmatprep.subr.bf16.mxu0 0
        %1413 = vmatpush1.bf16.msra.mxu0 %v1163
        %1414 = vmatprep.subr.bf16.mxu0 0
        %1415 = vmatpush1.bf16.msra.mxu0 %v1164
        %1416 = vmatprep.subr.bf16.mxu0 0
        %1417 = vmatpush1.bf16.msra.mxu0 %v1165
        %1418 = vmatprep.subr.bf16.mxu0 0
        %1419 = vmatpush1.bf16.msra.mxu0 %v1166
        %1420 = vmatprep.subr.bf16.mxu0 0
        %1421 = vmatpush1.bf16.msra.mxu0 %v1167
        %1422 = vmatprep.subr.bf16.mxu0 0
        %1423 = vmatpush1.bf16.msra.mxu0 %v1168
        %1424 = vmatprep.subr.bf16.mxu0 0
        %1425 = vmatpush1.bf16.msra.mxu0 %v1169
        %1426 = vmatprep.subr.bf16.mxu0 0
        %1427 = vmatpush1.bf16.msra.mxu0 %v1170
        %1428 = vmatprep.subr.bf16.mxu0 0
        %1429 = vmatpush1.bf16.msra.mxu0 %v1171
        %1430 = vmatprep.mubr.bf16.mxu0 %v769
        %1431 = vmatmul.mubr.bf16.gmra.mrb[0].mxu0 %v768
        %v1432 = vpop.f32.mrb[0].mxu0
        %v1433 = vadd.f32 %v1368, %v1432
        %v1434 = vpop.f32.mrb[0].mxu0
        %v1435 = vpop.f32.mrb[0].mxu0
        %v1436 = vadd.f32 %v1371, %v1435
        %v1437 = vpop.f32.mrb[0].mxu0
        %1438 = vmatprep.mubr.bf16.mxu0 %v778
        %1439 = vmatmul.mubr.bf16.gmra.mrb[0].mxu0 %v777
        %v1440 = vpop.f32.mrb[0].mxu0
        %v1441 = vadd.f32 %v1376, %v1440
        %v1442 = vpop.f32.mrb[0].mxu0
        %v1443 = vpop.f32.mrb[0].mxu0
        %v1444 = vadd.f32 %v1379, %v1443
        %v1445 = vpop.f32.mrb[0].mxu0
        %1446 = vmatprep.mubr.bf16.mxu0 %v787
        %1447 = vmatmul.mubr.bf16.gmra.mrb[0].mxu0 %v786
        %v1448 = vpop.f32.mrb[0].mxu0
        %v1449 = vadd.f32 %v1384, %v1448
        %v1450 = vpop.f32.mrb[0].mxu0
        %v1451 = vpop.f32.mrb[0].mxu0
        %v1452 = vadd.f32 %v1387, %v1451
        %v1453 = vpop.f32.mrb[0].mxu0
        %1454 = vmatprep.mubr.bf16.mxu0 %v796
        %1455 = vmatmul.mubr.bf16.gmra.mrb[0].mxu0 %v795
        %v1456 = vpop.f32.mrb[0].mxu0
        %v1457 = vadd.f32 %v1392, %v1456
        %v1458 = vpop.f32.mrb[0].mxu0
        %v1459 = vpop.f32.mrb[0].mxu0
        %v1460 = vadd.f32 %v1395, %v1459
        %v1461 = vpop.f32.mrb[0].mxu0
        %1462 = vdwg.mxu0
        %1463 = vmatprep.subr.bf16.mxu0 0
        %1464 = vmatpush1.bf16.msra.mxu0 %v1172
        %1465 = vmatprep.subr.bf16.mxu0 0
        %1466 = vmatpush1.bf16.msra.mxu0 %v1173
        %1467 = vmatprep.subr.bf16.mxu0 0
        %1468 = vmatpush1.bf16.msra.mxu0 %v1174
        %1469 = vmatprep.subr.bf16.mxu0 0
        %1470 = vmatpush1.bf16.msra.mxu0 %v1175
        %1471 = vmatprep.subr.bf16.mxu0 0
        %1472 = vmatpush1.bf16.msra.mxu0 %v1176
        %1473 = vmatprep.subr.bf16.mxu0 0
        %1474 = vmatpush1.bf16.msra.mxu0 %v1177
        %1475 = vmatprep.subr.bf16.mxu0 0
        %1476 = vmatpush1.bf16.msra.mxu0 %v1178
        %1477 = vmatprep.subr.bf16.mxu0 0
        %1478 = vmatpush1.bf16.msra.mxu0 %v1179
        %1479 = vmatprep.subr.bf16.mxu0 0
        %1480 = vmatpush1.bf16.msra.mxu0 %v1180
        %1481 = vmatprep.subr.bf16.mxu0 0
        %1482 = vmatpush1.bf16.msra.mxu0 %v1181
        %1483 = vmatprep.subr.bf16.mxu0 0
        %1484 = vmatpush1.bf16.msra.mxu0 %v1182
        %1485 = vmatprep.subr.bf16.mxu0 0
        %1486 = vmatpush1.bf16.msra.mxu0 %v1183
        %1487 = vmatprep.subr.bf16.mxu0 0
        %1488 = vmatpush1.bf16.msra.mxu0 %v1184
        %1489 = vmatprep.subr.bf16.mxu0 0
        %1490 = vmatpush1.bf16.msra.mxu0 %v1185
        %1491 = vmatprep.subr.bf16.mxu0 0
        %1492 = vmatpush1.bf16.msra.mxu0 %v1186
        %1493 = vmatprep.subr.bf16.mxu0 0
        %1494 = vmatpush1.bf16.msra.mxu0 %v1187
        %1495 = vmatprep.mubr.bf16.mxu0 %v771
        %1496 = vmatmul.mubr.bf16.gmra.mrb[0].mxu0 %v770
        %v1497 = vpop.f32.mrb[0].mxu0
        %v1498 = vadd.f32 %v1433, %v1497
        %v1499 = vpop.f32.mrb[0].mxu0
        %v1500 = vpop.f32.mrb[0].mxu0
        %v1501 = vadd.f32 %v1436, %v1500
        %v1502 = vpop.f32.mrb[0].mxu0
        %1503 = vmatprep.mubr.bf16.mxu0 %v780
        %1504 = vmatmul.mubr.bf16.gmra.mrb[0].mxu0 %v779
        %v1505 = vpop.f32.mrb[0].mxu0
        %v1506 = vadd.f32 %v1441, %v1505
        %v1507 = vpop.f32.mrb[0].mxu0
        %v1508 = vpop.f32.mrb[0].mxu0
        %v1509 = vadd.f32 %v1444, %v1508
        %v1510 = vpop.f32.mrb[0].mxu0
        %1511 = vmatprep.mubr.bf16.mxu0 %v789
        %1512 = vmatmul.mubr.bf16.gmra.mrb[0].mxu0 %v788
        %v1513 = vpop.f32.mrb[0].mxu0
        %v1514 = vadd.f32 %v1449, %v1513
        %v1515 = vpop.f32.mrb[0].mxu0
        %v1516 = vpop.f32.mrb[0].mxu0
        %v1517 = vadd.f32 %v1452, %v1516
        %v1518 = vpop.f32.mrb[0].mxu0
        %1519 = vmatprep.mubr.bf16.mxu0 %v798
        %1520 = vmatmul.mubr.bf16.gmra.mrb[0].mxu0 %v797
        %v1521 = vpop.f32.mrb[0].mxu0
        %v1522 = vadd.f32 %v1457, %v1521
        %v1523 = vpop.f32.mrb[0].mxu0
        %v1524 = vpop.f32.mrb[0].mxu0
        %v1525 = vadd.f32 %v1460, %v1524
        %v1526 = vpop.f32.mrb[0].mxu0
        %1527 = vdwg.mxu0
        %1528 = vmatprep.subr.bf16.mxu0 0
        %1529 = vmatpush1.bf16.msra.mxu0 %v1188
        %1530 = vmatprep.subr.bf16.mxu0 0
        %1531 = vmatpush1.bf16.msra.mxu0 %v1189
        %1532 = vmatprep.subr.bf16.mxu0 0
        %1533 = vmatpush1.bf16.msra.mxu0 %v1190
        %1534 = vmatprep.subr.bf16.mxu0 0
        %1535 = vmatpush1.bf16.msra.mxu0 %v1191
        %1536 = vmatprep.subr.bf16.mxu0 0
        %1537 = vmatpush1.bf16.msra.mxu0 %v1192
        %1538 = vmatprep.subr.bf16.mxu0 0
        %1539 = vmatpush1.bf16.msra.mxu0 %v1193
        %1540 = vmatprep.subr.bf16.mxu0 0
        %1541 = vmatpush1.bf16.msra.mxu0 %v1194
        %1542 = vmatprep.subr.bf16.mxu0 0
        %1543 = vmatpush1.bf16.msra.mxu0 %v1195
        %1544 = vmatprep.subr.bf16.mxu0 0
        %1545 = vmatpush1.bf16.msra.mxu0 0
        %1546 = vmatprep.subr.bf16.mxu0 0
        %1547 = vmatpush1.bf16.msra.mxu0 0
        %1548 = vmatprep.subr.bf16.mxu0 0
        %1549 = vmatpush1.bf16.msra.mxu0 0
        %1550 = vmatprep.subr.bf16.mxu0 0
        %1551 = vmatpush1.bf16.msra.mxu0 0
        %1552 = vmatprep.subr.bf16.mxu0 0
        %1553 = vmatpush1.bf16.msra.mxu0 0
        %1554 = vmatprep.subr.bf16.mxu0 0
        %1555 = vmatpush1.bf16.msra.mxu0 0
        %1556 = vmatprep.subr.bf16.mxu0 0
        %1557 = vmatpush1.bf16.msra.mxu0 0
        %1558 = vmatprep.subr.bf16.mxu0 0
        %1559 = vmatpush1.bf16.msra.mxu0 0
        %1560 = vmatprep.mubr.bf16.mxu0 0
        %1561 = vmatmul.mubr.bf16.gmra.mrb[0].mxu0 %v772
        %v1562 = vpop.f32.mrb[0].mxu0
        %v1563 = vadd.f32 %v1498, %v1562
        %v1564 = vpop.f32.mrb[0].mxu0
        %v1565 = vpop.f32.mrb[0].mxu0
        %v1566 = vadd.f32 %v1501, %v1565
        %v1567 = vpop.f32.mrb[0].mxu0
        %1568 = vmatprep.mubr.bf16.mxu0 0
        %1569 = vmatmul.mubr.bf16.gmra.mrb[0].mxu0 %v781
        %v1570 = vpop.f32.mrb[0].mxu0
        %v1571 = vadd.f32 %v1506, %v1570
        %v1572 = vpop.f32.mrb[0].mxu0
        %v1573 = vpop.f32.mrb[0].mxu0
        %v1574 = vadd.f32 %v1509, %v1573
        %v1575 = vpop.f32.mrb[0].mxu0
        %1576 = vmatprep.mubr.bf16.mxu0 0
        %1577 = vmatmul.mubr.bf16.gmra.mrb[0].mxu0 %v790
        %v1578 = vpop.f32.mrb[0].mxu0
        %v1579 = vadd.f32 %v1514, %v1578
        %v1580 = vpop.f32.mrb[0].mxu0
        %v1581 = vpop.f32.mrb[0].mxu0
        %v1582 = vadd.f32 %v1517, %v1581
        %v1583 = vpop.f32.mrb[0].mxu0
        %1584 = vmatprep.mubr.bf16.mxu0 0
        %1585 = vmatmul.mubr.bf16.gmra.mrb[0].mxu0 %v799
        %v1586 = vpop.f32.mrb[0].mxu0
        %v1587 = vadd.f32 %v1522, %v1586
        %v1588 = vpop.f32.mrb[0].mxu0
        %v1589 = vpop.f32.mrb[0].mxu0
        %v1590 = vadd.f32 %v1525, %v1589
        %v1591 = vpop.f32.mrb[0].mxu0
        %1592 = vdwg.mxu0
        %vm1593 = vcmp.gt.f32.partialorder %v1563, 0.0
        %vm1594 = vcmp.gt.f32.partialorder %v1566, 0.0
        %vm1595 = vcmp.gt.f32.partialorder %v1571, 0.0
        %vm1596 = vcmp.gt.f32.partialorder %v1574, 0.0
        %vm1597 = vcmp.gt.f32.partialorder %v1579, 0.0
        %vm1598 = vcmp.gt.f32.partialorder %v1582, 0.0
        %vm1599 = vcmp.gt.f32.partialorder %v1587, 0.0
        %vm1600 = vcmp.gt.f32.partialorder %v1590, 0.0
        %v1601 = vmin.f32 %v1563, 0.0
        %v1602 = vmin.f32 %v1566, 0.0
        %v1603 = vmin.f32 %v1571, 0.0
        %v1604 = vmin.f32 %v1574, 0.0
        %v1605 = vmin.f32 %v1579, 0.0
        %v1606 = vmin.f32 %v1582, 0.0
        %v1607 = vmin.f32 %v1587, 0.0
        %v1608 = vmin.f32 %v1590, 0.0
        %v1609 = vmul.f32 %v1601, 1.442695
        %v1610 = vpow.pop %v1609
        %v1611 = vmul.f32 %v1602, 1.442695
        %v1612 = vpow.pop %v1611
        %v1613 = vmul.f32 %v1603, 1.442695
        %v1614 = vpow.pop %v1613
        %v1615 = vmul.f32 %v1604, 1.442695
        %v1616 = vpow.pop %v1615
        %v1617 = vmul.f32 %v1605, 1.442695
        %v1618 = vpow.pop %v1617
        %v1619 = vmul.f32 %v1606, 1.442695
        %v1620 = vpow.pop %v1619
        %v1621 = vmul.f32 %v1607, 1.442695
        %v1622 = vpow.pop %v1621
        %v1623 = vmul.f32 %v1608, 1.442695
        %v1624 = vpow.pop %v1623
        %v1625 = vsub.f32 %v1610, 1.0
        %v1626 = vsub.f32 %v1612, 1.0
        %v1627 = vsub.f32 %v1614, 1.0
        %v1628 = vsub.f32 %v1616, 1.0
        %v1629 = vsub.f32 %v1618, 1.0
        %v1630 = vsub.f32 %v1620, 1.0
        %v1631 = vsub.f32 %v1622, 1.0
        %v1632 = vsub.f32 %v1624, 1.0
        %v1633 = vsel %vm1593, %v1563, %v1625
        %v1634 = vsel %vm1594, %v1566, %v1626
        %v1635 = vsel %vm1595, %v1571, %v1627
        %v1636 = vsel %vm1596, %v1574, %v1628
        %v1637 = vsel %vm1597, %v1579, %v1629
        %v1638 = vsel %vm1598, %v1582, %v1630
        %v1639 = vsel %vm1599, %v1587, %v1631
        %v1640 = vsel %vm1600, %v1590, %v1632
        %1641 = vst [vmem:[#allocation2] sm:$0x1f] 0.0
        %1642 = vst [vmem:[#allocation2 + $0x8] sm:$0x1f] 0.0
        %1643 = vst [vmem:[#allocation2 + $0x10] sm:$0x1f] 0.0
        %1644 = vst [vmem:[#allocation2 + $0x18] sm:$0x1f] 0.0
        %1645 = vst [vmem:[#allocation2 + $0x20] sm:$0x1f] 0.0
        %1646 = vst [vmem:[#allocation3] sm:$0x1f] 0.0
        %1647 = vst [vmem:[#allocation3 + $0x8] sm:$0x1f] 0.0
        %1648 = vst [vmem:[#allocation3 + $0x10] sm:$0x1f] 0.0
        %1649 = vst [vmem:[#allocation3 + $0x18] sm:$0x1f] 0.0
        %1650 = vst [vmem:[#allocation3 + $0x20] sm:$0x1f] 0.0
        %1651 = vst [vmem:[#allocation4] sm:$0x1f] 0.0
        %1652 = vst [vmem:[#allocation4 + $0x8] sm:$0x1f] 0.0
        %1653 = vst [vmem:[#allocation4 + $0x10] sm:$0x1f] 0.0
        %1654 = vst [vmem:[#allocation4 + $0x18] sm:$0x1f] 0.0
        %1655 = vst [vmem:[#allocation4 + $0x20] sm:$0x1f] 0.0
        %1656 = vst [vmem:[#allocation5] sm:$0x1f] 0.0
        %1657 = vst [vmem:[#allocation5 + $0x8] sm:$0x1f] 0.0
        %1658 = vst [vmem:[#allocation5 + $0x10] sm:$0x1f] 0.0
        %1659 = vst [vmem:[#allocation5 + $0x18] sm:$0x1f] 0.0
        %1660 = vst [vmem:[#allocation5 + $0x20] sm:$0x1f] 0.0
        %v1663 = vcombine.high %v1633, %v1633
        %v1664 = vcombine.high %v1634, %v1634
        %1667 = vst [vmem:[#allocation5] sm:$0xf] %v1633
        %1668 = vst [vmem:[#allocation5 + $0x8] sm:$0xf] %v1663
        %1669 = vst [vmem:[#allocation5 + $0x10] sm:$0xf] %v1634
        %1670 = vst [vmem:[#allocation5 + $0x18] sm:$0xf] %v1664
        %v1673 = vcombine.high %v1635, %v1635
        %v1674 = vcombine.high %v1636, %v1636
        %1677 = vst [vmem:[#allocation4 + $0x1] sm:$0xf] %v1635
        %1678 = vst [vmem:[#allocation4 + $0x9] sm:$0xf] %v1673
        %1679 = vst [vmem:[#allocation4 + $0x11] sm:$0xf] %v1636
        %1680 = vst [vmem:[#allocation4 + $0x19] sm:$0xf] %v1674
        %v1683 = vcombine.high %v1637, %v1637
        %v1684 = vcombine.high %v1638, %v1638
        %s1687 = scalar_lea.vmem [#allocation3], 8
        %1688 = vst [vmem:[%s1687] sm:$0xf] %v1637
        %1689 = vst [vmem:[%s1687 + $0x8] sm:$0xf] %v1683
        %1690 = vst [vmem:[%s1687 + $0x10] sm:$0xf] %v1638
        %1691 = vst [vmem:[%s1687 + $0x18] sm:$0xf] %v1684
        %v1694 = vcombine.high %v1639, %v1639
        %v1695 = vcombine.high %v1640, %v1640
        %s1698 = scalar_lea.vmem [#allocation2], 8
        %1699 = vst [vmem:[%s1698 + $0x1] sm:$0xf] %v1639
        %1700 = vst [vmem:[%s1698 + $0x9] sm:$0xf] %v1694
        %1701 = vst [vmem:[%s1698 + $0x11] sm:$0xf] %v1640
        %1702 = vst [vmem:[%s1698 + $0x19] sm:$0xf] %v1695
        %v1703 = vld [vmem:[#allocation2] sm:$0xf]
        %v1704 = vld [vmem:[#allocation2 + $0x8] sm:$0xf]
        %v1705 = vld [vmem:[#allocation2 + $0x10] sm:$0xf]
        %v1706 = vld [vmem:[#allocation2 + $0x18] sm:$0xf]
        %v1711 = vcombine.low %v1703, %v1704
        %v1712 = vcombine.low %v1705, %v1706
        %v1715 = vpack.c.bf16 %v1712, %v1711
        %1716 = vst [vmem:[#allocation6] sm:$0xff] %v1715
        %v1717 = vld [vmem:[#allocation3] sm:$0xf]
        %v1718 = vld [vmem:[#allocation3 + $0x8] sm:$0xf]
        %v1719 = vld [vmem:[#allocation3 + $0x10] sm:$0xf]
        %v1720 = vld [vmem:[#allocation3 + $0x18] sm:$0xf]
        %v1725 = vcombine.low %v1717, %v1718
        %v1726 = vcombine.low %v1719, %v1720
        %v1729 = vpack.c.bf16 %v1726, %v1725
        %1730 = vst [vmem:[#allocation6 + $0x8] sm:$0xff] %v1729
        %v1731 = vld [vmem:[#allocation2 + $0x1] sm:$0xf]
        %v1732 = vld [vmem:[#allocation2 + $0x9] sm:$0xf]
        %v1733 = vld [vmem:[#allocation2 + $0x11] sm:$0xf]
        %v1734 = vld [vmem:[#allocation2 + $0x19] sm:$0xf]
        %v1739 = vcombine.low %v1731, %v1732
        %v1740 = vcombine.low %v1733, %v1734
        %v1743 = vpack.c.bf16 %v1740, %v1739
        %1744 = vst [vmem:[#allocation6 + $0x10] sm:$0xff] %v1743
        %v1745 = vld [vmem:[#allocation4] sm:$0xf]
        %v1746 = vld [vmem:[#allocation4 + $0x8] sm:$0xf]
        %v1747 = vld [vmem:[#allocation4 + $0x10] sm:$0xf]
        %v1748 = vld [vmem:[#allocation4 + $0x18] sm:$0xf]
        %v1753 = vcombine.low %v1745, %v1746
        %v1754 = vcombine.low %v1747, %v1748
        %v1757 = vpack.c.bf16 %v1754, %v1753
        %1758 = vst [vmem:[#allocation6 + $0x18] sm:$0xff] %v1757
        %v1759 = vld [vmem:[#allocation5] sm:$0xf]
        %v1760 = vld [vmem:[#allocation5 + $0x8] sm:$0xf]
        %v1761 = vld [vmem:[#allocation5 + $0x10] sm:$0xf]
        %v1762 = vld [vmem:[#allocation5 + $0x18] sm:$0xf]
        %v1767 = vcombine.low %v1759, %v1760
        %v1768 = vcombine.low %v1761, %v1762
        %v1771 = vpack.c.bf16 %v1768, %v1767
        %1772 = vst [vmem:[#allocation6 + $0x20] sm:$0xff] %v1771
        %v1773 = vld [vmem:[#allocation4 + $0x1] sm:$0xf]
        %v1774 = vld [vmem:[#allocation4 + $0x9] sm:$0xf]
        %v1775 = vld [vmem:[#allocation4 + $0x11] sm:$0xf]
        %v1776 = vld [vmem:[#allocation4 + $0x19] sm:$0xf]
        %v1781 = vcombine.low %v1773, %v1774
        %v1782 = vcombine.low %v1775, %v1776
        %v1785 = vpack.c.bf16 %v1782, %v1781
        %1786 = vst [vmem:[#allocation6 + $0x28] sm:$0xff] %v1785
        %v1787 = vld [vmem:[%s1698] sm:$0xf]
        %v1788 = vld [vmem:[%s1698 + $0x8] sm:$0xf]
        %v1789 = vld [vmem:[%s1698 + $0x10] sm:$0xf]
        %v1790 = vld [vmem:[%s1698 + $0x18] sm:$0xf]
        %v1795 = vcombine.low %v1787, %v1788
        %v1796 = vcombine.low %v1789, %v1790
        %v1799 = vpack.c.bf16 %v1796, %v1795
        %1800 = vst [vmem:[#allocation6 + $0x30] sm:$0xff] %v1799
        %v1801 = vld [vmem:[%s1687] sm:$0xf]
        %v1802 = vld [vmem:[%s1687 + $0x8] sm:$0xf]
        %v1803 = vld [vmem:[%s1687 + $0x10] sm:$0xf]
        %v1804 = vld [vmem:[%s1687 + $0x18] sm:$0xf]
        %v1809 = vcombine.low %v1801, %v1802
        %v1810 = vcombine.low %v1803, %v1804
        %v1813 = vpack.c.bf16 %v1810, %v1809
        %1814 = vst [vmem:[#allocation6 + $0x38] sm:$0xff] %v1813
        %v1815 = vld [vmem:[%s1698 + $0x1] sm:$0xf]
        %v1816 = vld [vmem:[%s1698 + $0x9] sm:$0xf]
        %v1817 = vld [vmem:[%s1698 + $0x11] sm:$0xf]
        %v1818 = vld [vmem:[%s1698 + $0x19] sm:$0xf]
        %v1823 = vcombine.low %v1815, %v1816
        %v1824 = vcombine.low %v1817, %v1818
        %v1827 = vpack.c.bf16 %v1824, %v1823
        %1828 = vst [vmem:[#allocation6 + $0x40] sm:$0xff] %v1827
        %v1829 = vld [vmem:[#allocation6] sm:$0xff]
        %v1830 = vld [vmem:[#allocation6 + $0x8] sm:$0xff]
        %v1831 = vld [vmem:[#allocation6 + $0x10] sm:$0xff]
        %v1832 = vld [vmem:[#allocation6 + $0x18] sm:$0xff]
        %v1833 = vld [vmem:[#allocation6 + $0x20] sm:$0xff]
        %v1834 = vld [vmem:[#allocation6 + $0x28] sm:$0xff]
        %v1835 = vld [vmem:[#allocation6 + $0x30] sm:$0xff]
        %v1836 = vld [vmem:[#allocation6 + $0x38] sm:$0xff]
        %v1837 = vld [vmem:[#allocation6 + $0x40] sm:$0xff]
        %v1838 = vld [vmem:[%s3] sm:$0xf]
        %v1839 = vld [vmem:[%s3 + $0x4] sm:$0xf]
        %v1840 = vld [vmem:[%s3 + $0x8] sm:$0xf]
        %v1841 = vld [vmem:[%s3 + $0xc] sm:$0xf]
        %v1842 = vld [vmem:[%s3 + $0x10] sm:$0xf]
        %v1843 = vld [vmem:[%s3 + $0x14] sm:$0xf]
        %v1844 = vld [vmem:[%s3 + $0x18] sm:$0xf]
        %v1845 = vld [vmem:[%s3 + $0x1c] sm:$0xf]
        %v1846 = vld [vmem:[%s3 + $0x20] sm:$0xf]
        %v1847 = vld [vmem:[%s3 + $0x24] sm:$0xf]
        %v1848 = vld [vmem:[%s3 + $0x28] sm:$0xf]
        %v1849 = vld [vmem:[%s3 + $0x2c] sm:$0xf]
        %v1850 = vld [vmem:[%s3 + $0x30] sm:$0xf]
        %v1851 = vld [vmem:[%s3 + $0x34] sm:$0xf]
        %v1852 = vld [vmem:[%s3 + $0x38] sm:$0xf]
        %v1853 = vld [vmem:[%s3 + $0x3c] sm:$0xf]
        %v1854 = vld [vmem:[%s3 + $0x40] sm:$0xf]
        %v1855 = vld [vmem:[%s3 + $0x44] sm:$0xf]
        %v1856 = vld [vmem:[%s3 + $0x48] sm:$0xf]
        %v1857 = vld [vmem:[%s3 + $0x4c] sm:$0xf]
        %v1858 = vld [vmem:[%s3 + $0x50] sm:$0xf]
        %v1859 = vld [vmem:[%s3 + $0x54] sm:$0xf]
        %v1860 = vld [vmem:[%s3 + $0x58] sm:$0xf]
        %v1861 = vld [vmem:[%s3 + $0x5c] sm:$0xf]
        %v1862 = vld [vmem:[%s3 + $0x60] sm:$0xf]
        %v1863 = vld [vmem:[%s3 + $0x64] sm:$0xf]
        %v1864 = vld [vmem:[%s3 + $0x68] sm:$0xf]
        %v1865 = vld [vmem:[%s3 + $0x6c] sm:$0xf]
        %v1866 = vld [vmem:[%s3 + $0x70] sm:$0xf]
        %v1867 = vld [vmem:[%s3 + $0x74] sm:$0xf]
        %v1868 = vld [vmem:[%s3 + $0x78] sm:$0xf]
        %v1869 = vld [vmem:[%s3 + $0x7c] sm:$0xf]
        %v1870 = vld [vmem:[%s3 + $0x80] sm:$0xf]
        %v1871 = vld [vmem:[%s3 + $0x84] sm:$0xf]
        %v1872 = vld [vmem:[%s3 + $0x88] sm:$0xf]
        %v1873 = vld [vmem:[%s3 + $0x8c] sm:$0xf]
        %v1874 = vld [vmem:[%s3 + $0x90] sm:$0xf]
        %v1875 = vld [vmem:[%s3 + $0x94] sm:$0xf]
        %v1876 = vld [vmem:[%s3 + $0x98] sm:$0xf]
        %v1877 = vld [vmem:[%s3 + $0x9c] sm:$0xf]
        %v1878 = vld [vmem:[%s3 + $0xa0] sm:$0xf]
        %v1879 = vld [vmem:[%s3 + $0xa4] sm:$0xf]
        %v1880 = vld [vmem:[%s3 + $0xa8] sm:$0xf]
        %v1881 = vld [vmem:[%s3 + $0xac] sm:$0xf]
        %v1882 = vld [vmem:[%s3 + $0xb0] sm:$0xf]
        %v1883 = vld [vmem:[%s3 + $0xb4] sm:$0xf]
        %v1884 = vld [vmem:[%s3 + $0xb8] sm:$0xf]
        %v1885 = vld [vmem:[%s3 + $0xbc] sm:$0xf]
        %v1886 = vld [vmem:[%s3 + $0xc0] sm:$0xf]
        %v1887 = vld [vmem:[%s3 + $0xc4] sm:$0xf]
        %v1888 = vld [vmem:[%s3 + $0xc8] sm:$0xf]
        %v1889 = vld [vmem:[%s3 + $0xcc] sm:$0xf]
        %v1890 = vld [vmem:[%s3 + $0xd0] sm:$0xf]
        %v1891 = vld [vmem:[%s3 + $0xd4] sm:$0xf]
        %v1892 = vld [vmem:[%s3 + $0xd8] sm:$0xf]
        %v1893 = vld [vmem:[%s3 + $0xdc] sm:$0xf]
        %v1894 = vld [vmem:[%s3 + $0xe0] sm:$0xf]
        %v1895 = vld [vmem:[%s3 + $0xe4] sm:$0xf]
        %v1896 = vld [vmem:[%s3 + $0xe8] sm:$0xf]
        %v1897 = vld [vmem:[%s3 + $0xec] sm:$0xf]
        %v1898 = vld [vmem:[%s3 + $0xf0] sm:$0xf]
        %v1899 = vld [vmem:[%s3 + $0xf4] sm:$0xf]
        %v1900 = vld [vmem:[%s3 + $0xf8] sm:$0xf]
        %v1901 = vld [vmem:[%s3 + $0xfc] sm:$0xf]
        %v1902 = vld [vmem:[%s3 + $0x100] sm:$0xf]
        %v1903 = vld [vmem:[%s3 + $0x104] sm:$0xf]
        %v1904 = vld [vmem:[%s3 + $0x108] sm:$0xf]
        %v1905 = vld [vmem:[%s3 + $0x10c] sm:$0xf]
        %v1906 = vld [vmem:[%s3 + $0x110] sm:$0xf]
        %v1907 = vld [vmem:[%s3 + $0x114] sm:$0xf]
        %v1908 = vld [vmem:[%s3 + $0x118] sm:$0xf]
        %v1909 = vld [vmem:[%s3 + $0x11c] sm:$0xf]
        %v1910 = vld [vmem:[%s3 + $0x120] sm:$0xf]
        %v1911 = vld [vmem:[%s3 + $0x124] sm:$0xf]
        %v1912 = vld [vmem:[%s3 + $0x128] sm:$0xf]
        %v1913 = vld [vmem:[%s3 + $0x12c] sm:$0xf]
        %v1914 = vld [vmem:[%s3 + $0x130] sm:$0xf]
        %v1915 = vld [vmem:[%s3 + $0x134] sm:$0xf]
        %v1916 = vld [vmem:[%s3 + $0x138] sm:$0xf]
        %v1917 = vld [vmem:[%s3 + $0x13c] sm:$0xf]
        %v1918 = vld [vmem:[%s3 + $0x140] sm:$0xf]
        %v1919 = vld [vmem:[%s3 + $0x144] sm:$0xf]
        %v1920 = vld [vmem:[%s3 + $0x148] sm:$0xf]
        %v1921 = vld [vmem:[%s3 + $0x14c] sm:$0xf]
        %v1922 = vld [vmem:[%s3 + $0x150] sm:$0xf]
        %v1923 = vld [vmem:[%s3 + $0x154] sm:$0xf]
        %v1924 = vld [vmem:[%s3 + $0x158] sm:$0xf]
        %v1925 = vld [vmem:[%s3 + $0x15c] sm:$0xf]
        %v1926 = vld [vmem:[%s3 + $0x160] sm:$0xf]
        %v1927 = vld [vmem:[%s3 + $0x164] sm:$0xf]
        %v1928 = vld [vmem:[%s3 + $0x168] sm:$0xf]
        %v1929 = vld [vmem:[%s3 + $0x16c] sm:$0xf]
        %v1930 = vld [vmem:[%s3 + $0x170] sm:$0xf]
        %v1931 = vld [vmem:[%s3 + $0x174] sm:$0xf]
        %v1932 = vld [vmem:[%s3 + $0x178] sm:$0xf]
        %v1933 = vld [vmem:[%s3 + $0x17c] sm:$0xf]
        %v1934 = vld [vmem:[%s3 + $0x180] sm:$0xf]
        %v1935 = vld [vmem:[%s3 + $0x184] sm:$0xf]
        %v1936 = vld [vmem:[%s3 + $0x188] sm:$0xf]
        %v1937 = vld [vmem:[%s3 + $0x18c] sm:$0xf]
        %v1938 = vld [vmem:[%s3 + $0x190] sm:$0xf]
        %v1939 = vld [vmem:[%s3 + $0x194] sm:$0xf]
        %v1940 = vld [vmem:[%s3 + $0x198] sm:$0xf]
        %v1941 = vld [vmem:[%s3 + $0x19c] sm:$0xf]
        %v1942 = vld [vmem:[%s3 + $0x1a0] sm:$0xf]
        %v1943 = vld [vmem:[%s3 + $0x1a4] sm:$0xf]
        %v1944 = vld [vmem:[%s3 + $0x1a8] sm:$0xf]
        %v1945 = vld [vmem:[%s3 + $0x1ac] sm:$0xf]
        %v1946 = vld [vmem:[%s3 + $0x1b0] sm:$0xf]
        %v1947 = vld [vmem:[%s3 + $0x1b4] sm:$0xf]
        %v1948 = vld [vmem:[%s3 + $0x1b8] sm:$0xf]
        %v1949 = vld [vmem:[%s3 + $0x1bc] sm:$0xf]
        %v1950 = vld [vmem:[%s3 + $0x1c0] sm:$0xf]
        %v1951 = vld [vmem:[%s3 + $0x1c4] sm:$0xf]
        %v1952 = vld [vmem:[%s3 + $0x1c8] sm:$0xf]
        %v1953 = vld [vmem:[%s3 + $0x1cc] sm:$0xf]
        %v1954 = vld [vmem:[%s3 + $0x1d0] sm:$0xf]
        %v1955 = vld [vmem:[%s3 + $0x1d4] sm:$0xf]
        %v1956 = vld [vmem:[%s3 + $0x1d8] sm:$0xf]
        %v1957 = vld [vmem:[%s3 + $0x1dc] sm:$0xf]
        %v1958 = vld [vmem:[%s3 + $0x1e0] sm:$0xf]
        %v1959 = vld [vmem:[%s3 + $0x1e4] sm:$0xf]
        %v1960 = vld [vmem:[%s3 + $0x1e8] sm:$0xf]
        %v1961 = vld [vmem:[%s3 + $0x1ec] sm:$0xf]
        %v1962 = vld [vmem:[%s3 + $0x1f0] sm:$0xf]
        %v1963 = vld [vmem:[%s3 + $0x1f4] sm:$0xf]
        %v1964 = vld [vmem:[%s3 + $0x1f8] sm:$0xf]
        %v1965 = vld [vmem:[%s3 + $0x1fc] sm:$0xf]
        %v1966 = vld [vmem:[%s3 + $0x200] sm:$0xf]
        %v1967 = vld [vmem:[%s3 + $0x204] sm:$0xf]
        %v1968 = vld [vmem:[%s3 + $0x208] sm:$0xf]
        %v1969 = vld [vmem:[%s3 + $0x20c] sm:$0xf]
        %v1970 = vld [vmem:[%s3 + $0x210] sm:$0xf]
        %v1971 = vld [vmem:[%s3 + $0x214] sm:$0xf]
        %v1972 = vld [vmem:[%s3 + $0x218] sm:$0xf]
        %v1973 = vld [vmem:[%s3 + $0x21c] sm:$0xf]
        %v1974 = vld [vmem:[%s3 + $0x220] sm:$0xf]
        %v1975 = vld [vmem:[%s3 + $0x224] sm:$0xf]
        %v1976 = vld [vmem:[%s3 + $0x228] sm:$0xf]
        %v1977 = vld [vmem:[%s3 + $0x22c] sm:$0xf]
        %v1978 = vld [vmem:[%s3 + $0x230] sm:$0xf]
        %v1979 = vld [vmem:[%s3 + $0x234] sm:$0xf]
        %v1980 = vld [vmem:[%s3 + $0x238] sm:$0xf]
        %v1981 = vld [vmem:[%s3 + $0x23c] sm:$0xf]
        %v1982 = vld [vmem:[%s4] sm:$0x1]
        %v1984 = vlaneseq
        %v1985 = vshrl.u32 %v1984, 7
        %v1986 = vsub.s32 0, %v1985
        %v1987 = vrot.slane %v1982, %v1986
        %v2133 = vunpack.c.l.b16 %v1838
        %v2134 = vunpack.c.l.b16 %v1839
        %v2135 = vunpack.c.l.b16 %v1840
        %v2136 = vunpack.c.l.b16 %v1841
        %v2137 = vunpack.c.l.b16 %v1842
        %v2138 = vunpack.c.l.b16 %v1843
        %v2139 = vunpack.c.l.b16 %v1844
        %v2140 = vunpack.c.l.b16 %v1845
        %v2141 = vunpack.c.l.b16 %v1846
        %v2142 = vunpack.c.l.b16 %v1847
        %v2143 = vunpack.c.l.b16 %v1848
        %v2144 = vunpack.c.l.b16 %v1849
        %v2145 = vunpack.c.l.b16 %v1850
        %v2146 = vunpack.c.l.b16 %v1851
        %v2147 = vunpack.c.l.b16 %v1852
        %v2148 = vunpack.c.l.b16 %v1853
        %v2149 = vunpack.c.l.b16 %v1854
        %v2150 = vunpack.c.l.b16 %v1855
        %v2151 = vunpack.c.l.b16 %v1856
        %v2152 = vunpack.c.l.b16 %v1857
        %v2153 = vunpack.c.l.b16 %v1858
        %v2154 = vunpack.c.l.b16 %v1859
        %v2155 = vunpack.c.l.b16 %v1860
        %v2156 = vunpack.c.l.b16 %v1861
        %v2157 = vunpack.c.l.b16 %v1862
        %v2158 = vunpack.c.l.b16 %v1863
        %v2159 = vunpack.c.l.b16 %v1864
        %v2160 = vunpack.c.l.b16 %v1865
        %v2161 = vunpack.c.l.b16 %v1866
        %v2162 = vunpack.c.l.b16 %v1867
        %v2163 = vunpack.c.l.b16 %v1868
        %v2164 = vunpack.c.l.b16 %v1869
        %v2165 = vunpack.c.l.b16 %v1870
        %v2166 = vunpack.c.l.b16 %v1871
        %v2167 = vunpack.c.l.b16 %v1872
        %v2168 = vunpack.c.l.b16 %v1873
        %v2169 = vunpack.c.l.b16 %v1874
        %v2170 = vunpack.c.l.b16 %v1875
        %v2171 = vunpack.c.l.b16 %v1876
        %v2172 = vunpack.c.l.b16 %v1877
        %v2173 = vunpack.c.l.b16 %v1878
        %v2174 = vunpack.c.l.b16 %v1879
        %v2175 = vunpack.c.l.b16 %v1880
        %v2176 = vunpack.c.l.b16 %v1881
        %v2177 = vunpack.c.l.b16 %v1882
        %v2178 = vunpack.c.l.b16 %v1883
        %v2179 = vunpack.c.l.b16 %v1884
        %v2180 = vunpack.c.l.b16 %v1885
        %v2181 = vunpack.c.l.b16 %v1886
        %v2182 = vunpack.c.l.b16 %v1887
        %v2183 = vunpack.c.l.b16 %v1888
        %v2184 = vunpack.c.l.b16 %v1889
        %v2185 = vunpack.c.l.b16 %v1890
        %v2186 = vunpack.c.l.b16 %v1891
        %v2187 = vunpack.c.l.b16 %v1892
        %v2188 = vunpack.c.l.b16 %v1893
        %v2189 = vunpack.c.l.b16 %v1894
        %v2190 = vunpack.c.l.b16 %v1895
        %v2191 = vunpack.c.l.b16 %v1896
        %v2192 = vunpack.c.l.b16 %v1897
        %v2193 = vunpack.c.l.b16 %v1898
        %v2194 = vunpack.c.l.b16 %v1899
        %v2195 = vunpack.c.l.b16 %v1900
        %v2196 = vunpack.c.l.b16 %v1901
        %v2197 = vunpack.c.l.b16 %v1902
        %v2198 = vunpack.c.l.b16 %v1903
        %v2199 = vunpack.c.l.b16 %v1904
        %v2200 = vunpack.c.l.b16 %v1905
        %v2201 = vunpack.c.l.b16 %v1906
        %v2202 = vunpack.c.l.b16 %v1907
        %v2203 = vunpack.c.l.b16 %v1908
        %v2204 = vunpack.c.l.b16 %v1909
        %v2205 = vunpack.c.l.b16 %v1910
        %v2206 = vunpack.c.l.b16 %v1911
        %v2207 = vunpack.c.l.b16 %v1912
        %v2208 = vunpack.c.l.b16 %v1913
        %v2209 = vunpack.c.l.b16 %v1914
        %v2210 = vunpack.c.l.b16 %v1915
        %v2211 = vunpack.c.l.b16 %v1916
        %v2212 = vunpack.c.l.b16 %v1917
        %v2213 = vunpack.c.l.b16 %v1918
        %v2214 = vunpack.c.l.b16 %v1919
        %v2215 = vunpack.c.l.b16 %v1920
        %v2216 = vunpack.c.l.b16 %v1921
        %v2217 = vunpack.c.l.b16 %v1922
        %v2218 = vunpack.c.l.b16 %v1923
        %v2219 = vunpack.c.l.b16 %v1924
        %v2220 = vunpack.c.l.b16 %v1925
        %v2221 = vunpack.c.l.b16 %v1926
        %v2222 = vunpack.c.l.b16 %v1927
        %v2223 = vunpack.c.l.b16 %v1928
        %v2224 = vunpack.c.l.b16 %v1929
        %v2225 = vunpack.c.l.b16 %v1930
        %v2226 = vunpack.c.l.b16 %v1931
        %v2227 = vunpack.c.l.b16 %v1932
        %v2228 = vunpack.c.l.b16 %v1933
        %v2229 = vunpack.c.l.b16 %v1934
        %v2230 = vunpack.c.l.b16 %v1935
        %v2231 = vunpack.c.l.b16 %v1936
        %v2232 = vunpack.c.l.b16 %v1937
        %v2233 = vunpack.c.l.b16 %v1938
        %v2234 = vunpack.c.l.b16 %v1939
        %v2235 = vunpack.c.l.b16 %v1940
        %v2236 = vunpack.c.l.b16 %v1941
        %v2237 = vunpack.c.l.b16 %v1942
        %v2238 = vunpack.c.l.b16 %v1943
        %v2239 = vunpack.c.l.b16 %v1944
        %v2240 = vunpack.c.l.b16 %v1945
        %v2241 = vunpack.c.l.b16 %v1946
        %v2242 = vunpack.c.l.b16 %v1947
        %v2243 = vunpack.c.l.b16 %v1948
        %v2244 = vunpack.c.l.b16 %v1949
        %v2245 = vunpack.c.l.b16 %v1950
        %v2246 = vunpack.c.l.b16 %v1951
        %v2247 = vunpack.c.l.b16 %v1952
        %v2248 = vunpack.c.l.b16 %v1953
        %v2249 = vunpack.c.l.b16 %v1954
        %v2250 = vunpack.c.l.b16 %v1955
        %v2251 = vunpack.c.l.b16 %v1956
        %v2252 = vunpack.c.l.b16 %v1957
        %v2253 = vunpack.c.l.b16 %v1958
        %v2254 = vunpack.c.l.b16 %v1959
        %v2255 = vunpack.c.l.b16 %v1960
        %v2256 = vunpack.c.l.b16 %v1961
        %v2257 = vunpack.c.l.b16 %v1962
        %v2258 = vunpack.c.l.b16 %v1963
        %v2259 = vunpack.c.l.b16 %v1964
        %v2260 = vunpack.c.l.b16 %v1965
        %v2261 = vunpack.c.l.b16 %v1966
        %v2262 = vunpack.c.l.b16 %v1967
        %v2263 = vunpack.c.l.b16 %v1968
        %v2264 = vunpack.c.l.b16 %v1969
        %v2265 = vunpack.c.l.b16 %v1970
        %v2266 = vunpack.c.l.b16 %v1971
        %v2267 = vunpack.c.l.b16 %v1972
        %v2268 = vunpack.c.l.b16 %v1973
        %v2269 = vunpack.c.l.b16 %v1974
        %v2270 = vunpack.c.l.b16 %v1975
        %v2271 = vunpack.c.l.b16 %v1976
        %v2272 = vunpack.c.l.b16 %v1977
        %v2273 = vunpack.c.l.b16 %v1978
        %v2274 = vunpack.c.l.b16 %v1979
        %v2275 = vunpack.c.l.b16 %v1980
        %v2276 = vunpack.c.l.b16 %v1981
        %v2277 = vpack.c.b16 %v2134, %v2133
        %v2278 = vpack.c.b16 %v2136, %v2135
        %v2279 = vpack.c.b16 %v2138, %v2137
        %v2280 = vpack.c.b16 %v2140, %v2139
        %v2281 = vpack.c.b16 %v2142, %v2141
        %v2282 = vpack.c.b16 %v2144, %v2143
        %v2283 = vpack.c.b16 %v2146, %v2145
        %v2284 = vpack.c.b16 %v2148, %v2147
        %v2285 = vpack.c.b16 %v2150, %v2149
        %v2286 = vpack.c.b16 %v2152, %v2151
        %v2287 = vpack.c.b16 %v2154, %v2153
        %v2288 = vpack.c.b16 %v2156, %v2155
        %v2289 = vpack.c.b16 %v2158, %v2157
        %v2290 = vpack.c.b16 %v2160, %v2159
        %v2291 = vpack.c.b16 %v2162, %v2161
        %v2292 = vpack.c.b16 %v2164, %v2163
        %v2293 = vpack.c.b16 %v2166, %v2165
        %v2294 = vpack.c.b16 %v2168, %v2167
        %v2295 = vpack.c.b16 %v2170, %v2169
        %v2296 = vpack.c.b16 %v2172, %v2171
        %v2297 = vpack.c.b16 %v2174, %v2173
        %v2298 = vpack.c.b16 %v2176, %v2175
        %v2299 = vpack.c.b16 %v2178, %v2177
        %v2300 = vpack.c.b16 %v2180, %v2179
        %v2301 = vpack.c.b16 %v2182, %v2181
        %v2302 = vpack.c.b16 %v2184, %v2183
        %v2303 = vpack.c.b16 %v2186, %v2185
        %v2304 = vpack.c.b16 %v2188, %v2187
        %v2305 = vpack.c.b16 %v2190, %v2189
        %v2306 = vpack.c.b16 %v2192, %v2191
        %v2307 = vpack.c.b16 %v2194, %v2193
        %v2308 = vpack.c.b16 %v2196, %v2195
        %v2309 = vpack.c.b16 %v2198, %v2197
        %v2310 = vpack.c.b16 %v2200, %v2199
        %v2311 = vpack.c.b16 %v2202, %v2201
        %v2312 = vpack.c.b16 %v2204, %v2203
        %v2313 = vpack.c.b16 %v2206, %v2205
        %v2314 = vpack.c.b16 %v2208, %v2207
        %v2315 = vpack.c.b16 %v2210, %v2209
        %v2316 = vpack.c.b16 %v2212, %v2211
        %v2317 = vpack.c.b16 %v2214, %v2213
        %v2318 = vpack.c.b16 %v2216, %v2215
        %v2319 = vpack.c.b16 %v2218, %v2217
        %v2320 = vpack.c.b16 %v2220, %v2219
        %v2321 = vpack.c.b16 %v2222, %v2221
        %v2322 = vpack.c.b16 %v2224, %v2223
        %v2323 = vpack.c.b16 %v2226, %v2225
        %v2324 = vpack.c.b16 %v2228, %v2227
        %v2325 = vpack.c.b16 %v2230, %v2229
        %v2326 = vpack.c.b16 %v2232, %v2231
        %v2327 = vpack.c.b16 %v2234, %v2233
        %v2328 = vpack.c.b16 %v2236, %v2235
        %v2329 = vpack.c.b16 %v2238, %v2237
        %v2330 = vpack.c.b16 %v2240, %v2239
        %v2331 = vpack.c.b16 %v2242, %v2241
        %v2332 = vpack.c.b16 %v2244, %v2243
        %v2333 = vpack.c.b16 %v2246, %v2245
        %v2334 = vpack.c.b16 %v2248, %v2247
        %v2335 = vpack.c.b16 %v2250, %v2249
        %v2336 = vpack.c.b16 %v2252, %v2251
        %v2337 = vpack.c.b16 %v2254, %v2253
        %v2338 = vpack.c.b16 %v2256, %v2255
        %v2339 = vpack.c.b16 %v2258, %v2257
        %v2340 = vpack.c.b16 %v2260, %v2259
        %v2341 = vpack.c.b16 %v2262, %v2261
        %v2342 = vpack.c.b16 %v2264, %v2263
        %v2343 = vpack.c.b16 %v2266, %v2265
        %v2344 = vpack.c.b16 %v2268, %v2267
        %v2345 = vpack.c.b16 %v2270, %v2269
        %v2346 = vpack.c.b16 %v2272, %v2271
        %v2347 = vpack.c.b16 %v2274, %v2273
        %v2348 = vpack.c.b16 %v2276, %v2275
        %2421 = vmatprep.subr.bf16.mxu0 0
        %2422 = vmatpush1.bf16.msra.mxu0 %v2277
        %2423 = vmatprep.subr.bf16.mxu0 0
        %2424 = vmatpush1.bf16.msra.mxu0 %v2278
        %2425 = vmatprep.subr.bf16.mxu0 0
        %2426 = vmatpush1.bf16.msra.mxu0 %v2279
        %2427 = vmatprep.subr.bf16.mxu0 0
        %2428 = vmatpush1.bf16.msra.mxu0 %v2280
        %2429 = vmatprep.subr.bf16.mxu0 0
        %2430 = vmatpush1.bf16.msra.mxu0 %v2281
        %2431 = vmatprep.subr.bf16.mxu0 0
        %2432 = vmatpush1.bf16.msra.mxu0 %v2282
        %2433 = vmatprep.subr.bf16.mxu0 0
        %2434 = vmatpush1.bf16.msra.mxu0 %v2283
        %2435 = vmatprep.subr.bf16.mxu0 0
        %2436 = vmatpush1.bf16.msra.mxu0 %v2284
        %2437 = vmatprep.subr.bf16.mxu0 0
        %2438 = vmatpush1.bf16.msra.mxu0 %v2285
        %2439 = vmatprep.subr.bf16.mxu0 0
        %2440 = vmatpush1.bf16.msra.mxu0 %v2286
        %2441 = vmatprep.subr.bf16.mxu0 0
        %2442 = vmatpush1.bf16.msra.mxu0 %v2287
        %2443 = vmatprep.subr.bf16.mxu0 0
        %2444 = vmatpush1.bf16.msra.mxu0 %v2288
        %2445 = vmatprep.subr.bf16.mxu0 0
        %2446 = vmatpush1.bf16.msra.mxu0 %v2289
        %2447 = vmatprep.subr.bf16.mxu0 0
        %2448 = vmatpush1.bf16.msra.mxu0 %v2290
        %2449 = vmatprep.subr.bf16.mxu0 0
        %2450 = vmatpush1.bf16.msra.mxu0 %v2291
        %2451 = vmatprep.subr.bf16.mxu0 0
        %2452 = vmatpush1.bf16.msra.mxu0 %v2292
        %2453 = vmatprep.mubr.bf16.mxu0 %v1830
        %2454 = vmatmul.mubr.bf16.gmra.mrb[0].mxu0 %v1829
        %v2455 = vpop.f32.mrb[0].mxu0
        %v2456 = vadd.f32 %v1987, %v2455
        %v2457 = vpop.f32.mrb[0].mxu0
        %v2458 = vpop.f32.mrb[0].mxu0
        %v2459 = vadd.f32 %v1987, %v2458
        %v2460 = vpop.f32.mrb[0].mxu0
        %2461 = vdwg.mxu0
        %2462 = vmatprep.subr.bf16.mxu0 0
        %2463 = vmatpush1.bf16.msra.mxu0 %v2293
        %2464 = vmatprep.subr.bf16.mxu0 0
        %2465 = vmatpush1.bf16.msra.mxu0 %v2294
        %2466 = vmatprep.subr.bf16.mxu0 0
        %2467 = vmatpush1.bf16.msra.mxu0 %v2295
        %2468 = vmatprep.subr.bf16.mxu0 0
        %2469 = vmatpush1.bf16.msra.mxu0 %v2296
        %2470 = vmatprep.subr.bf16.mxu0 0
        %2471 = vmatpush1.bf16.msra.mxu0 %v2297
        %2472 = vmatprep.subr.bf16.mxu0 0
        %2473 = vmatpush1.bf16.msra.mxu0 %v2298
        %2474 = vmatprep.subr.bf16.mxu0 0
        %2475 = vmatpush1.bf16.msra.mxu0 %v2299
        %2476 = vmatprep.subr.bf16.mxu0 0
        %2477 = vmatpush1.bf16.msra.mxu0 %v2300
        %2478 = vmatprep.subr.bf16.mxu0 0
        %2479 = vmatpush1.bf16.msra.mxu0 %v2301
        %2480 = vmatprep.subr.bf16.mxu0 0
        %2481 = vmatpush1.bf16.msra.mxu0 %v2302
        %2482 = vmatprep.subr.bf16.mxu0 0
        %2483 = vmatpush1.bf16.msra.mxu0 %v2303
        %2484 = vmatprep.subr.bf16.mxu0 0
        %2485 = vmatpush1.bf16.msra.mxu0 %v2304
        %2486 = vmatprep.subr.bf16.mxu0 0
        %2487 = vmatpush1.bf16.msra.mxu0 %v2305
        %2488 = vmatprep.subr.bf16.mxu0 0
        %2489 = vmatpush1.bf16.msra.mxu0 %v2306
        %2490 = vmatprep.subr.bf16.mxu0 0
        %2491 = vmatpush1.bf16.msra.mxu0 %v2307
        %2492 = vmatprep.subr.bf16.mxu0 0
        %2493 = vmatpush1.bf16.msra.mxu0 %v2308
        %2494 = vmatprep.mubr.bf16.mxu0 %v1832
        %2495 = vmatmul.mubr.bf16.gmra.mrb[0].mxu0 %v1831
        %v2496 = vpop.f32.mrb[0].mxu0
        %v2497 = vadd.f32 %v2456, %v2496
        %v2498 = vpop.f32.mrb[0].mxu0
        %v2499 = vpop.f32.mrb[0].mxu0
        %v2500 = vadd.f32 %v2459, %v2499
        %v2501 = vpop.f32.mrb[0].mxu0
        %2502 = vdwg.mxu0
        %2503 = vmatprep.subr.bf16.mxu0 0
        %2504 = vmatpush1.bf16.msra.mxu0 %v2309
        %2505 = vmatprep.subr.bf16.mxu0 0
        %2506 = vmatpush1.bf16.msra.mxu0 %v2310
        %2507 = vmatprep.subr.bf16.mxu0 0
        %2508 = vmatpush1.bf16.msra.mxu0 %v2311
        %2509 = vmatprep.subr.bf16.mxu0 0
        %2510 = vmatpush1.bf16.msra.mxu0 %v2312
        %2511 = vmatprep.subr.bf16.mxu0 0
        %2512 = vmatpush1.bf16.msra.mxu0 %v2313
        %2513 = vmatprep.subr.bf16.mxu0 0
        %2514 = vmatpush1.bf16.msra.mxu0 %v2314
        %2515 = vmatprep.subr.bf16.mxu0 0
        %2516 = vmatpush1.bf16.msra.mxu0 %v2315
        %2517 = vmatprep.subr.bf16.mxu0 0
        %2518 = vmatpush1.bf16.msra.mxu0 %v2316
        %2519 = vmatprep.subr.bf16.mxu0 0
        %2520 = vmatpush1.bf16.msra.mxu0 %v2317
        %2521 = vmatprep.subr.bf16.mxu0 0
        %2522 = vmatpush1.bf16.msra.mxu0 %v2318
        %2523 = vmatprep.subr.bf16.mxu0 0
        %2524 = vmatpush1.bf16.msra.mxu0 %v2319
        %2525 = vmatprep.subr.bf16.mxu0 0
        %2526 = vmatpush1.bf16.msra.mxu0 %v2320
        %2527 = vmatprep.subr.bf16.mxu0 0
        %2528 = vmatpush1.bf16.msra.mxu0 %v2321
        %2529 = vmatprep.subr.bf16.mxu0 0
        %2530 = vmatpush1.bf16.msra.mxu0 %v2322
        %2531 = vmatprep.subr.bf16.mxu0 0
        %2532 = vmatpush1.bf16.msra.mxu0 %v2323
        %2533 = vmatprep.subr.bf16.mxu0 0
        %2534 = vmatpush1.bf16.msra.mxu0 %v2324
        %2535 = vmatprep.mubr.bf16.mxu0 %v1834
        %2536 = vmatmul.mubr.bf16.gmra.mrb[0].mxu0 %v1833
        %v2537 = vpop.f32.mrb[0].mxu0
        %v2538 = vadd.f32 %v2497, %v2537
        %v2539 = vpop.f32.mrb[0].mxu0
        %v2540 = vpop.f32.mrb[0].mxu0
        %v2541 = vadd.f32 %v2500, %v2540
        %v2542 = vpop.f32.mrb[0].mxu0
        %2543 = vdwg.mxu0
        %2544 = vmatprep.subr.bf16.mxu0 0
        %2545 = vmatpush1.bf16.msra.mxu0 %v2325
        %2546 = vmatprep.subr.bf16.mxu0 0
        %2547 = vmatpush1.bf16.msra.mxu0 %v2326
        %2548 = vmatprep.subr.bf16.mxu0 0
        %2549 = vmatpush1.bf16.msra.mxu0 %v2327
        %2550 = vmatprep.subr.bf16.mxu0 0
        %2551 = vmatpush1.bf16.msra.mxu0 %v2328
        %2552 = vmatprep.subr.bf16.mxu0 0
        %2553 = vmatpush1.bf16.msra.mxu0 %v2329
        %2554 = vmatprep.subr.bf16.mxu0 0
        %2555 = vmatpush1.bf16.msra.mxu0 %v2330
        %2556 = vmatprep.subr.bf16.mxu0 0
        %2557 = vmatpush1.bf16.msra.mxu0 %v2331
        %2558 = vmatprep.subr.bf16.mxu0 0
        %2559 = vmatpush1.bf16.msra.mxu0 %v2332
        %2560 = vmatprep.subr.bf16.mxu0 0
        %2561 = vmatpush1.bf16.msra.mxu0 %v2333
        %2562 = vmatprep.subr.bf16.mxu0 0
        %2563 = vmatpush1.bf16.msra.mxu0 %v2334
        %2564 = vmatprep.subr.bf16.mxu0 0
        %2565 = vmatpush1.bf16.msra.mxu0 %v2335
        %2566 = vmatprep.subr.bf16.mxu0 0
        %2567 = vmatpush1.bf16.msra.mxu0 %v2336
        %2568 = vmatprep.subr.bf16.mxu0 0
        %2569 = vmatpush1.bf16.msra.mxu0 %v2337
        %2570 = vmatprep.subr.bf16.mxu0 0
        %2571 = vmatpush1.bf16.msra.mxu0 %v2338
        %2572 = vmatprep.subr.bf16.mxu0 0
        %2573 = vmatpush1.bf16.msra.mxu0 %v2339
        %2574 = vmatprep.subr.bf16.mxu0 0
        %2575 = vmatpush1.bf16.msra.mxu0 %v2340
        %2576 = vmatprep.mubr.bf16.mxu0 %v1836
        %2577 = vmatmul.mubr.bf16.gmra.mrb[0].mxu0 %v1835
        %v2578 = vpop.f32.mrb[0].mxu0
        %v2579 = vadd.f32 %v2538, %v2578
        %v2580 = vpop.f32.mrb[0].mxu0
        %v2581 = vpop.f32.mrb[0].mxu0
        %v2582 = vadd.f32 %v2541, %v2581
        %v2583 = vpop.f32.mrb[0].mxu0
        %2584 = vdwg.mxu0
        %2585 = vmatprep.subr.bf16.mxu0 0
        %2586 = vmatpush1.bf16.msra.mxu0 %v2341
        %2587 = vmatprep.subr.bf16.mxu0 0
        %2588 = vmatpush1.bf16.msra.mxu0 %v2342
        %2589 = vmatprep.subr.bf16.mxu0 0
        %2590 = vmatpush1.bf16.msra.mxu0 %v2343
        %2591 = vmatprep.subr.bf16.mxu0 0
        %2592 = vmatpush1.bf16.msra.mxu0 %v2344
        %2593 = vmatprep.subr.bf16.mxu0 0
        %2594 = vmatpush1.bf16.msra.mxu0 %v2345
        %2595 = vmatprep.subr.bf16.mxu0 0
        %2596 = vmatpush1.bf16.msra.mxu0 %v2346
        %2597 = vmatprep.subr.bf16.mxu0 0
        %2598 = vmatpush1.bf16.msra.mxu0 %v2347
        %2599 = vmatprep.subr.bf16.mxu0 0
        %2600 = vmatpush1.bf16.msra.mxu0 %v2348
        %2601 = vmatprep.subr.bf16.mxu0 0
        %2602 = vmatpush1.bf16.msra.mxu0 0
        %2603 = vmatprep.subr.bf16.mxu0 0
        %2604 = vmatpush1.bf16.msra.mxu0 0
        %2605 = vmatprep.subr.bf16.mxu0 0
        %2606 = vmatpush1.bf16.msra.mxu0 0
        %2607 = vmatprep.subr.bf16.mxu0 0
        %2608 = vmatpush1.bf16.msra.mxu0 0
        %2609 = vmatprep.subr.bf16.mxu0 0
        %2610 = vmatpush1.bf16.msra.mxu0 0
        %2611 = vmatprep.subr.bf16.mxu0 0
        %2612 = vmatpush1.bf16.msra.mxu0 0
        %2613 = vmatprep.subr.bf16.mxu0 0
        %2614 = vmatpush1.bf16.msra.mxu0 0
        %2615 = vmatprep.subr.bf16.mxu0 0
        %2616 = vmatpush1.bf16.msra.mxu0 0
        %2617 = vmatprep.mubr.bf16.mxu0 0
        %2618 = vmatmul.mubr.bf16.gmra.mrb[0].mxu0 %v1837
        %v2619 = vpop.f32.mrb[0].mxu0
        %v2620 = vadd.f32 %v2579, %v2619
        %v2621 = vpop.f32.mrb[0].mxu0
        %v2622 = vpop.f32.mrb[0].mxu0
        %v2623 = vadd.f32 %v2582, %v2622
        %v2624 = vpop.f32.mrb[0].mxu0
        %2625 = vdwg.mxu0
        %vm2626 = vcmp.gt.f32.partialorder %v2620, 0.0
        %vm2627 = vcmp.gt.f32.partialorder %v2623, 0.0
        %v2628 = vmin.f32 %v2620, 0.0
        %v2629 = vmin.f32 %v2623, 0.0
        %v2630 = vmul.f32 %v2628, 1.442695
        %v2631 = vpow.pop %v2630
        %v2632 = vmul.f32 %v2629, 1.442695
        %v2633 = vpow.pop %v2632
        %v2634 = vsub.f32 %v2631, 1.0
        %v2635 = vsub.f32 %v2633, 1.0
        %v2636 = vsel %vm2626, %v2620, %v2634
        %v2637 = vsel %vm2627, %v2623, %v2635
        %v2638 = vpack.c.bf16 %v2637, %v2636
        %v2639 = vld [vmem:[%s5] sm:$0xff]
        %v2640 = vld [vmem:[%s5 + $0x8] sm:$0xff]
        %v2641 = vld [vmem:[%s5 + $0x10] sm:$0xff]
        %v2642 = vld [vmem:[%s5 + $0x18] sm:$0xff]
        %v2643 = vld [vmem:[%s5 + $0x20] sm:$0xff]
        %v2644 = vld [vmem:[%s5 + $0x28] sm:$0xff]
        %v2645 = vld [vmem:[%s5 + $0x30] sm:$0xff]
        %v2646 = vld [vmem:[%s5 + $0x38] sm:$0xff]
        %v2647 = vld [vmem:[%s5 + $0x40] sm:$0xff]
        %v2648 = vld [vmem:[%s5 + $0x48] sm:$0xff]
        %v2649 = vld [vmem:[%s5 + $0x50] sm:$0xff]
        %v2650 = vld [vmem:[%s5 + $0x58] sm:$0xff]
        %v2651 = vld [vmem:[%s5 + $0x60] sm:$0xff]
        %v2652 = vld [vmem:[%s5 + $0x68] sm:$0xff]
        %v2653 = vld [vmem:[%s5 + $0x70] sm:$0xff]
        %v2654 = vld [vmem:[%s5 + $0x78] sm:$0xff]
        %v2655 = vld [vmem:[%s6] sm:$0x3]
        %v2657 = vlaneseq
        %v2658 = vshrl.u32 %v2657, 7
        %v2659 = vsub.s32 0, %v2658
        %v2660 = vrot.slane %v2655, %v2659
        %v2661 = vlaneseq
        %v2662 = vshrl.u32 %v2661, 7
        %v2663 = vsub.s32 1, %v2662
        %v2664 = vrot.slane %v2655, %v2663
        %v2683 = vunpack.c.l.b16 %v2639
        %v2684 = vunpack.c.h.b16 %v2639
        %v2685 = vunpack.c.l.b16 %v2640
        %v2686 = vunpack.c.h.b16 %v2640
        %v2687 = vunpack.c.l.b16 %v2641
        %v2688 = vunpack.c.h.b16 %v2641
        %v2689 = vunpack.c.l.b16 %v2642
        %v2690 = vunpack.c.h.b16 %v2642
        %v2691 = vunpack.c.l.b16 %v2643
        %v2692 = vunpack.c.h.b16 %v2643
        %v2693 = vunpack.c.l.b16 %v2644
        %v2694 = vunpack.c.h.b16 %v2644
        %v2695 = vunpack.c.l.b16 %v2645
        %v2696 = vunpack.c.h.b16 %v2645
        %v2697 = vunpack.c.l.b16 %v2646
        %v2698 = vunpack.c.h.b16 %v2646
        %v2699 = vunpack.c.l.b16 %v2647
        %v2700 = vunpack.c.h.b16 %v2647
        %v2701 = vunpack.c.l.b16 %v2648
        %v2702 = vunpack.c.h.b16 %v2648
        %v2703 = vunpack.c.l.b16 %v2649
        %v2704 = vunpack.c.h.b16 %v2649
        %v2705 = vunpack.c.l.b16 %v2650
        %v2706 = vunpack.c.h.b16 %v2650
        %v2707 = vunpack.c.l.b16 %v2651
        %v2708 = vunpack.c.h.b16 %v2651
        %v2709 = vunpack.c.l.b16 %v2652
        %v2710 = vunpack.c.h.b16 %v2652
        %v2711 = vunpack.c.l.b16 %v2653
        %v2712 = vunpack.c.h.b16 %v2653
        %v2713 = vunpack.c.l.b16 %v2654
        %v2714 = vunpack.c.h.b16 %v2654
        %v2715 = vpack.c.b16 %v2685, %v2683
        %v2716 = vpack.c.b16 %v2686, %v2684
        %v2717 = vpack.c.b16 %v2689, %v2687
        %v2718 = vpack.c.b16 %v2690, %v2688
        %v2719 = vpack.c.b16 %v2693, %v2691
        %v2720 = vpack.c.b16 %v2694, %v2692
        %v2721 = vpack.c.b16 %v2697, %v2695
        %v2722 = vpack.c.b16 %v2698, %v2696
        %v2723 = vpack.c.b16 %v2701, %v2699
        %v2724 = vpack.c.b16 %v2702, %v2700
        %v2725 = vpack.c.b16 %v2705, %v2703
        %v2726 = vpack.c.b16 %v2706, %v2704
        %v2727 = vpack.c.b16 %v2709, %v2707
        %v2728 = vpack.c.b16 %v2710, %v2708
        %v2729 = vpack.c.b16 %v2713, %v2711
        %v2730 = vpack.c.b16 %v2714, %v2712
        %2747 = vmatprep.subr.bf16.mxu0 %v2716
        %2748 = vmatpush1.bf16.msra.mxu0 %v2715
        %2749 = vmatprep.subr.bf16.mxu0 %v2718
        %2750 = vmatpush1.bf16.msra.mxu0 %v2717
        %2751 = vmatprep.subr.bf16.mxu0 %v2720
        %2752 = vmatpush1.bf16.msra.mxu0 %v2719
        %2753 = vmatprep.subr.bf16.mxu0 %v2722
        %2754 = vmatpush1.bf16.msra.mxu0 %v2721
        %2755 = vmatprep.subr.bf16.mxu0 %v2724
        %2756 = vmatpush1.bf16.msra.mxu0 %v2723
        %2757 = vmatprep.subr.bf16.mxu0 %v2726
        %2758 = vmatpush1.bf16.msra.mxu0 %v2725
        %2759 = vmatprep.subr.bf16.mxu0 %v2728
        %2760 = vmatpush1.bf16.msra.mxu0 %v2727
        %2761 = vmatprep.subr.bf16.mxu0 %v2730
        %2762 = vmatpush1.bf16.msra.mxu0 %v2729
        %2763 = vmatprep.subr.bf16.mxu0 0
        %2764 = vmatpush1.bf16.msra.mxu0 0
        %2765 = vmatprep.subr.bf16.mxu0 0
        %2766 = vmatpush1.bf16.msra.mxu0 0
        %2767 = vmatprep.subr.bf16.mxu0 0
        %2768 = vmatpush1.bf16.msra.mxu0 0
        %2769 = vmatprep.subr.bf16.mxu0 0
        %2770 = vmatpush1.bf16.msra.mxu0 0
        %2771 = vmatprep.subr.bf16.mxu0 0
        %2772 = vmatpush1.bf16.msra.mxu0 0
        %2773 = vmatprep.subr.bf16.mxu0 0
        %2774 = vmatpush1.bf16.msra.mxu0 0
        %2775 = vmatprep.subr.bf16.mxu0 0
        %2776 = vmatpush1.bf16.msra.mxu0 0
        %2777 = vmatprep.subr.bf16.mxu0 0
        %2778 = vmatpush1.bf16.msra.mxu0 0
        %2779 = vmatprep.mubr.bf16.mxu0 0
        %2780 = vmatmul.mubr.bf16.gmra.mrb[0].mxu0 %v2638
        %v2781 = vpop.f32.mrb[0].mxu0
        %v2782 = vadd.f32 %v2660, %v2781
        %v2783 = vpop.f32.mrb[0].mxu0
        %v2784 = vadd.f32 %v2664, %v2783
        %v2785 = vpop.f32.mrb[0].mxu0
        %v2786 = vadd.f32 %v2660, %v2785
        %v2787 = vpop.f32.mrb[0].mxu0
        %v2788 = vadd.f32 %v2664, %v2787
        %2789 = vdwg.mxu0
        %vm2790 = vcmp.gt.f32.partialorder %v2782, 0.0
        %vm2791 = vcmp.gt.f32.partialorder %v2784, 0.0
        %vm2792 = vcmp.gt.f32.partialorder %v2786, 0.0
        %vm2793 = vcmp.gt.f32.partialorder %v2788, 0.0
        %v2794 = vmin.f32 %v2782, 0.0
        %v2795 = vmin.f32 %v2784, 0.0
        %v2796 = vmin.f32 %v2786, 0.0
        %v2797 = vmin.f32 %v2788, 0.0
        %v2798 = vmul.f32 %v2794, 1.442695
        %v2799 = vpow.pop %v2798
        %v2800 = vmul.f32 %v2795, 1.442695
        %v2801 = vpow.pop %v2800
        %v2802 = vmul.f32 %v2796, 1.442695
        %v2803 = vpow.pop %v2802
        %v2804 = vmul.f32 %v2797, 1.442695
        %v2805 = vpow.pop %v2804
        %v2806 = vsub.f32 %v2799, 1.0
        %v2807 = vsub.f32 %v2801, 1.0
        %v2808 = vsub.f32 %v2803, 1.0
        %v2809 = vsub.f32 %v2805, 1.0
        %v2810 = vsel %vm2790, %v2782, %v2806
        %v2811 = vsel %vm2791, %v2784, %v2807
        %v2812 = vsel %vm2792, %v2786, %v2808
        %v2813 = vsel %vm2793, %v2788, %v2809
        %v2814 = vpack.c.bf16 %v2812, %v2810
        %v2815 = vpack.c.bf16 %v2813, %v2811
        %v2816 = vld [vmem:[%s7] sm:$0xff]
        %v2817 = vld [vmem:[%s7 + $0x8] sm:$0xff]
        %v2818 = vld [vmem:[%s7 + $0x10] sm:$0xff]
        %v2819 = vld [vmem:[%s7 + $0x18] sm:$0xff]
        %v2820 = vld [vmem:[%s7 + $0x20] sm:$0xff]
        %v2821 = vld [vmem:[%s7 + $0x28] sm:$0xff]
        %v2822 = vld [vmem:[%s7 + $0x30] sm:$0xff]
        %v2823 = vld [vmem:[%s7 + $0x38] sm:$0xff]
        %v2824 = vld [vmem:[%s7 + $0x40] sm:$0xff]
        %v2825 = vld [vmem:[%s7 + $0x48] sm:$0xff]
        %v2826 = vld [vmem:[%s7 + $0x50] sm:$0xff]
        %v2827 = vld [vmem:[%s7 + $0x58] sm:$0xff]
        %v2828 = vld [vmem:[%s7 + $0x60] sm:$0xff]
        %v2829 = vld [vmem:[%s7 + $0x68] sm:$0xff]
        %v2830 = vld [vmem:[%s7 + $0x70] sm:$0xff]
        %v2831 = vld [vmem:[%s7 + $0x78] sm:$0xff]
        %v2832 = vld [vmem:[%s7 + $0x80] sm:$0xff]
        %v2833 = vld [vmem:[%s7 + $0x88] sm:$0xff]
        %v2834 = vld [vmem:[%s7 + $0x90] sm:$0xff]
        %v2835 = vld [vmem:[%s7 + $0x98] sm:$0xff]
        %v2836 = vld [vmem:[%s7 + $0xa0] sm:$0xff]
        %v2837 = vld [vmem:[%s7 + $0xa8] sm:$0xff]
        %v2838 = vld [vmem:[%s7 + $0xb0] sm:$0xff]
        %v2839 = vld [vmem:[%s7 + $0xb8] sm:$0xff]
        %v2840 = vld [vmem:[%s7 + $0xc0] sm:$0xff]
        %v2841 = vld [vmem:[%s7 + $0xc8] sm:$0xff]
        %v2842 = vld [vmem:[%s7 + $0xd0] sm:$0xff]
        %v2843 = vld [vmem:[%s7 + $0xd8] sm:$0xff]
        %v2844 = vld [vmem:[%s7 + $0xe0] sm:$0xff]
        %v2845 = vld [vmem:[%s7 + $0xe8] sm:$0xff]
        %v2846 = vld [vmem:[%s7 + $0xf0] sm:$0xff]
        %v2847 = vld [vmem:[%s7 + $0xf8] sm:$0xff]
        %v2848 = vld [vmem:[%s7 + $0x100] sm:$0xff]
        %v2849 = vld [vmem:[%s7 + $0x108] sm:$0xff]
        %v2850 = vld [vmem:[%s7 + $0x110] sm:$0xff]
        %v2851 = vld [vmem:[%s7 + $0x118] sm:$0xff]
        %v2852 = vld [vmem:[%s7 + $0x120] sm:$0xff]
        %v2853 = vld [vmem:[%s7 + $0x128] sm:$0xff]
        %v2854 = vld [vmem:[%s7 + $0x130] sm:$0xff]
        %v2855 = vld [vmem:[%s7 + $0x138] sm:$0xff]
        %v2856 = vld [vmem:[%s7 + $0x140] sm:$0xff]
        %v2857 = vld [vmem:[%s7 + $0x148] sm:$0xff]
        %v2858 = vld [vmem:[%s7 + $0x150] sm:$0xff]
        %v2859 = vld [vmem:[%s7 + $0x158] sm:$0xff]
        %v2860 = vld [vmem:[%s7 + $0x160] sm:$0xff]
        %v2861 = vld [vmem:[%s7 + $0x168] sm:$0xff]
        %v2862 = vld [vmem:[%s7 + $0x170] sm:$0xff]
        %v2863 = vld [vmem:[%s7 + $0x178] sm:$0xff]
        %v2864 = vld [vmem:[%s7 + $0x180] sm:$0xff]
        %v2865 = vld [vmem:[%s7 + $0x188] sm:$0xff]
        %v2866 = vld [vmem:[%s7 + $0x190] sm:$0xff]
        %v2867 = vld [vmem:[%s7 + $0x198] sm:$0xff]
        %v2868 = vld [vmem:[%s7 + $0x1a0] sm:$0xff]
        %v2869 = vld [vmem:[%s7 + $0x1a8] sm:$0xff]
        %v2870 = vld [vmem:[%s7 + $0x1b0] sm:$0xff]
        %v2871 = vld [vmem:[%s7 + $0x1b8] sm:$0xff]
        %v2872 = vld [vmem:[%s7 + $0x1c0] sm:$0xff]
        %v2873 = vld [vmem:[%s7 + $0x1c8] sm:$0xff]
        %v2874 = vld [vmem:[%s7 + $0x1d0] sm:$0xff]
        %v2875 = vld [vmem:[%s7 + $0x1d8] sm:$0xff]
        %v2876 = vld [vmem:[%s7 + $0x1e0] sm:$0xff]
        %v2877 = vld [vmem:[%s7 + $0x1e8] sm:$0xff]
        %v2878 = vld [vmem:[%s7 + $0x1f0] sm:$0xff]
        %v2879 = vld [vmem:[%s7 + $0x1f8] sm:$0xff]
        %v2880 = vld [vmem:[%s8] sm:$0xf]
        %v2882 = vlaneseq
        %v2883 = vshrl.u32 %v2882, 7
        %v2884 = vsub.s32 0, %v2883
        %v2885 = vrot.slane %v2880, %v2884
        %v2886 = vlaneseq
        %v2887 = vshrl.u32 %v2886, 7
        %v2888 = vsub.s32 1, %v2887
        %v2889 = vrot.slane %v2880, %v2888
        %v2890 = vlaneseq
        %v2891 = vshrl.u32 %v2890, 7
        %v2892 = vsub.s32 2, %v2891
        %v2893 = vrot.slane %v2880, %v2892
        %v2894 = vlaneseq
        %v2895 = vshrl.u32 %v2894, 7
        %v2896 = vsub.s32 3, %v2895
        %v2897 = vrot.slane %v2880, %v2896
        %v2966 = vunpack.c.l.b16 %v2816
        %v2967 = vunpack.c.h.b16 %v2816
        %v2968 = vunpack.c.l.b16 %v2817
        %v2969 = vunpack.c.h.b16 %v2817
        %v2970 = vunpack.c.l.b16 %v2818
        %v2971 = vunpack.c.h.b16 %v2818
        %v2972 = vunpack.c.l.b16 %v2819
        %v2973 = vunpack.c.h.b16 %v2819
        %v2974 = vunpack.c.l.b16 %v2820
        %v2975 = vunpack.c.h.b16 %v2820
        %v2976 = vunpack.c.l.b16 %v2821
        %v2977 = vunpack.c.h.b16 %v2821
        %v2978 = vunpack.c.l.b16 %v2822
        %v2979 = vunpack.c.h.b16 %v2822
        %v2980 = vunpack.c.l.b16 %v2823
        %v2981 = vunpack.c.h.b16 %v2823
        %v2982 = vunpack.c.l.b16 %v2824
        %v2983 = vunpack.c.h.b16 %v2824
        %v2984 = vunpack.c.l.b16 %v2825
        %v2985 = vunpack.c.h.b16 %v2825
        %v2986 = vunpack.c.l.b16 %v2826
        %v2987 = vunpack.c.h.b16 %v2826
        %v2988 = vunpack.c.l.b16 %v2827
        %v2989 = vunpack.c.h.b16 %v2827
        %v2990 = vunpack.c.l.b16 %v2828
        %v2991 = vunpack.c.h.b16 %v2828
        %v2992 = vunpack.c.l.b16 %v2829
        %v2993 = vunpack.c.h.b16 %v2829
        %v2994 = vunpack.c.l.b16 %v2830
        %v2995 = vunpack.c.h.b16 %v2830
        %v2996 = vunpack.c.l.b16 %v2831
        %v2997 = vunpack.c.h.b16 %v2831
        %v2998 = vunpack.c.l.b16 %v2832
        %v2999 = vunpack.c.h.b16 %v2832
        %v3000 = vunpack.c.l.b16 %v2833
        %v3001 = vunpack.c.h.b16 %v2833
        %v3002 = vunpack.c.l.b16 %v2834
        %v3003 = vunpack.c.h.b16 %v2834
        %v3004 = vunpack.c.l.b16 %v2835
        %v3005 = vunpack.c.h.b16 %v2835
        %v3006 = vunpack.c.l.b16 %v2836
        %v3007 = vunpack.c.h.b16 %v2836
        %v3008 = vunpack.c.l.b16 %v2837
        %v3009 = vunpack.c.h.b16 %v2837
        %v3010 = vunpack.c.l.b16 %v2838
        %v3011 = vunpack.c.h.b16 %v2838
        %v3012 = vunpack.c.l.b16 %v2839
        %v3013 = vunpack.c.h.b16 %v2839
        %v3014 = vunpack.c.l.b16 %v2840
        %v3015 = vunpack.c.h.b16 %v2840
        %v3016 = vunpack.c.l.b16 %v2841
        %v3017 = vunpack.c.h.b16 %v2841
        %v3018 = vunpack.c.l.b16 %v2842
        %v3019 = vunpack.c.h.b16 %v2842
        %v3020 = vunpack.c.l.b16 %v2843
        %v3021 = vunpack.c.h.b16 %v2843
        %v3022 = vunpack.c.l.b16 %v2844
        %v3023 = vunpack.c.h.b16 %v2844
        %v3024 = vunpack.c.l.b16 %v2845
        %v3025 = vunpack.c.h.b16 %v2845
        %v3026 = vunpack.c.l.b16 %v2846
        %v3027 = vunpack.c.h.b16 %v2846
        %v3028 = vunpack.c.l.b16 %v2847
        %v3029 = vunpack.c.h.b16 %v2847
        %v3030 = vunpack.c.l.b16 %v2848
        %v3031 = vunpack.c.h.b16 %v2848
        %v3032 = vunpack.c.l.b16 %v2849
        %v3033 = vunpack.c.h.b16 %v2849
        %v3034 = vunpack.c.l.b16 %v2850
        %v3035 = vunpack.c.h.b16 %v2850
        %v3036 = vunpack.c.l.b16 %v2851
        %v3037 = vunpack.c.h.b16 %v2851
        %v3038 = vunpack.c.l.b16 %v2852
        %v3039 = vunpack.c.h.b16 %v2852
        %v3040 = vunpack.c.l.b16 %v2853
        %v3041 = vunpack.c.h.b16 %v2853
        %v3042 = vunpack.c.l.b16 %v2854
        %v3043 = vunpack.c.h.b16 %v2854
        %v3044 = vunpack.c.l.b16 %v2855
        %v3045 = vunpack.c.h.b16 %v2855
        %v3046 = vunpack.c.l.b16 %v2856
        %v3047 = vunpack.c.h.b16 %v2856
        %v3048 = vunpack.c.l.b16 %v2857
        %v3049 = vunpack.c.h.b16 %v2857
        %v3050 = vunpack.c.l.b16 %v2858
        %v3051 = vunpack.c.h.b16 %v2858
        %v3052 = vunpack.c.l.b16 %v2859
        %v3053 = vunpack.c.h.b16 %v2859
        %v3054 = vunpack.c.l.b16 %v2860
        %v3055 = vunpack.c.h.b16 %v2860
        %v3056 = vunpack.c.l.b16 %v2861
        %v3057 = vunpack.c.h.b16 %v2861
        %v3058 = vunpack.c.l.b16 %v2862
        %v3059 = vunpack.c.h.b16 %v2862
        %v3060 = vunpack.c.l.b16 %v2863
        %v3061 = vunpack.c.h.b16 %v2863
        %v3062 = vunpack.c.l.b16 %v2864
        %v3063 = vunpack.c.h.b16 %v2864
        %v3064 = vunpack.c.l.b16 %v2865
        %v3065 = vunpack.c.h.b16 %v2865
        %v3066 = vunpack.c.l.b16 %v2866
        %v3067 = vunpack.c.h.b16 %v2866
        %v3068 = vunpack.c.l.b16 %v2867
        %v3069 = vunpack.c.h.b16 %v2867
        %v3070 = vunpack.c.l.b16 %v2868
        %v3071 = vunpack.c.h.b16 %v2868
        %v3072 = vunpack.c.l.b16 %v2869
        %v3073 = vunpack.c.h.b16 %v2869
        %v3074 = vunpack.c.l.b16 %v2870
        %v3075 = vunpack.c.h.b16 %v2870
        %v3076 = vunpack.c.l.b16 %v2871
        %v3077 = vunpack.c.h.b16 %v2871
        %v3078 = vunpack.c.l.b16 %v2872
        %v3079 = vunpack.c.h.b16 %v2872
        %v3080 = vunpack.c.l.b16 %v2873
        %v3081 = vunpack.c.h.b16 %v2873
        %v3082 = vunpack.c.l.b16 %v2874
        %v3083 = vunpack.c.h.b16 %v2874
        %v3084 = vunpack.c.l.b16 %v2875
        %v3085 = vunpack.c.h.b16 %v2875
        %v3086 = vunpack.c.l.b16 %v2876
        %v3087 = vunpack.c.h.b16 %v2876
        %v3088 = vunpack.c.l.b16 %v2877
        %v3089 = vunpack.c.h.b16 %v2877
        %v3090 = vunpack.c.l.b16 %v2878
        %v3091 = vunpack.c.h.b16 %v2878
        %v3092 = vunpack.c.l.b16 %v2879
        %v3093 = vunpack.c.h.b16 %v2879
        %v3094 = vpack.c.b16 %v2970, %v2966
        %v3095 = vpack.c.b16 %v2971, %v2967
        %v3096 = vpack.c.b16 %v2972, %v2968
        %v3097 = vpack.c.b16 %v2973, %v2969
        %v3098 = vpack.c.b16 %v2978, %v2974
        %v3099 = vpack.c.b16 %v2979, %v2975
        %v3100 = vpack.c.b16 %v2980, %v2976
        %v3101 = vpack.c.b16 %v2981, %v2977
        %v3102 = vpack.c.b16 %v2986, %v2982
        %v3103 = vpack.c.b16 %v2987, %v2983
        %v3104 = vpack.c.b16 %v2988, %v2984
        %v3105 = vpack.c.b16 %v2989, %v2985
        %v3106 = vpack.c.b16 %v2994, %v2990
        %v3107 = vpack.c.b16 %v2995, %v2991
        %v3108 = vpack.c.b16 %v2996, %v2992
        %v3109 = vpack.c.b16 %v2997, %v2993
        %v3110 = vpack.c.b16 %v3002, %v2998
        %v3111 = vpack.c.b16 %v3003, %v2999
        %v3112 = vpack.c.b16 %v3004, %v3000
        %v3113 = vpack.c.b16 %v3005, %v3001
        %v3114 = vpack.c.b16 %v3010, %v3006
        %v3115 = vpack.c.b16 %v3011, %v3007
        %v3116 = vpack.c.b16 %v3012, %v3008
        %v3117 = vpack.c.b16 %v3013, %v3009
        %v3118 = vpack.c.b16 %v3018, %v3014
        %v3119 = vpack.c.b16 %v3019, %v3015
        %v3120 = vpack.c.b16 %v3020, %v3016
        %v3121 = vpack.c.b16 %v3021, %v3017
        %v3122 = vpack.c.b16 %v3026, %v3022
        %v3123 = vpack.c.b16 %v3027, %v3023
        %v3124 = vpack.c.b16 %v3028, %v3024
        %v3125 = vpack.c.b16 %v3029, %v3025
        %v3126 = vpack.c.b16 %v3034, %v3030
        %v3127 = vpack.c.b16 %v3035, %v3031
        %v3128 = vpack.c.b16 %v3036, %v3032
        %v3129 = vpack.c.b16 %v3037, %v3033
        %v3130 = vpack.c.b16 %v3042, %v3038
        %v3131 = vpack.c.b16 %v3043, %v3039
        %v3132 = vpack.c.b16 %v3044, %v3040
        %v3133 = vpack.c.b16 %v3045, %v3041
        %v3134 = vpack.c.b16 %v3050, %v3046
        %v3135 = vpack.c.b16 %v3051, %v3047
        %v3136 = vpack.c.b16 %v3052, %v3048
        %v3137 = vpack.c.b16 %v3053, %v3049
        %v3138 = vpack.c.b16 %v3058, %v3054
        %v3139 = vpack.c.b16 %v3059, %v3055
        %v3140 = vpack.c.b16 %v3060, %v3056
        %v3141 = vpack.c.b16 %v3061, %v3057
        %v3142 = vpack.c.b16 %v3066, %v3062
        %v3143 = vpack.c.b16 %v3067, %v3063
        %v3144 = vpack.c.b16 %v3068, %v3064
        %v3145 = vpack.c.b16 %v3069, %v3065
        %v3146 = vpack.c.b16 %v3074, %v3070
        %v3147 = vpack.c.b16 %v3075, %v3071
        %v3148 = vpack.c.b16 %v3076, %v3072
        %v3149 = vpack.c.b16 %v3077, %v3073
        %v3150 = vpack.c.b16 %v3082, %v3078
        %v3151 = vpack.c.b16 %v3083, %v3079
        %v3152 = vpack.c.b16 %v3084, %v3080
        %v3153 = vpack.c.b16 %v3085, %v3081
        %v3154 = vpack.c.b16 %v3090, %v3086
        %v3155 = vpack.c.b16 %v3091, %v3087
        %v3156 = vpack.c.b16 %v3092, %v3088
        %v3157 = vpack.c.b16 %v3093, %v3089
        %3222 = vmatprep.subr.bf16.mxu0 %v3095
        %3223 = vmatpush1.bf16.msra.mxu0 %v3094
        %3224 = vmatprep.subr.bf16.mxu0 %v3099
        %3225 = vmatpush1.bf16.msra.mxu0 %v3098
        %3226 = vmatprep.subr.bf16.mxu0 %v3103
        %3227 = vmatpush1.bf16.msra.mxu0 %v3102
        %3228 = vmatprep.subr.bf16.mxu0 %v3107
        %3229 = vmatpush1.bf16.msra.mxu0 %v3106
        %3230 = vmatprep.subr.bf16.mxu0 %v3111
        %3231 = vmatpush1.bf16.msra.mxu0 %v3110
        %3232 = vmatprep.subr.bf16.mxu0 %v3115
        %3233 = vmatpush1.bf16.msra.mxu0 %v3114
        %3234 = vmatprep.subr.bf16.mxu0 %v3119
        %3235 = vmatpush1.bf16.msra.mxu0 %v3118
        %3236 = vmatprep.subr.bf16.mxu0 %v3123
        %3237 = vmatpush1.bf16.msra.mxu0 %v3122
        %3238 = vmatprep.subr.bf16.mxu0 %v3127
        %3239 = vmatpush1.bf16.msra.mxu0 %v3126
        %3240 = vmatprep.subr.bf16.mxu0 %v3131
        %3241 = vmatpush1.bf16.msra.mxu0 %v3130
        %3242 = vmatprep.subr.bf16.mxu0 %v3135
        %3243 = vmatpush1.bf16.msra.mxu0 %v3134
        %3244 = vmatprep.subr.bf16.mxu0 %v3139
        %3245 = vmatpush1.bf16.msra.mxu0 %v3138
        %3246 = vmatprep.subr.bf16.mxu0 %v3143
        %3247 = vmatpush1.bf16.msra.mxu0 %v3142
        %3248 = vmatprep.subr.bf16.mxu0 %v3147
        %3249 = vmatpush1.bf16.msra.mxu0 %v3146
        %3250 = vmatprep.subr.bf16.mxu0 %v3151
        %3251 = vmatpush1.bf16.msra.mxu0 %v3150
        %3252 = vmatprep.subr.bf16.mxu0 %v3155
        %3253 = vmatpush1.bf16.msra.mxu0 %v3154
        %3254 = vmatprep.mubr.bf16.mxu0 %v2815
        %3255 = vmatmul.mubr.bf16.gmra.mrb[0].mxu0 %v2814
        %v3256 = vpop.f32.mrb[0].mxu0
        %v3257 = vadd.f32 %v2885, %v3256
        %v3258 = vpop.f32.mrb[0].mxu0
        %v3259 = vadd.f32 %v2889, %v3258
        %v3260 = vpop.f32.mrb[0].mxu0
        %v3261 = vadd.f32 %v2885, %v3260
        %v3262 = vpop.f32.mrb[0].mxu0
        %v3263 = vadd.f32 %v2889, %v3262
        %3264 = vdwg.mxu0
        %3265 = vmatprep.subr.bf16.mxu0 %v3097
        %3266 = vmatpush1.bf16.msra.mxu0 %v3096
        %3267 = vmatprep.subr.bf16.mxu0 %v3101
        %3268 = vmatpush1.bf16.msra.mxu0 %v3100
        %3269 = vmatprep.subr.bf16.mxu0 %v3105
        %3270 = vmatpush1.bf16.msra.mxu0 %v3104
        %3271 = vmatprep.subr.bf16.mxu0 %v3109
        %3272 = vmatpush1.bf16.msra.mxu0 %v3108
        %3273 = vmatprep.subr.bf16.mxu0 %v3113
        %3274 = vmatpush1.bf16.msra.mxu0 %v3112
        %3275 = vmatprep.subr.bf16.mxu0 %v3117
        %3276 = vmatpush1.bf16.msra.mxu0 %v3116
        %3277 = vmatprep.subr.bf16.mxu0 %v3121
        %3278 = vmatpush1.bf16.msra.mxu0 %v3120
        %3279 = vmatprep.subr.bf16.mxu0 %v3125
        %3280 = vmatpush1.bf16.msra.mxu0 %v3124
        %3281 = vmatprep.subr.bf16.mxu0 %v3129
        %3282 = vmatpush1.bf16.msra.mxu0 %v3128
        %3283 = vmatprep.subr.bf16.mxu0 %v3133
        %3284 = vmatpush1.bf16.msra.mxu0 %v3132
        %3285 = vmatprep.subr.bf16.mxu0 %v3137
        %3286 = vmatpush1.bf16.msra.mxu0 %v3136
        %3287 = vmatprep.subr.bf16.mxu0 %v3141
        %3288 = vmatpush1.bf16.msra.mxu0 %v3140
        %3289 = vmatprep.subr.bf16.mxu0 %v3145
        %3290 = vmatpush1.bf16.msra.mxu0 %v3144
        %3291 = vmatprep.subr.bf16.mxu0 %v3149
        %3292 = vmatpush1.bf16.msra.mxu0 %v3148
        %3293 = vmatprep.subr.bf16.mxu0 %v3153
        %3294 = vmatpush1.bf16.msra.mxu0 %v3152
        %3295 = vmatprep.subr.bf16.mxu0 %v3157
        %3296 = vmatpush1.bf16.msra.mxu0 %v3156
        %3297 = vmatprep.mubr.bf16.mxu0 %v2815
        %3298 = vmatmul.mubr.bf16.gmra.mrb[0].mxu0 %v2814
        %v3299 = vpop.f32.mrb[0].mxu0
        %v3300 = vadd.f32 %v2893, %v3299
        %v3301 = vpop.f32.mrb[0].mxu0
        %v3302 = vadd.f32 %v2897, %v3301
        %v3303 = vpop.f32.mrb[0].mxu0
        %v3304 = vadd.f32 %v2893, %v3303
        %v3305 = vpop.f32.mrb[0].mxu0
        %v3306 = vadd.f32 %v2897, %v3305
        %3307 = vdwg.mxu0
        %vm3308 = vcmp.gt.f32.partialorder %v3257, 0.0
        %vm3309 = vcmp.gt.f32.partialorder %v3259, 0.0
        %vm3310 = vcmp.gt.f32.partialorder %v3300, 0.0
        %vm3311 = vcmp.gt.f32.partialorder %v3302, 0.0
        %vm3312 = vcmp.gt.f32.partialorder %v3261, 0.0
        %vm3313 = vcmp.gt.f32.partialorder %v3263, 0.0
        %vm3314 = vcmp.gt.f32.partialorder %v3304, 0.0
        %vm3315 = vcmp.gt.f32.partialorder %v3306, 0.0
        %v3316 = vmin.f32 %v3257, 0.0
        %v3317 = vmin.f32 %v3259, 0.0
        %v3318 = vmin.f32 %v3300, 0.0
        %v3319 = vmin.f32 %v3302, 0.0
        %v3320 = vmin.f32 %v3261, 0.0
        %v3321 = vmin.f32 %v3263, 0.0
        %v3322 = vmin.f32 %v3304, 0.0
        %v3323 = vmin.f32 %v3306, 0.0
        %v3324 = vmul.f32 %v3316, 1.442695
        %v3325 = vpow.pop %v3324
        %v3326 = vmul.f32 %v3317, 1.442695
        %v3327 = vpow.pop %v3326
        %v3328 = vmul.f32 %v3318, 1.442695
        %v3329 = vpow.pop %v3328
        %v3330 = vmul.f32 %v3319, 1.442695
        %v3331 = vpow.pop %v3330
        %v3332 = vmul.f32 %v3320, 1.442695
        %v3333 = vpow.pop %v3332
        %v3334 = vmul.f32 %v3321, 1.442695
        %v3335 = vpow.pop %v3334
        %v3336 = vmul.f32 %v3322, 1.442695
        %v3337 = vpow.pop %v3336
        %v3338 = vmul.f32 %v3323, 1.442695
        %v3339 = vpow.pop %v3338
        %v3340 = vsub.f32 %v3325, 1.0
        %v3341 = vsub.f32 %v3327, 1.0
        %v3342 = vsub.f32 %v3329, 1.0
        %v3343 = vsub.f32 %v3331, 1.0
        %v3344 = vsub.f32 %v3333, 1.0
        %v3345 = vsub.f32 %v3335, 1.0
        %v3346 = vsub.f32 %v3337, 1.0
        %v3347 = vsub.f32 %v3339, 1.0
        %v3348 = vsel %vm3308, %v3257, %v3340
        %v3349 = vsel %vm3309, %v3259, %v3341
        %v3350 = vsel %vm3310, %v3300, %v3342
        %v3351 = vsel %vm3311, %v3302, %v3343
        %v3352 = vsel %vm3312, %v3261, %v3344
        %v3353 = vsel %vm3313, %v3263, %v3345
        %v3354 = vsel %vm3314, %v3304, %v3346
        %v3355 = vsel %vm3315, %v3306, %v3347
        %v3356 = vpack.c.bf16 %v3352, %v3348
        %v3357 = vpack.c.bf16 %v3353, %v3349
        %v3358 = vpack.c.bf16 %v3354, %v3350
        %v3359 = vpack.c.bf16 %v3355, %v3351
        %v3360 = vld [vmem:[%s9] sm:$0xff]
        %v3361 = vld [vmem:[%s9 + $0x8] sm:$0xff]
        %v3362 = vld [vmem:[%s9 + $0x10] sm:$0xff]
        %v3363 = vld [vmem:[%s9 + $0x18] sm:$0xff]
        %v3364 = vld [vmem:[%s9 + $0x20] sm:$0xff]
        %v3365 = vld [vmem:[%s9 + $0x28] sm:$0xff]
        %v3366 = vld [vmem:[%s9 + $0x30] sm:$0xff]
        %v3367 = vld [vmem:[%s9 + $0x38] sm:$0xff]
        %v3368 = vld [vmem:[%s9 + $0x40] sm:$0xff]
        %v3369 = vld [vmem:[%s9 + $0x48] sm:$0xff]
        %v3370 = vld [vmem:[%s9 + $0x50] sm:$0xff]
        %v3371 = vld [vmem:[%s9 + $0x58] sm:$0xff]
        %v3372 = vld [vmem:[%s9 + $0x60] sm:$0xff]
        %v3373 = vld [vmem:[%s9 + $0x68] sm:$0xff]
        %v3374 = vld [vmem:[%s9 + $0x70] sm:$0xff]
        %v3375 = vld [vmem:[%s9 + $0x78] sm:$0xff]
        %v3376 = vld [vmem:[%s9 + $0x80] sm:$0xff]
        %v3377 = vld [vmem:[%s9 + $0x88] sm:$0xff]
        %v3378 = vld [vmem:[%s9 + $0x90] sm:$0xff]
        %v3379 = vld [vmem:[%s9 + $0x98] sm:$0xff]
        %v3380 = vld [vmem:[%s9 + $0xa0] sm:$0xff]
        %v3381 = vld [vmem:[%s9 + $0xa8] sm:$0xff]
        %v3382 = vld [vmem:[%s9 + $0xb0] sm:$0xff]
        %v3383 = vld [vmem:[%s9 + $0xb8] sm:$0xff]
        %v3384 = vld [vmem:[%s9 + $0xc0] sm:$0xff]
        %v3385 = vld [vmem:[%s9 + $0xc8] sm:$0xff]
        %v3386 = vld [vmem:[%s9 + $0xd0] sm:$0xff]
        %v3387 = vld [vmem:[%s9 + $0xd8] sm:$0xff]
        %v3388 = vld [vmem:[%s9 + $0xe0] sm:$0xff]
        %v3389 = vld [vmem:[%s9 + $0xe8] sm:$0xff]
        %v3390 = vld [vmem:[%s9 + $0xf0] sm:$0xff]
        %v3391 = vld [vmem:[%s9 + $0xf8] sm:$0xff]
        %v3392 = vld [vmem:[%s9 + $0x100] sm:$0xff]
        %v3393 = vld [vmem:[%s9 + $0x108] sm:$0xff]
        %v3394 = vld [vmem:[%s9 + $0x110] sm:$0xff]
        %v3395 = vld [vmem:[%s9 + $0x118] sm:$0xff]
        %v3396 = vld [vmem:[%s9 + $0x120] sm:$0xff]
        %v3397 = vld [vmem:[%s9 + $0x128] sm:$0xff]
        %v3398 = vld [vmem:[%s9 + $0x130] sm:$0xff]
        %v3399 = vld [vmem:[%s9 + $0x138] sm:$0xff]
        %v3400 = vld [vmem:[%s9 + $0x140] sm:$0xff]
        %v3401 = vld [vmem:[%s9 + $0x148] sm:$0xff]
        %v3402 = vld [vmem:[%s9 + $0x150] sm:$0xff]
        %v3403 = vld [vmem:[%s9 + $0x158] sm:$0xff]
        %v3404 = vld [vmem:[%s9 + $0x160] sm:$0xff]
        %v3405 = vld [vmem:[%s9 + $0x168] sm:$0xff]
        %v3406 = vld [vmem:[%s9 + $0x170] sm:$0xff]
        %v3407 = vld [vmem:[%s9 + $0x178] sm:$0xff]
        %v3408 = vld [vmem:[%s9 + $0x180] sm:$0xff]
        %v3409 = vld [vmem:[%s9 + $0x188] sm:$0xff]
        %v3410 = vld [vmem:[%s9 + $0x190] sm:$0xff]
        %v3411 = vld [vmem:[%s9 + $0x198] sm:$0xff]
        %v3412 = vld [vmem:[%s9 + $0x1a0] sm:$0xff]
        %v3413 = vld [vmem:[%s9 + $0x1a8] sm:$0xff]
        %v3414 = vld [vmem:[%s9 + $0x1b0] sm:$0xff]
        %v3415 = vld [vmem:[%s9 + $0x1b8] sm:$0xff]
        %v3416 = vld [vmem:[%s9 + $0x1c0] sm:$0xff]
        %v3417 = vld [vmem:[%s9 + $0x1c8] sm:$0xff]
        %v3418 = vld [vmem:[%s9 + $0x1d0] sm:$0xff]
        %v3419 = vld [vmem:[%s9 + $0x1d8] sm:$0xff]
        %v3420 = vld [vmem:[%s9 + $0x1e0] sm:$0xff]
        %v3421 = vld [vmem:[%s9 + $0x1e8] sm:$0xff]
        %v3422 = vld [vmem:[%s9 + $0x1f0] sm:$0xff]
        %v3423 = vld [vmem:[%s9 + $0x1f8] sm:$0xff]
        %v3424 = vld [vmem:[%s9 + $0x200] sm:$0xff]
        %v3425 = vld [vmem:[%s9 + $0x208] sm:$0xff]
        %v3426 = vld [vmem:[%s9 + $0x210] sm:$0xff]
        %v3427 = vld [vmem:[%s9 + $0x218] sm:$0xff]
        %v3428 = vld [vmem:[%s9 + $0x220] sm:$0xff]
        %v3429 = vld [vmem:[%s9 + $0x228] sm:$0xff]
        %v3430 = vld [vmem:[%s9 + $0x230] sm:$0xff]
        %v3431 = vld [vmem:[%s9 + $0x238] sm:$0xff]
        %v3432 = vld [vmem:[%s9 + $0x240] sm:$0xff]
        %v3433 = vld [vmem:[%s9 + $0x248] sm:$0xff]
        %v3434 = vld [vmem:[%s9 + $0x250] sm:$0xff]
        %v3435 = vld [vmem:[%s9 + $0x258] sm:$0xff]
        %v3436 = vld [vmem:[%s9 + $0x260] sm:$0xff]
        %v3437 = vld [vmem:[%s9 + $0x268] sm:$0xff]
        %v3438 = vld [vmem:[%s9 + $0x270] sm:$0xff]
        %v3439 = vld [vmem:[%s9 + $0x278] sm:$0xff]
        %v3440 = vld [vmem:[%s9 + $0x280] sm:$0xff]
        %v3441 = vld [vmem:[%s9 + $0x288] sm:$0xff]
        %v3442 = vld [vmem:[%s9 + $0x290] sm:$0xff]
        %v3443 = vld [vmem:[%s9 + $0x298] sm:$0xff]
        %v3444 = vld [vmem:[%s9 + $0x2a0] sm:$0xff]
        %v3445 = vld [vmem:[%s9 + $0x2a8] sm:$0xff]
        %v3446 = vld [vmem:[%s9 + $0x2b0] sm:$0xff]
        %v3447 = vld [vmem:[%s9 + $0x2b8] sm:$0xff]
        %v3448 = vld [vmem:[%s9 + $0x2c0] sm:$0xff]
        %v3449 = vld [vmem:[%s9 + $0x2c8] sm:$0xff]
        %v3450 = vld [vmem:[%s9 + $0x2d0] sm:$0xff]
        %v3451 = vld [vmem:[%s9 + $0x2d8] sm:$0xff]
        %v3452 = vld [vmem:[%s9 + $0x2e0] sm:$0xff]
        %v3453 = vld [vmem:[%s9 + $0x2e8] sm:$0xff]
        %v3454 = vld [vmem:[%s9 + $0x2f0] sm:$0xff]
        %v3455 = vld [vmem:[%s9 + $0x2f8] sm:$0xff]
        %v3456 = vld [vmem:[%s9 + $0x300] sm:$0xff]
        %v3457 = vld [vmem:[%s9 + $0x308] sm:$0xff]
        %v3458 = vld [vmem:[%s9 + $0x310] sm:$0xff]
        %v3459 = vld [vmem:[%s9 + $0x318] sm:$0xff]
        %v3460 = vld [vmem:[%s9 + $0x320] sm:$0xff]
        %v3461 = vld [vmem:[%s9 + $0x328] sm:$0xff]
        %v3462 = vld [vmem:[%s9 + $0x330] sm:$0xff]
        %v3463 = vld [vmem:[%s9 + $0x338] sm:$0xff]
        %v3464 = vld [vmem:[%s9 + $0x340] sm:$0xff]
        %v3465 = vld [vmem:[%s9 + $0x348] sm:$0xff]
        %v3466 = vld [vmem:[%s9 + $0x350] sm:$0xff]
        %v3467 = vld [vmem:[%s9 + $0x358] sm:$0xff]
        %v3468 = vld [vmem:[%s9 + $0x360] sm:$0xff]
        %v3469 = vld [vmem:[%s9 + $0x368] sm:$0xff]
        %v3470 = vld [vmem:[%s9 + $0x370] sm:$0xff]
        %v3471 = vld [vmem:[%s9 + $0x378] sm:$0xff]
        %v3472 = vld [vmem:[%s9 + $0x380] sm:$0xff]
        %v3473 = vld [vmem:[%s9 + $0x388] sm:$0xff]
        %v3474 = vld [vmem:[%s9 + $0x390] sm:$0xff]
        %v3475 = vld [vmem:[%s9 + $0x398] sm:$0xff]
        %v3476 = vld [vmem:[%s9 + $0x3a0] sm:$0xff]
        %v3477 = vld [vmem:[%s9 + $0x3a8] sm:$0xff]
        %v3478 = vld [vmem:[%s9 + $0x3b0] sm:$0xff]
        %v3479 = vld [vmem:[%s9 + $0x3b8] sm:$0xff]
        %v3480 = vld [vmem:[%s9 + $0x3c0] sm:$0xff]
        %v3481 = vld [vmem:[%s9 + $0x3c8] sm:$0xff]
        %v3482 = vld [vmem:[%s9 + $0x3d0] sm:$0xff]
        %v3483 = vld [vmem:[%s9 + $0x3d8] sm:$0xff]
        %v3484 = vld [vmem:[%s9 + $0x3e0] sm:$0xff]
        %v3485 = vld [vmem:[%s9 + $0x3e8] sm:$0xff]
        %v3486 = vld [vmem:[%s9 + $0x3f0] sm:$0xff]
        %v3487 = vld [vmem:[%s9 + $0x3f8] sm:$0xff]
        %v3488 = vld [vmem:[%s9 + $0x400] sm:$0xff]
        %v3489 = vld [vmem:[%s9 + $0x408] sm:$0xff]
        %v3490 = vld [vmem:[%s9 + $0x410] sm:$0xff]
        %v3491 = vld [vmem:[%s9 + $0x418] sm:$0xff]
        %v3492 = vld [vmem:[%s9 + $0x420] sm:$0xff]
        %v3493 = vld [vmem:[%s9 + $0x428] sm:$0xff]
        %v3494 = vld [vmem:[%s9 + $0x430] sm:$0xff]
        %v3495 = vld [vmem:[%s9 + $0x438] sm:$0xff]
        %v3496 = vld [vmem:[%s9 + $0x440] sm:$0xff]
        %v3497 = vld [vmem:[%s9 + $0x448] sm:$0xff]
        %v3498 = vld [vmem:[%s9 + $0x450] sm:$0xff]
        %v3499 = vld [vmem:[%s9 + $0x458] sm:$0xff]
        %v3500 = vld [vmem:[%s9 + $0x460] sm:$0xff]
        %v3501 = vld [vmem:[%s9 + $0x468] sm:$0xff]
        %v3502 = vld [vmem:[%s9 + $0x470] sm:$0xff]
        %v3503 = vld [vmem:[%s9 + $0x478] sm:$0xff]
        %v3504 = vld [vmem:[%s9 + $0x480] sm:$0xff]
        %v3505 = vld [vmem:[%s9 + $0x488] sm:$0xff]
        %v3506 = vld [vmem:[%s9 + $0x490] sm:$0xff]
        %v3507 = vld [vmem:[%s9 + $0x498] sm:$0xff]
        %v3508 = vld [vmem:[%s9 + $0x4a0] sm:$0xff]
        %v3509 = vld [vmem:[%s9 + $0x4a8] sm:$0xff]
        %v3510 = vld [vmem:[%s9 + $0x4b0] sm:$0xff]
        %v3511 = vld [vmem:[%s9 + $0x4b8] sm:$0xff]
        %v3512 = vld [vmem:[%s9 + $0x4c0] sm:$0xff]
        %v3513 = vld [vmem:[%s9 + $0x4c8] sm:$0xff]
        %v3514 = vld [vmem:[%s9 + $0x4d0] sm:$0xff]
        %v3515 = vld [vmem:[%s9 + $0x4d8] sm:$0xff]
        %v3516 = vld [vmem:[%s9 + $0x4e0] sm:$0xff]
        %v3517 = vld [vmem:[%s9 + $0x4e8] sm:$0xff]
        %v3518 = vld [vmem:[%s9 + $0x4f0] sm:$0xff]
        %v3519 = vld [vmem:[%s9 + $0x4f8] sm:$0xff]
        %v3520 = vld [vmem:[%s9 + $0x500] sm:$0xff]
        %v3521 = vld [vmem:[%s9 + $0x508] sm:$0xff]
        %v3522 = vld [vmem:[%s9 + $0x510] sm:$0xff]
        %v3523 = vld [vmem:[%s9 + $0x518] sm:$0xff]
        %v3524 = vld [vmem:[%s9 + $0x520] sm:$0xff]
        %v3525 = vld [vmem:[%s9 + $0x528] sm:$0xff]
        %v3526 = vld [vmem:[%s9 + $0x530] sm:$0xff]
        %v3527 = vld [vmem:[%s9 + $0x538] sm:$0xff]
        %v3528 = vld [vmem:[%s9 + $0x540] sm:$0xff]
        %v3529 = vld [vmem:[%s9 + $0x548] sm:$0xff]
        %v3530 = vld [vmem:[%s9 + $0x550] sm:$0xff]
        %v3531 = vld [vmem:[%s9 + $0x558] sm:$0xff]
        %v3532 = vld [vmem:[%s9 + $0x560] sm:$0xff]
        %v3533 = vld [vmem:[%s9 + $0x568] sm:$0xff]
        %v3534 = vld [vmem:[%s9 + $0x570] sm:$0xff]
        %v3535 = vld [vmem:[%s9 + $0x578] sm:$0xff]
        %v3536 = vld [vmem:[%s9 + $0x580] sm:$0xff]
        %v3537 = vld [vmem:[%s9 + $0x588] sm:$0xff]
        %v3538 = vld [vmem:[%s9 + $0x590] sm:$0xff]
        %v3539 = vld [vmem:[%s9 + $0x598] sm:$0xff]
        %v3540 = vld [vmem:[%s9 + $0x5a0] sm:$0xff]
        %v3541 = vld [vmem:[%s9 + $0x5a8] sm:$0xff]
        %v3542 = vld [vmem:[%s9 + $0x5b0] sm:$0xff]
        %v3543 = vld [vmem:[%s9 + $0x5b8] sm:$0xff]
        %v3544 = vld [vmem:[%s9 + $0x5c0] sm:$0xff]
        %v3545 = vld [vmem:[%s9 + $0x5c8] sm:$0xff]
        %v3546 = vld [vmem:[%s9 + $0x5d0] sm:$0xff]
        %v3547 = vld [vmem:[%s9 + $0x5d8] sm:$0xff]
        %v3548 = vld [vmem:[%s9 + $0x5e0] sm:$0xff]
        %v3549 = vld [vmem:[%s9 + $0x5e8] sm:$0xff]
        %v3550 = vld [vmem:[%s9 + $0x5f0] sm:$0xff]
        %v3551 = vld [vmem:[%s9 + $0x5f8] sm:$0xff]
        %v3552 = vld [vmem:[%s9 + $0x600] sm:$0xff]
        %v3553 = vld [vmem:[%s9 + $0x608] sm:$0xff]
        %v3554 = vld [vmem:[%s9 + $0x610] sm:$0xff]
        %v3555 = vld [vmem:[%s9 + $0x618] sm:$0xff]
        %v3556 = vld [vmem:[%s9 + $0x620] sm:$0xff]
        %v3557 = vld [vmem:[%s9 + $0x628] sm:$0xff]
        %v3558 = vld [vmem:[%s9 + $0x630] sm:$0xff]
        %v3559 = vld [vmem:[%s9 + $0x638] sm:$0xff]
        %v3560 = vld [vmem:[%s9 + $0x640] sm:$0xff]
        %v3561 = vld [vmem:[%s9 + $0x648] sm:$0xff]
        %v3562 = vld [vmem:[%s9 + $0x650] sm:$0xff]
        %v3563 = vld [vmem:[%s9 + $0x658] sm:$0xff]
        %v3564 = vld [vmem:[%s9 + $0x660] sm:$0xff]
        %v3565 = vld [vmem:[%s9 + $0x668] sm:$0xff]
        %v3566 = vld [vmem:[%s9 + $0x670] sm:$0xff]
        %v3567 = vld [vmem:[%s9 + $0x678] sm:$0xff]
        %v3568 = vld [vmem:[%s9 + $0x680] sm:$0xff]
        %v3569 = vld [vmem:[%s9 + $0x688] sm:$0xff]
        %v3570 = vld [vmem:[%s9 + $0x690] sm:$0xff]
        %v3571 = vld [vmem:[%s9 + $0x698] sm:$0xff]
        %v3572 = vld [vmem:[%s9 + $0x6a0] sm:$0xff]
        %v3573 = vld [vmem:[%s9 + $0x6a8] sm:$0xff]
        %v3574 = vld [vmem:[%s9 + $0x6b0] sm:$0xff]
        %v3575 = vld [vmem:[%s9 + $0x6b8] sm:$0xff]
        %v3576 = vld [vmem:[%s9 + $0x6c0] sm:$0xff]
        %v3577 = vld [vmem:[%s9 + $0x6c8] sm:$0xff]
        %v3578 = vld [vmem:[%s9 + $0x6d0] sm:$0xff]
        %v3579 = vld [vmem:[%s9 + $0x6d8] sm:$0xff]
        %v3580 = vld [vmem:[%s9 + $0x6e0] sm:$0xff]
        %v3581 = vld [vmem:[%s9 + $0x6e8] sm:$0xff]
        %v3582 = vld [vmem:[%s9 + $0x6f0] sm:$0xff]
        %v3583 = vld [vmem:[%s9 + $0x6f8] sm:$0xff]
        %v3584 = vld [vmem:[%s9 + $0x700] sm:$0xff]
        %v3585 = vld [vmem:[%s9 + $0x708] sm:$0xff]
        %v3586 = vld [vmem:[%s9 + $0x710] sm:$0xff]
        %v3587 = vld [vmem:[%s9 + $0x718] sm:$0xff]
        %v3588 = vld [vmem:[%s9 + $0x720] sm:$0xff]
        %v3589 = vld [vmem:[%s9 + $0x728] sm:$0xff]
        %v3590 = vld [vmem:[%s9 + $0x730] sm:$0xff]
        %v3591 = vld [vmem:[%s9 + $0x738] sm:$0xff]
        %v3592 = vld [vmem:[%s9 + $0x740] sm:$0xff]
        %v3593 = vld [vmem:[%s9 + $0x748] sm:$0xff]
        %v3594 = vld [vmem:[%s9 + $0x750] sm:$0xff]
        %v3595 = vld [vmem:[%s9 + $0x758] sm:$0xff]
        %v3596 = vld [vmem:[%s9 + $0x760] sm:$0xff]
        %v3597 = vld [vmem:[%s9 + $0x768] sm:$0xff]
        %v3598 = vld [vmem:[%s9 + $0x770] sm:$0xff]
        %v3599 = vld [vmem:[%s9 + $0x778] sm:$0xff]
        %v3600 = vld [vmem:[%s9 + $0x780] sm:$0xff]
        %v3601 = vld [vmem:[%s9 + $0x788] sm:$0xff]
        %v3602 = vld [vmem:[%s9 + $0x790] sm:$0xff]
        %v3603 = vld [vmem:[%s9 + $0x798] sm:$0xff]
        %v3604 = vld [vmem:[%s9 + $0x7a0] sm:$0xff]
        %v3605 = vld [vmem:[%s9 + $0x7a8] sm:$0xff]
        %v3606 = vld [vmem:[%s9 + $0x7b0] sm:$0xff]
        %v3607 = vld [vmem:[%s9 + $0x7b8] sm:$0xff]
        %v3608 = vld [vmem:[%s9 + $0x7c0] sm:$0xff]
        %v3609 = vld [vmem:[%s9 + $0x7c8] sm:$0xff]
        %v3610 = vld [vmem:[%s9 + $0x7d0] sm:$0xff]
        %v3611 = vld [vmem:[%s9 + $0x7d8] sm:$0xff]
        %v3612 = vld [vmem:[%s9 + $0x7e0] sm:$0xff]
        %v3613 = vld [vmem:[%s9 + $0x7e8] sm:$0xff]
        %v3614 = vld [vmem:[%s9 + $0x7f0] sm:$0xff]
        %v3615 = vld [vmem:[%s9 + $0x7f8] sm:$0xff]
        %v3616 = vld [vmem:[%s10] sm:$0xff]
        %v3618 = vlaneseq
        %v3619 = vshrl.u32 %v3618, 7
        %v3620 = vsub.s32 0, %v3619
        %v3621 = vrot.slane %v3616, %v3620
        %v3622 = vlaneseq
        %v3623 = vshrl.u32 %v3622, 7
        %v3624 = vsub.s32 1, %v3623
        %v3625 = vrot.slane %v3616, %v3624
        %v3626 = vlaneseq
        %v3627 = vshrl.u32 %v3626, 7
        %v3628 = vsub.s32 2, %v3627
        %v3629 = vrot.slane %v3616, %v3628
        %v3630 = vlaneseq
        %v3631 = vshrl.u32 %v3630, 7
        %v3632 = vsub.s32 3, %v3631
        %v3633 = vrot.slane %v3616, %v3632
        %v3634 = vlaneseq
        %v3635 = vshrl.u32 %v3634, 7
        %v3636 = vsub.s32 4, %v3635
        %v3637 = vrot.slane %v3616, %v3636
        %v3638 = vlaneseq
        %v3639 = vshrl.u32 %v3638, 7
        %v3640 = vsub.s32 5, %v3639
        %v3641 = vrot.slane %v3616, %v3640
        %v3642 = vlaneseq
        %v3643 = vshrl.u32 %v3642, 7
        %v3644 = vsub.s32 6, %v3643
        %v3645 = vrot.slane %v3616, %v3644
        %v3646 = vlaneseq
        %v3647 = vshrl.u32 %v3646, 7
        %v3648 = vsub.s32 7, %v3647
        %v3649 = vrot.slane %v3616, %v3648
        %v3914 = vunpack.c.l.b16 %v3360
        %v3915 = vunpack.c.h.b16 %v3360
        %v3916 = vunpack.c.l.b16 %v3361
        %v3917 = vunpack.c.h.b16 %v3361
        %v3918 = vunpack.c.l.b16 %v3362
        %v3919 = vunpack.c.h.b16 %v3362
        %v3920 = vunpack.c.l.b16 %v3363
        %v3921 = vunpack.c.h.b16 %v3363
        %v3922 = vunpack.c.l.b16 %v3364
        %v3923 = vunpack.c.h.b16 %v3364
        %v3924 = vunpack.c.l.b16 %v3365
        %v3925 = vunpack.c.h.b16 %v3365
        %v3926 = vunpack.c.l.b16 %v3366
        %v3927 = vunpack.c.h.b16 %v3366
        %v3928 = vunpack.c.l.b16 %v3367
        %v3929 = vunpack.c.h.b16 %v3367
        %v3930 = vunpack.c.l.b16 %v3368
        %v3931 = vunpack.c.h.b16 %v3368
        %v3932 = vunpack.c.l.b16 %v3369
        %v3933 = vunpack.c.h.b16 %v3369
        %v3934 = vunpack.c.l.b16 %v3370
        %v3935 = vunpack.c.h.b16 %v3370
        %v3936 = vunpack.c.l.b16 %v3371
        %v3937 = vunpack.c.h.b16 %v3371
        %v3938 = vunpack.c.l.b16 %v3372
        %v3939 = vunpack.c.h.b16 %v3372
        %v3940 = vunpack.c.l.b16 %v3373
        %v3941 = vunpack.c.h.b16 %v3373
        %v3942 = vunpack.c.l.b16 %v3374
        %v3943 = vunpack.c.h.b16 %v3374
        %v3944 = vunpack.c.l.b16 %v3375
        %v3945 = vunpack.c.h.b16 %v3375
        %v3946 = vunpack.c.l.b16 %v3376
        %v3947 = vunpack.c.h.b16 %v3376
        %v3948 = vunpack.c.l.b16 %v3377
        %v3949 = vunpack.c.h.b16 %v3377
        %v3950 = vunpack.c.l.b16 %v3378
        %v3951 = vunpack.c.h.b16 %v3378
        %v3952 = vunpack.c.l.b16 %v3379
        %v3953 = vunpack.c.h.b16 %v3379
        %v3954 = vunpack.c.l.b16 %v3380
        %v3955 = vunpack.c.h.b16 %v3380
        %v3956 = vunpack.c.l.b16 %v3381
        %v3957 = vunpack.c.h.b16 %v3381
        %v3958 = vunpack.c.l.b16 %v3382
        %v3959 = vunpack.c.h.b16 %v3382
        %v3960 = vunpack.c.l.b16 %v3383
        %v3961 = vunpack.c.h.b16 %v3383
        %v3962 = vunpack.c.l.b16 %v3384
        %v3963 = vunpack.c.h.b16 %v3384
        %v3964 = vunpack.c.l.b16 %v3385
        %v3965 = vunpack.c.h.b16 %v3385
        %v3966 = vunpack.c.l.b16 %v3386
        %v3967 = vunpack.c.h.b16 %v3386
        %v3968 = vunpack.c.l.b16 %v3387
        %v3969 = vunpack.c.h.b16 %v3387
        %v3970 = vunpack.c.l.b16 %v3388
        %v3971 = vunpack.c.h.b16 %v3388
        %v3972 = vunpack.c.l.b16 %v3389
        %v3973 = vunpack.c.h.b16 %v3389
        %v3974 = vunpack.c.l.b16 %v3390
        %v3975 = vunpack.c.h.b16 %v3390
        %v3976 = vunpack.c.l.b16 %v3391
        %v3977 = vunpack.c.h.b16 %v3391
        %v3978 = vunpack.c.l.b16 %v3392
        %v3979 = vunpack.c.h.b16 %v3392
        %v3980 = vunpack.c.l.b16 %v3393
        %v3981 = vunpack.c.h.b16 %v3393
        %v3982 = vunpack.c.l.b16 %v3394
        %v3983 = vunpack.c.h.b16 %v3394
        %v3984 = vunpack.c.l.b16 %v3395
        %v3985 = vunpack.c.h.b16 %v3395
        %v3986 = vunpack.c.l.b16 %v3396
        %v3987 = vunpack.c.h.b16 %v3396
        %v3988 = vunpack.c.l.b16 %v3397
        %v3989 = vunpack.c.h.b16 %v3397
        %v3990 = vunpack.c.l.b16 %v3398
        %v3991 = vunpack.c.h.b16 %v3398
        %v3992 = vunpack.c.l.b16 %v3399
        %v3993 = vunpack.c.h.b16 %v3399
        %v3994 = vunpack.c.l.b16 %v3400
        %v3995 = vunpack.c.h.b16 %v3400
        %v3996 = vunpack.c.l.b16 %v3401
        %v3997 = vunpack.c.h.b16 %v3401
        %v3998 = vunpack.c.l.b16 %v3402
        %v3999 = vunpack.c.h.b16 %v3402
        %v4000 = vunpack.c.l.b16 %v3403
        %v4001 = vunpack.c.h.b16 %v3403
        %v4002 = vunpack.c.l.b16 %v3404
        %v4003 = vunpack.c.h.b16 %v3404
        %v4004 = vunpack.c.l.b16 %v3405
        %v4005 = vunpack.c.h.b16 %v3405
        %v4006 = vunpack.c.l.b16 %v3406
        %v4007 = vunpack.c.h.b16 %v3406
        %v4008 = vunpack.c.l.b16 %v3407
        %v4009 = vunpack.c.h.b16 %v3407
        %v4010 = vunpack.c.l.b16 %v3408
        %v4011 = vunpack.c.h.b16 %v3408
        %v4012 = vunpack.c.l.b16 %v3409
        %v4013 = vunpack.c.h.b16 %v3409
        %v4014 = vunpack.c.l.b16 %v3410
        %v4015 = vunpack.c.h.b16 %v3410
        %v4016 = vunpack.c.l.b16 %v3411
        %v4017 = vunpack.c.h.b16 %v3411
        %v4018 = vunpack.c.l.b16 %v3412
        %v4019 = vunpack.c.h.b16 %v3412
        %v4020 = vunpack.c.l.b16 %v3413
        %v4021 = vunpack.c.h.b16 %v3413
        %v4022 = vunpack.c.l.b16 %v3414
        %v4023 = vunpack.c.h.b16 %v3414
        %v4024 = vunpack.c.l.b16 %v3415
        %v4025 = vunpack.c.h.b16 %v3415
        %v4026 = vunpack.c.l.b16 %v3416
        %v4027 = vunpack.c.h.b16 %v3416
        %v4028 = vunpack.c.l.b16 %v3417
        %v4029 = vunpack.c.h.b16 %v3417
        %v4030 = vunpack.c.l.b16 %v3418
        %v4031 = vunpack.c.h.b16 %v3418
        %v4032 = vunpack.c.l.b16 %v3419
        %v4033 = vunpack.c.h.b16 %v3419
        %v4034 = vunpack.c.l.b16 %v3420
        %v4035 = vunpack.c.h.b16 %v3420
        %v4036 = vunpack.c.l.b16 %v3421
        %v4037 = vunpack.c.h.b16 %v3421
        %v4038 = vunpack.c.l.b16 %v3422
        %v4039 = vunpack.c.h.b16 %v3422
        %v4040 = vunpack.c.l.b16 %v3423
        %v4041 = vunpack.c.h.b16 %v3423
        %v4042 = vunpack.c.l.b16 %v3424
        %v4043 = vunpack.c.h.b16 %v3424
        %v4044 = vunpack.c.l.b16 %v3425
        %v4045 = vunpack.c.h.b16 %v3425
        %v4046 = vunpack.c.l.b16 %v3426
        %v4047 = vunpack.c.h.b16 %v3426
        %v4048 = vunpack.c.l.b16 %v3427
        %v4049 = vunpack.c.h.b16 %v3427
        %v4050 = vunpack.c.l.b16 %v3428
        %v4051 = vunpack.c.h.b16 %v3428
        %v4052 = vunpack.c.l.b16 %v3429
        %v4053 = vunpack.c.h.b16 %v3429
        %v4054 = vunpack.c.l.b16 %v3430
        %v4055 = vunpack.c.h.b16 %v3430
        %v4056 = vunpack.c.l.b16 %v3431
        %v4057 = vunpack.c.h.b16 %v3431
        %v4058 = vunpack.c.l.b16 %v3432
        %v4059 = vunpack.c.h.b16 %v3432
        %v4060 = vunpack.c.l.b16 %v3433
        %v4061 = vunpack.c.h.b16 %v3433
        %v4062 = vunpack.c.l.b16 %v3434
        %v4063 = vunpack.c.h.b16 %v3434
        %v4064 = vunpack.c.l.b16 %v3435
        %v4065 = vunpack.c.h.b16 %v3435
        %v4066 = vunpack.c.l.b16 %v3436
        %v4067 = vunpack.c.h.b16 %v3436
        %v4068 = vunpack.c.l.b16 %v3437
        %v4069 = vunpack.c.h.b16 %v3437
        %v4070 = vunpack.c.l.b16 %v3438
        %v4071 = vunpack.c.h.b16 %v3438
        %v4072 = vunpack.c.l.b16 %v3439
        %v4073 = vunpack.c.h.b16 %v3439
        %v4074 = vunpack.c.l.b16 %v3440
        %v4075 = vunpack.c.h.b16 %v3440
        %v4076 = vunpack.c.l.b16 %v3441
        %v4077 = vunpack.c.h.b16 %v3441
        %v4078 = vunpack.c.l.b16 %v3442
        %v4079 = vunpack.c.h.b16 %v3442
        %v4080 = vunpack.c.l.b16 %v3443
        %v4081 = vunpack.c.h.b16 %v3443
        %v4082 = vunpack.c.l.b16 %v3444
        %v4083 = vunpack.c.h.b16 %v3444
        %v4084 = vunpack.c.l.b16 %v3445
        %v4085 = vunpack.c.h.b16 %v3445
        %v4086 = vunpack.c.l.b16 %v3446
        %v4087 = vunpack.c.h.b16 %v3446
        %v4088 = vunpack.c.l.b16 %v3447
        %v4089 = vunpack.c.h.b16 %v3447
        %v4090 = vunpack.c.l.b16 %v3448
        %v4091 = vunpack.c.h.b16 %v3448
        %v4092 = vunpack.c.l.b16 %v3449
        %v4093 = vunpack.c.h.b16 %v3449
        %v4094 = vunpack.c.l.b16 %v3450
        %v4095 = vunpack.c.h.b16 %v3450
        %v4096 = vunpack.c.l.b16 %v3451
        %v4097 = vunpack.c.h.b16 %v3451
        %v4098 = vunpack.c.l.b16 %v3452
        %v4099 = vunpack.c.h.b16 %v3452
        %v4100 = vunpack.c.l.b16 %v3453
        %v4101 = vunpack.c.h.b16 %v3453
        %v4102 = vunpack.c.l.b16 %v3454
        %v4103 = vunpack.c.h.b16 %v3454
        %v4104 = vunpack.c.l.b16 %v3455
        %v4105 = vunpack.c.h.b16 %v3455
        %v4106 = vunpack.c.l.b16 %v3456
        %v4107 = vunpack.c.h.b16 %v3456
        %v4108 = vunpack.c.l.b16 %v3457
        %v4109 = vunpack.c.h.b16 %v3457
        %v4110 = vunpack.c.l.b16 %v3458
        %v4111 = vunpack.c.h.b16 %v3458
        %v4112 = vunpack.c.l.b16 %v3459
        %v4113 = vunpack.c.h.b16 %v3459
        %v4114 = vunpack.c.l.b16 %v3460
        %v4115 = vunpack.c.h.b16 %v3460
        %v4116 = vunpack.c.l.b16 %v3461
        %v4117 = vunpack.c.h.b16 %v3461
        %v4118 = vunpack.c.l.b16 %v3462
        %v4119 = vunpack.c.h.b16 %v3462
        %v4120 = vunpack.c.l.b16 %v3463
        %v4121 = vunpack.c.h.b16 %v3463
        %v4122 = vunpack.c.l.b16 %v3464
        %v4123 = vunpack.c.h.b16 %v3464
        %v4124 = vunpack.c.l.b16 %v3465
        %v4125 = vunpack.c.h.b16 %v3465
        %v4126 = vunpack.c.l.b16 %v3466
        %v4127 = vunpack.c.h.b16 %v3466
        %v4128 = vunpack.c.l.b16 %v3467
        %v4129 = vunpack.c.h.b16 %v3467
        %v4130 = vunpack.c.l.b16 %v3468
        %v4131 = vunpack.c.h.b16 %v3468
        %v4132 = vunpack.c.l.b16 %v3469
        %v4133 = vunpack.c.h.b16 %v3469
        %v4134 = vunpack.c.l.b16 %v3470
        %v4135 = vunpack.c.h.b16 %v3470
        %v4136 = vunpack.c.l.b16 %v3471
        %v4137 = vunpack.c.h.b16 %v3471
        %v4138 = vunpack.c.l.b16 %v3472
        %v4139 = vunpack.c.h.b16 %v3472
        %v4140 = vunpack.c.l.b16 %v3473
        %v4141 = vunpack.c.h.b16 %v3473
        %v4142 = vunpack.c.l.b16 %v3474
        %v4143 = vunpack.c.h.b16 %v3474
        %v4144 = vunpack.c.l.b16 %v3475
        %v4145 = vunpack.c.h.b16 %v3475
        %v4146 = vunpack.c.l.b16 %v3476
        %v4147 = vunpack.c.h.b16 %v3476
        %v4148 = vunpack.c.l.b16 %v3477
        %v4149 = vunpack.c.h.b16 %v3477
        %v4150 = vunpack.c.l.b16 %v3478
        %v4151 = vunpack.c.h.b16 %v3478
        %v4152 = vunpack.c.l.b16 %v3479
        %v4153 = vunpack.c.h.b16 %v3479
        %v4154 = vunpack.c.l.b16 %v3480
        %v4155 = vunpack.c.h.b16 %v3480
        %v4156 = vunpack.c.l.b16 %v3481
        %v4157 = vunpack.c.h.b16 %v3481
        %v4158 = vunpack.c.l.b16 %v3482
        %v4159 = vunpack.c.h.b16 %v3482
        %v4160 = vunpack.c.l.b16 %v3483
        %v4161 = vunpack.c.h.b16 %v3483
        %v4162 = vunpack.c.l.b16 %v3484
        %v4163 = vunpack.c.h.b16 %v3484
        %v4164 = vunpack.c.l.b16 %v3485
        %v4165 = vunpack.c.h.b16 %v3485
        %v4166 = vunpack.c.l.b16 %v3486
        %v4167 = vunpack.c.h.b16 %v3486
        %v4168 = vunpack.c.l.b16 %v3487
        %v4169 = vunpack.c.h.b16 %v3487
        %v4170 = vunpack.c.l.b16 %v3488
        %v4171 = vunpack.c.h.b16 %v3488
        %v4172 = vunpack.c.l.b16 %v3489
        %v4173 = vunpack.c.h.b16 %v3489
        %v4174 = vunpack.c.l.b16 %v3490
        %v4175 = vunpack.c.h.b16 %v3490
        %v4176 = vunpack.c.l.b16 %v3491
        %v4177 = vunpack.c.h.b16 %v3491
        %v4178 = vunpack.c.l.b16 %v3492
        %v4179 = vunpack.c.h.b16 %v3492
        %v4180 = vunpack.c.l.b16 %v3493
        %v4181 = vunpack.c.h.b16 %v3493
        %v4182 = vunpack.c.l.b16 %v3494
        %v4183 = vunpack.c.h.b16 %v3494
        %v4184 = vunpack.c.l.b16 %v3495
        %v4185 = vunpack.c.h.b16 %v3495
        %v4186 = vunpack.c.l.b16 %v3496
        %v4187 = vunpack.c.h.b16 %v3496
        %v4188 = vunpack.c.l.b16 %v3497
        %v4189 = vunpack.c.h.b16 %v3497
        %v4190 = vunpack.c.l.b16 %v3498
        %v4191 = vunpack.c.h.b16 %v3498
        %v4192 = vunpack.c.l.b16 %v3499
        %v4193 = vunpack.c.h.b16 %v3499
        %v4194 = vunpack.c.l.b16 %v3500
        %v4195 = vunpack.c.h.b16 %v3500
        %v4196 = vunpack.c.l.b16 %v3501
        %v4197 = vunpack.c.h.b16 %v3501
        %v4198 = vunpack.c.l.b16 %v3502
        %v4199 = vunpack.c.h.b16 %v3502
        %v4200 = vunpack.c.l.b16 %v3503
        %v4201 = vunpack.c.h.b16 %v3503
        %v4202 = vunpack.c.l.b16 %v3504
        %v4203 = vunpack.c.h.b16 %v3504
        %v4204 = vunpack.c.l.b16 %v3505
        %v4205 = vunpack.c.h.b16 %v3505
        %v4206 = vunpack.c.l.b16 %v3506
        %v4207 = vunpack.c.h.b16 %v3506
        %v4208 = vunpack.c.l.b16 %v3507
        %v4209 = vunpack.c.h.b16 %v3507
        %v4210 = vunpack.c.l.b16 %v3508
        %v4211 = vunpack.c.h.b16 %v3508
        %v4212 = vunpack.c.l.b16 %v3509
        %v4213 = vunpack.c.h.b16 %v3509
        %v4214 = vunpack.c.l.b16 %v3510
        %v4215 = vunpack.c.h.b16 %v3510
        %v4216 = vunpack.c.l.b16 %v3511
        %v4217 = vunpack.c.h.b16 %v3511
        %v4218 = vunpack.c.l.b16 %v3512
        %v4219 = vunpack.c.h.b16 %v3512
        %v4220 = vunpack.c.l.b16 %v3513
        %v4221 = vunpack.c.h.b16 %v3513
        %v4222 = vunpack.c.l.b16 %v3514
        %v4223 = vunpack.c.h.b16 %v3514
        %v4224 = vunpack.c.l.b16 %v3515
        %v4225 = vunpack.c.h.b16 %v3515
        %v4226 = vunpack.c.l.b16 %v3516
        %v4227 = vunpack.c.h.b16 %v3516
        %v4228 = vunpack.c.l.b16 %v3517
        %v4229 = vunpack.c.h.b16 %v3517
        %v4230 = vunpack.c.l.b16 %v3518
        %v4231 = vunpack.c.h.b16 %v3518
        %v4232 = vunpack.c.l.b16 %v3519
        %v4233 = vunpack.c.h.b16 %v3519
        %v4234 = vunpack.c.l.b16 %v3520
        %v4235 = vunpack.c.h.b16 %v3520
        %v4236 = vunpack.c.l.b16 %v3521
        %v4237 = vunpack.c.h.b16 %v3521
        %v4238 = vunpack.c.l.b16 %v3522
        %v4239 = vunpack.c.h.b16 %v3522
        %v4240 = vunpack.c.l.b16 %v3523
        %v4241 = vunpack.c.h.b16 %v3523
        %v4242 = vunpack.c.l.b16 %v3524
        %v4243 = vunpack.c.h.b16 %v3524
        %v4244 = vunpack.c.l.b16 %v3525
        %v4245 = vunpack.c.h.b16 %v3525
        %v4246 = vunpack.c.l.b16 %v3526
        %v4247 = vunpack.c.h.b16 %v3526
        %v4248 = vunpack.c.l.b16 %v3527
        %v4249 = vunpack.c.h.b16 %v3527
        %v4250 = vunpack.c.l.b16 %v3528
        %v4251 = vunpack.c.h.b16 %v3528
        %v4252 = vunpack.c.l.b16 %v3529
        %v4253 = vunpack.c.h.b16 %v3529
        %v4254 = vunpack.c.l.b16 %v3530
        %v4255 = vunpack.c.h.b16 %v3530
        %v4256 = vunpack.c.l.b16 %v3531
        %v4257 = vunpack.c.h.b16 %v3531
        %v4258 = vunpack.c.l.b16 %v3532
        %v4259 = vunpack.c.h.b16 %v3532
        %v4260 = vunpack.c.l.b16 %v3533
        %v4261 = vunpack.c.h.b16 %v3533
        %v4262 = vunpack.c.l.b16 %v3534
        %v4263 = vunpack.c.h.b16 %v3534
        %v4264 = vunpack.c.l.b16 %v3535
        %v4265 = vunpack.c.h.b16 %v3535
        %v4266 = vunpack.c.l.b16 %v3536
        %v4267 = vunpack.c.h.b16 %v3536
        %v4268 = vunpack.c.l.b16 %v3537
        %v4269 = vunpack.c.h.b16 %v3537
        %v4270 = vunpack.c.l.b16 %v3538
        %v4271 = vunpack.c.h.b16 %v3538
        %v4272 = vunpack.c.l.b16 %v3539
        %v4273 = vunpack.c.h.b16 %v3539
        %v4274 = vunpack.c.l.b16 %v3540
        %v4275 = vunpack.c.h.b16 %v3540
        %v4276 = vunpack.c.l.b16 %v3541
        %v4277 = vunpack.c.h.b16 %v3541
        %v4278 = vunpack.c.l.b16 %v3542
        %v4279 = vunpack.c.h.b16 %v3542
        %v4280 = vunpack.c.l.b16 %v3543
        %v4281 = vunpack.c.h.b16 %v3543
        %v4282 = vunpack.c.l.b16 %v3544
        %v4283 = vunpack.c.h.b16 %v3544
        %v4284 = vunpack.c.l.b16 %v3545
        %v4285 = vunpack.c.h.b16 %v3545
        %v4286 = vunpack.c.l.b16 %v3546
        %v4287 = vunpack.c.h.b16 %v3546
        %v4288 = vunpack.c.l.b16 %v3547
        %v4289 = vunpack.c.h.b16 %v3547
        %v4290 = vunpack.c.l.b16 %v3548
        %v4291 = vunpack.c.h.b16 %v3548
        %v4292 = vunpack.c.l.b16 %v3549
        %v4293 = vunpack.c.h.b16 %v3549
        %v4294 = vunpack.c.l.b16 %v3550
        %v4295 = vunpack.c.h.b16 %v3550
        %v4296 = vunpack.c.l.b16 %v3551
        %v4297 = vunpack.c.h.b16 %v3551
        %v4298 = vunpack.c.l.b16 %v3552
        %v4299 = vunpack.c.h.b16 %v3552
        %v4300 = vunpack.c.l.b16 %v3553
        %v4301 = vunpack.c.h.b16 %v3553
        %v4302 = vunpack.c.l.b16 %v3554
        %v4303 = vunpack.c.h.b16 %v3554
        %v4304 = vunpack.c.l.b16 %v3555
        %v4305 = vunpack.c.h.b16 %v3555
        %v4306 = vunpack.c.l.b16 %v3556
        %v4307 = vunpack.c.h.b16 %v3556
        %v4308 = vunpack.c.l.b16 %v3557
        %v4309 = vunpack.c.h.b16 %v3557
        %v4310 = vunpack.c.l.b16 %v3558
        %v4311 = vunpack.c.h.b16 %v3558
        %v4312 = vunpack.c.l.b16 %v3559
        %v4313 = vunpack.c.h.b16 %v3559
        %v4314 = vunpack.c.l.b16 %v3560
        %v4315 = vunpack.c.h.b16 %v3560
        %v4316 = vunpack.c.l.b16 %v3561
        %v4317 = vunpack.c.h.b16 %v3561
        %v4318 = vunpack.c.l.b16 %v3562
        %v4319 = vunpack.c.h.b16 %v3562
        %v4320 = vunpack.c.l.b16 %v3563
        %v4321 = vunpack.c.h.b16 %v3563
        %v4322 = vunpack.c.l.b16 %v3564
        %v4323 = vunpack.c.h.b16 %v3564
        %v4324 = vunpack.c.l.b16 %v3565
        %v4325 = vunpack.c.h.b16 %v3565
        %v4326 = vunpack.c.l.b16 %v3566
        %v4327 = vunpack.c.h.b16 %v3566
        %v4328 = vunpack.c.l.b16 %v3567
        %v4329 = vunpack.c.h.b16 %v3567
        %v4330 = vunpack.c.l.b16 %v3568
        %v4331 = vunpack.c.h.b16 %v3568
        %v4332 = vunpack.c.l.b16 %v3569
        %v4333 = vunpack.c.h.b16 %v3569
        %v4334 = vunpack.c.l.b16 %v3570
        %v4335 = vunpack.c.h.b16 %v3570
        %v4336 = vunpack.c.l.b16 %v3571
        %v4337 = vunpack.c.h.b16 %v3571
        %v4338 = vunpack.c.l.b16 %v3572
        %v4339 = vunpack.c.h.b16 %v3572
        %v4340 = vunpack.c.l.b16 %v3573
        %v4341 = vunpack.c.h.b16 %v3573
        %v4342 = vunpack.c.l.b16 %v3574
        %v4343 = vunpack.c.h.b16 %v3574
        %v4344 = vunpack.c.l.b16 %v3575
        %v4345 = vunpack.c.h.b16 %v3575
        %v4346 = vunpack.c.l.b16 %v3576
        %v4347 = vunpack.c.h.b16 %v3576
        %v4348 = vunpack.c.l.b16 %v3577
        %v4349 = vunpack.c.h.b16 %v3577
        %v4350 = vunpack.c.l.b16 %v3578
        %v4351 = vunpack.c.h.b16 %v3578
        %v4352 = vunpack.c.l.b16 %v3579
        %v4353 = vunpack.c.h.b16 %v3579
        %v4354 = vunpack.c.l.b16 %v3580
        %v4355 = vunpack.c.h.b16 %v3580
        %v4356 = vunpack.c.l.b16 %v3581
        %v4357 = vunpack.c.h.b16 %v3581
        %v4358 = vunpack.c.l.b16 %v3582
        %v4359 = vunpack.c.h.b16 %v3582
        %v4360 = vunpack.c.l.b16 %v3583
        %v4361 = vunpack.c.h.b16 %v3583
        %v4362 = vunpack.c.l.b16 %v3584
        %v4363 = vunpack.c.h.b16 %v3584
        %v4364 = vunpack.c.l.b16 %v3585
        %v4365 = vunpack.c.h.b16 %v3585
        %v4366 = vunpack.c.l.b16 %v3586
        %v4367 = vunpack.c.h.b16 %v3586
        %v4368 = vunpack.c.l.b16 %v3587
        %v4369 = vunpack.c.h.b16 %v3587
        %v4370 = vunpack.c.l.b16 %v3588
        %v4371 = vunpack.c.h.b16 %v3588
        %v4372 = vunpack.c.l.b16 %v3589
        %v4373 = vunpack.c.h.b16 %v3589
        %v4374 = vunpack.c.l.b16 %v3590
        %v4375 = vunpack.c.h.b16 %v3590
        %v4376 = vunpack.c.l.b16 %v3591
        %v4377 = vunpack.c.h.b16 %v3591
        %v4378 = vunpack.c.l.b16 %v3592
        %v4379 = vunpack.c.h.b16 %v3592
        %v4380 = vunpack.c.l.b16 %v3593
        %v4381 = vunpack.c.h.b16 %v3593
        %v4382 = vunpack.c.l.b16 %v3594
        %v4383 = vunpack.c.h.b16 %v3594
        %v4384 = vunpack.c.l.b16 %v3595
        %v4385 = vunpack.c.h.b16 %v3595
        %v4386 = vunpack.c.l.b16 %v3596
        %v4387 = vunpack.c.h.b16 %v3596
        %v4388 = vunpack.c.l.b16 %v3597
        %v4389 = vunpack.c.h.b16 %v3597
        %v4390 = vunpack.c.l.b16 %v3598
        %v4391 = vunpack.c.h.b16 %v3598
        %v4392 = vunpack.c.l.b16 %v3599
        %v4393 = vunpack.c.h.b16 %v3599
        %v4394 = vunpack.c.l.b16 %v3600
        %v4395 = vunpack.c.h.b16 %v3600
        %v4396 = vunpack.c.l.b16 %v3601
        %v4397 = vunpack.c.h.b16 %v3601
        %v4398 = vunpack.c.l.b16 %v3602
        %v4399 = vunpack.c.h.b16 %v3602
        %v4400 = vunpack.c.l.b16 %v3603
        %v4401 = vunpack.c.h.b16 %v3603
        %v4402 = vunpack.c.l.b16 %v3604
        %v4403 = vunpack.c.h.b16 %v3604
        %v4404 = vunpack.c.l.b16 %v3605
        %v4405 = vunpack.c.h.b16 %v3605
        %v4406 = vunpack.c.l.b16 %v3606
        %v4407 = vunpack.c.h.b16 %v3606
        %v4408 = vunpack.c.l.b16 %v3607
        %v4409 = vunpack.c.h.b16 %v3607
        %v4410 = vunpack.c.l.b16 %v3608
        %v4411 = vunpack.c.h.b16 %v3608
        %v4412 = vunpack.c.l.b16 %v3609
        %v4413 = vunpack.c.h.b16 %v3609
        %v4414 = vunpack.c.l.b16 %v3610
        %v4415 = vunpack.c.h.b16 %v3610
        %v4416 = vunpack.c.l.b16 %v3611
        %v4417 = vunpack.c.h.b16 %v3611
        %v4418 = vunpack.c.l.b16 %v3612
        %v4419 = vunpack.c.h.b16 %v3612
        %v4420 = vunpack.c.l.b16 %v3613
        %v4421 = vunpack.c.h.b16 %v3613
        %v4422 = vunpack.c.l.b16 %v3614
        %v4423 = vunpack.c.h.b16 %v3614
        %v4424 = vunpack.c.l.b16 %v3615
        %v4425 = vunpack.c.h.b16 %v3615
        %v4426 = vpack.c.b16 %v3922, %v3914
        %v4427 = vpack.c.b16 %v3923, %v3915
        %v4428 = vpack.c.b16 %v3924, %v3916
        %v4429 = vpack.c.b16 %v3925, %v3917
        %v4430 = vpack.c.b16 %v3926, %v3918
        %v4431 = vpack.c.b16 %v3927, %v3919
        %v4432 = vpack.c.b16 %v3928, %v3920
        %v4433 = vpack.c.b16 %v3929, %v3921
        %v4434 = vpack.c.b16 %v3938, %v3930
        %v4435 = vpack.c.b16 %v3939, %v3931
        %v4436 = vpack.c.b16 %v3940, %v3932
        %v4437 = vpack.c.b16 %v3941, %v3933
        %v4438 = vpack.c.b16 %v3942, %v3934
        %v4439 = vpack.c.b16 %v3943, %v3935
        %v4440 = vpack.c.b16 %v3944, %v3936
        %v4441 = vpack.c.b16 %v3945, %v3937
        %v4442 = vpack.c.b16 %v3954, %v3946
        %v4443 = vpack.c.b16 %v3955, %v3947
        %v4444 = vpack.c.b16 %v3956, %v3948
        %v4445 = vpack.c.b16 %v3957, %v3949
        %v4446 = vpack.c.b16 %v3958, %v3950
        %v4447 = vpack.c.b16 %v3959, %v3951
        %v4448 = vpack.c.b16 %v3960, %v3952
        %v4449 = vpack.c.b16 %v3961, %v3953
        %v4450 = vpack.c.b16 %v3970, %v3962
        %v4451 = vpack.c.b16 %v3971, %v3963
        %v4452 = vpack.c.b16 %v3972, %v3964
        %v4453 = vpack.c.b16 %v3973, %v3965
        %v4454 = vpack.c.b16 %v3974, %v3966
        %v4455 = vpack.c.b16 %v3975, %v3967
        %v4456 = vpack.c.b16 %v3976, %v3968
        %v4457 = vpack.c.b16 %v3977, %v3969
        %v4458 = vpack.c.b16 %v3986, %v3978
        %v4459 = vpack.c.b16 %v3987, %v3979
        %v4460 = vpack.c.b16 %v3988, %v3980
        %v4461 = vpack.c.b16 %v3989, %v3981
        %v4462 = vpack.c.b16 %v3990, %v3982
        %v4463 = vpack.c.b16 %v3991, %v3983
        %v4464 = vpack.c.b16 %v3992, %v3984
        %v4465 = vpack.c.b16 %v3993, %v3985
        %v4466 = vpack.c.b16 %v4002, %v3994
        %v4467 = vpack.c.b16 %v4003, %v3995
        %v4468 = vpack.c.b16 %v4004, %v3996
        %v4469 = vpack.c.b16 %v4005, %v3997
        %v4470 = vpack.c.b16 %v4006, %v3998
        %v4471 = vpack.c.b16 %v4007, %v3999
        %v4472 = vpack.c.b16 %v4008, %v4000
        %v4473 = vpack.c.b16 %v4009, %v4001
        %v4474 = vpack.c.b16 %v4018, %v4010
        %v4475 = vpack.c.b16 %v4019, %v4011
        %v4476 = vpack.c.b16 %v4020, %v4012
        %v4477 = vpack.c.b16 %v4021, %v4013
        %v4478 = vpack.c.b16 %v4022, %v4014
        %v4479 = vpack.c.b16 %v4023, %v4015
        %v4480 = vpack.c.b16 %v4024, %v4016
        %v4481 = vpack.c.b16 %v4025, %v4017
        %v4482 = vpack.c.b16 %v4034, %v4026
        %v4483 = vpack.c.b16 %v4035, %v4027
        %v4484 = vpack.c.b16 %v4036, %v4028
        %v4485 = vpack.c.b16 %v4037, %v4029
        %v4486 = vpack.c.b16 %v4038, %v4030
        %v4487 = vpack.c.b16 %v4039, %v4031
        %v4488 = vpack.c.b16 %v4040, %v4032
        %v4489 = vpack.c.b16 %v4041, %v4033
        %v4490 = vpack.c.b16 %v4050, %v4042
        %v4491 = vpack.c.b16 %v4051, %v4043
        %v4492 = vpack.c.b16 %v4052, %v4044
        %v4493 = vpack.c.b16 %v4053, %v4045
        %v4494 = vpack.c.b16 %v4054, %v4046
        %v4495 = vpack.c.b16 %v4055, %v4047
        %v4496 = vpack.c.b16 %v4056, %v4048
        %v4497 = vpack.c.b16 %v4057, %v4049
        %v4498 = vpack.c.b16 %v4066, %v4058
        %v4499 = vpack.c.b16 %v4067, %v4059
        %v4500 = vpack.c.b16 %v4068, %v4060
        %v4501 = vpack.c.b16 %v4069, %v4061
        %v4502 = vpack.c.b16 %v4070, %v4062
        %v4503 = vpack.c.b16 %v4071, %v4063
        %v4504 = vpack.c.b16 %v4072, %v4064
        %v4505 = vpack.c.b16 %v4073, %v4065
        %v4506 = vpack.c.b16 %v4082, %v4074
        %v4507 = vpack.c.b16 %v4083, %v4075
        %v4508 = vpack.c.b16 %v4084, %v4076
        %v4509 = vpack.c.b16 %v4085, %v4077
        %v4510 = vpack.c.b16 %v4086, %v4078
        %v4511 = vpack.c.b16 %v4087, %v4079
        %v4512 = vpack.c.b16 %v4088, %v4080
        %v4513 = vpack.c.b16 %v4089, %v4081
        %v4514 = vpack.c.b16 %v4098, %v4090
        %v4515 = vpack.c.b16 %v4099, %v4091
        %v4516 = vpack.c.b16 %v4100, %v4092
        %v4517 = vpack.c.b16 %v4101, %v4093
        %v4518 = vpack.c.b16 %v4102, %v4094
        %v4519 = vpack.c.b16 %v4103, %v4095
        %v4520 = vpack.c.b16 %v4104, %v4096
        %v4521 = vpack.c.b16 %v4105, %v4097
        %v4522 = vpack.c.b16 %v4114, %v4106
        %v4523 = vpack.c.b16 %v4115, %v4107
        %v4524 = vpack.c.b16 %v4116, %v4108
        %v4525 = vpack.c.b16 %v4117, %v4109
        %v4526 = vpack.c.b16 %v4118, %v4110
        %v4527 = vpack.c.b16 %v4119, %v4111
        %v4528 = vpack.c.b16 %v4120, %v4112
        %v4529 = vpack.c.b16 %v4121, %v4113
        %v4530 = vpack.c.b16 %v4130, %v4122
        %v4531 = vpack.c.b16 %v4131, %v4123
        %v4532 = vpack.c.b16 %v4132, %v4124
        %v4533 = vpack.c.b16 %v4133, %v4125
        %v4534 = vpack.c.b16 %v4134, %v4126
        %v4535 = vpack.c.b16 %v4135, %v4127
        %v4536 = vpack.c.b16 %v4136, %v4128
        %v4537 = vpack.c.b16 %v4137, %v4129
        %v4538 = vpack.c.b16 %v4146, %v4138
        %v4539 = vpack.c.b16 %v4147, %v4139
        %v4540 = vpack.c.b16 %v4148, %v4140
        %v4541 = vpack.c.b16 %v4149, %v4141
        %v4542 = vpack.c.b16 %v4150, %v4142
        %v4543 = vpack.c.b16 %v4151, %v4143
        %v4544 = vpack.c.b16 %v4152, %v4144
        %v4545 = vpack.c.b16 %v4153, %v4145
        %v4546 = vpack.c.b16 %v4162, %v4154
        %v4547 = vpack.c.b16 %v4163, %v4155
        %v4548 = vpack.c.b16 %v4164, %v4156
        %v4549 = vpack.c.b16 %v4165, %v4157
        %v4550 = vpack.c.b16 %v4166, %v4158
        %v4551 = vpack.c.b16 %v4167, %v4159
        %v4552 = vpack.c.b16 %v4168, %v4160
        %v4553 = vpack.c.b16 %v4169, %v4161
        %v4554 = vpack.c.b16 %v4178, %v4170
        %v4555 = vpack.c.b16 %v4179, %v4171
        %v4556 = vpack.c.b16 %v4180, %v4172
        %v4557 = vpack.c.b16 %v4181, %v4173
        %v4558 = vpack.c.b16 %v4182, %v4174
        %v4559 = vpack.c.b16 %v4183, %v4175
        %v4560 = vpack.c.b16 %v4184, %v4176
        %v4561 = vpack.c.b16 %v4185, %v4177
        %v4562 = vpack.c.b16 %v4194, %v4186
        %v4563 = vpack.c.b16 %v4195, %v4187
        %v4564 = vpack.c.b16 %v4196, %v4188
        %v4565 = vpack.c.b16 %v4197, %v4189
        %v4566 = vpack.c.b16 %v4198, %v4190
        %v4567 = vpack.c.b16 %v4199, %v4191
        %v4568 = vpack.c.b16 %v4200, %v4192
        %v4569 = vpack.c.b16 %v4201, %v4193
        %v4570 = vpack.c.b16 %v4210, %v4202
        %v4571 = vpack.c.b16 %v4211, %v4203
        %v4572 = vpack.c.b16 %v4212, %v4204
        %v4573 = vpack.c.b16 %v4213, %v4205
        %v4574 = vpack.c.b16 %v4214, %v4206
        %v4575 = vpack.c.b16 %v4215, %v4207
        %v4576 = vpack.c.b16 %v4216, %v4208
        %v4577 = vpack.c.b16 %v4217, %v4209
        %v4578 = vpack.c.b16 %v4226, %v4218
        %v4579 = vpack.c.b16 %v4227, %v4219
        %v4580 = vpack.c.b16 %v4228, %v4220
        %v4581 = vpack.c.b16 %v4229, %v4221
        %v4582 = vpack.c.b16 %v4230, %v4222
        %v4583 = vpack.c.b16 %v4231, %v4223
        %v4584 = vpack.c.b16 %v4232, %v4224
        %v4585 = vpack.c.b16 %v4233, %v4225
        %v4586 = vpack.c.b16 %v4242, %v4234
        %v4587 = vpack.c.b16 %v4243, %v4235
        %v4588 = vpack.c.b16 %v4244, %v4236
        %v4589 = vpack.c.b16 %v4245, %v4237
        %v4590 = vpack.c.b16 %v4246, %v4238
        %v4591 = vpack.c.b16 %v4247, %v4239
        %v4592 = vpack.c.b16 %v4248, %v4240
        %v4593 = vpack.c.b16 %v4249, %v4241
        %v4594 = vpack.c.b16 %v4258, %v4250
        %v4595 = vpack.c.b16 %v4259, %v4251
        %v4596 = vpack.c.b16 %v4260, %v4252
        %v4597 = vpack.c.b16 %v4261, %v4253
        %v4598 = vpack.c.b16 %v4262, %v4254
        %v4599 = vpack.c.b16 %v4263, %v4255
        %v4600 = vpack.c.b16 %v4264, %v4256
        %v4601 = vpack.c.b16 %v4265, %v4257
        %v4602 = vpack.c.b16 %v4274, %v4266
        %v4603 = vpack.c.b16 %v4275, %v4267
        %v4604 = vpack.c.b16 %v4276, %v4268
        %v4605 = vpack.c.b16 %v4277, %v4269
        %v4606 = vpack.c.b16 %v4278, %v4270
        %v4607 = vpack.c.b16 %v4279, %v4271
        %v4608 = vpack.c.b16 %v4280, %v4272
        %v4609 = vpack.c.b16 %v4281, %v4273
        %v4610 = vpack.c.b16 %v4290, %v4282
        %v4611 = vpack.c.b16 %v4291, %v4283
        %v4612 = vpack.c.b16 %v4292, %v4284
        %v4613 = vpack.c.b16 %v4293, %v4285
        %v4614 = vpack.c.b16 %v4294, %v4286
        %v4615 = vpack.c.b16 %v4295, %v4287
        %v4616 = vpack.c.b16 %v4296, %v4288
        %v4617 = vpack.c.b16 %v4297, %v4289
        %v4618 = vpack.c.b16 %v4306, %v4298
        %v4619 = vpack.c.b16 %v4307, %v4299
        %v4620 = vpack.c.b16 %v4308, %v4300
        %v4621 = vpack.c.b16 %v4309, %v4301
        %v4622 = vpack.c.b16 %v4310, %v4302
        %v4623 = vpack.c.b16 %v4311, %v4303
        %v4624 = vpack.c.b16 %v4312, %v4304
        %v4625 = vpack.c.b16 %v4313, %v4305
        %v4626 = vpack.c.b16 %v4322, %v4314
        %v4627 = vpack.c.b16 %v4323, %v4315
        %v4628 = vpack.c.b16 %v4324, %v4316
        %v4629 = vpack.c.b16 %v4325, %v4317
        %v4630 = vpack.c.b16 %v4326, %v4318
        %v4631 = vpack.c.b16 %v4327, %v4319
        %v4632 = vpack.c.b16 %v4328, %v4320
        %v4633 = vpack.c.b16 %v4329, %v4321
        %v4634 = vpack.c.b16 %v4338, %v4330
        %v4635 = vpack.c.b16 %v4339, %v4331
        %v4636 = vpack.c.b16 %v4340, %v4332
        %v4637 = vpack.c.b16 %v4341, %v4333
        %v4638 = vpack.c.b16 %v4342, %v4334
        %v4639 = vpack.c.b16 %v4343, %v4335
        %v4640 = vpack.c.b16 %v4344, %v4336
        %v4641 = vpack.c.b16 %v4345, %v4337
        %v4642 = vpack.c.b16 %v4354, %v4346
        %v4643 = vpack.c.b16 %v4355, %v4347
        %v4644 = vpack.c.b16 %v4356, %v4348
        %v4645 = vpack.c.b16 %v4357, %v4349
        %v4646 = vpack.c.b16 %v4358, %v4350
        %v4647 = vpack.c.b16 %v4359, %v4351
        %v4648 = vpack.c.b16 %v4360, %v4352
        %v4649 = vpack.c.b16 %v4361, %v4353
        %v4650 = vpack.c.b16 %v4370, %v4362
        %v4651 = vpack.c.b16 %v4371, %v4363
        %v4652 = vpack.c.b16 %v4372, %v4364
        %v4653 = vpack.c.b16 %v4373, %v4365
        %v4654 = vpack.c.b16 %v4374, %v4366
        %v4655 = vpack.c.b16 %v4375, %v4367
        %v4656 = vpack.c.b16 %v4376, %v4368
        %v4657 = vpack.c.b16 %v4377, %v4369
        %v4658 = vpack.c.b16 %v4386, %v4378
        %v4659 = vpack.c.b16 %v4387, %v4379
        %v4660 = vpack.c.b16 %v4388, %v4380
        %v4661 = vpack.c.b16 %v4389, %v4381
        %v4662 = vpack.c.b16 %v4390, %v4382
        %v4663 = vpack.c.b16 %v4391, %v4383
        %v4664 = vpack.c.b16 %v4392, %v4384
        %v4665 = vpack.c.b16 %v4393, %v4385
        %v4666 = vpack.c.b16 %v4402, %v4394
        %v4667 = vpack.c.b16 %v4403, %v4395
        %v4668 = vpack.c.b16 %v4404, %v4396
        %v4669 = vpack.c.b16 %v4405, %v4397
        %v4670 = vpack.c.b16 %v4406, %v4398
        %v4671 = vpack.c.b16 %v4407, %v4399
        %v4672 = vpack.c.b16 %v4408, %v4400
        %v4673 = vpack.c.b16 %v4409, %v4401
        %v4674 = vpack.c.b16 %v4418, %v4410
        %v4675 = vpack.c.b16 %v4419, %v4411
        %v4676 = vpack.c.b16 %v4420, %v4412
        %v4677 = vpack.c.b16 %v4421, %v4413
        %v4678 = vpack.c.b16 %v4422, %v4414
        %v4679 = vpack.c.b16 %v4423, %v4415
        %v4680 = vpack.c.b16 %v4424, %v4416
        %v4681 = vpack.c.b16 %v4425, %v4417
        %4938 = vmatprep.subr.bf16.mxu0 %v4427
        %4939 = vmatpush1.bf16.msra.mxu0 %v4426
        %4940 = vmatprep.subr.bf16.mxu0 %v4435
        %4941 = vmatpush1.bf16.msra.mxu0 %v4434
        %4942 = vmatprep.subr.bf16.mxu0 %v4443
        %4943 = vmatpush1.bf16.msra.mxu0 %v4442
        %4944 = vmatprep.subr.bf16.mxu0 %v4451
        %4945 = vmatpush1.bf16.msra.mxu0 %v4450
        %4946 = vmatprep.subr.bf16.mxu0 %v4459
        %4947 = vmatpush1.bf16.msra.mxu0 %v4458
        %4948 = vmatprep.subr.bf16.mxu0 %v4467
        %4949 = vmatpush1.bf16.msra.mxu0 %v4466
        %4950 = vmatprep.subr.bf16.mxu0 %v4475
        %4951 = vmatpush1.bf16.msra.mxu0 %v4474
        %4952 = vmatprep.subr.bf16.mxu0 %v4483
        %4953 = vmatpush1.bf16.msra.mxu0 %v4482
        %4954 = vmatprep.subr.bf16.mxu0 %v4491
        %4955 = vmatpush1.bf16.msra.mxu0 %v4490
        %4956 = vmatprep.subr.bf16.mxu0 %v4499
        %4957 = vmatpush1.bf16.msra.mxu0 %v4498
        %4958 = vmatprep.subr.bf16.mxu0 %v4507
        %4959 = vmatpush1.bf16.msra.mxu0 %v4506
        %4960 = vmatprep.subr.bf16.mxu0 %v4515
        %4961 = vmatpush1.bf16.msra.mxu0 %v4514
        %4962 = vmatprep.subr.bf16.mxu0 %v4523
        %4963 = vmatpush1.bf16.msra.mxu0 %v4522
        %4964 = vmatprep.subr.bf16.mxu0 %v4531
        %4965 = vmatpush1.bf16.msra.mxu0 %v4530
        %4966 = vmatprep.subr.bf16.mxu0 %v4539
        %4967 = vmatpush1.bf16.msra.mxu0 %v4538
        %4968 = vmatprep.subr.bf16.mxu0 %v4547
        %4969 = vmatpush1.bf16.msra.mxu0 %v4546
        %4970 = vmatprep.mubr.bf16.mxu0 %v3357
        %4971 = vmatmul.mubr.bf16.gmra.mrb[0].mxu0 %v3356
        %v4972 = vpop.f32.mrb[0].mxu0
        %v4973 = vadd.f32 %v3621, %v4972
        %v4974 = vpop.f32.mrb[0].mxu0
        %v4975 = vadd.f32 %v3625, %v4974
        %v4976 = vpop.f32.mrb[0].mxu0
        %v4977 = vadd.f32 %v3621, %v4976
        %v4978 = vpop.f32.mrb[0].mxu0
        %v4979 = vadd.f32 %v3625, %v4978
        %4980 = vdwg.mxu0
        %4981 = vmatprep.subr.bf16.mxu0 %v4555
        %4982 = vmatpush1.bf16.msra.mxu0 %v4554
        %4983 = vmatprep.subr.bf16.mxu0 %v4563
        %4984 = vmatpush1.bf16.msra.mxu0 %v4562
        %4985 = vmatprep.subr.bf16.mxu0 %v4571
        %4986 = vmatpush1.bf16.msra.mxu0 %v4570
        %4987 = vmatprep.subr.bf16.mxu0 %v4579
        %4988 = vmatpush1.bf16.msra.mxu0 %v4578
        %4989 = vmatprep.subr.bf16.mxu0 %v4587
        %4990 = vmatpush1.bf16.msra.mxu0 %v4586
        %4991 = vmatprep.subr.bf16.mxu0 %v4595
        %4992 = vmatpush1.bf16.msra.mxu0 %v4594
        %4993 = vmatprep.subr.bf16.mxu0 %v4603
        %4994 = vmatpush1.bf16.msra.mxu0 %v4602
        %4995 = vmatprep.subr.bf16.mxu0 %v4611
        %4996 = vmatpush1.bf16.msra.mxu0 %v4610
        %4997 = vmatprep.subr.bf16.mxu0 %v4619
        %4998 = vmatpush1.bf16.msra.mxu0 %v4618
        %4999 = vmatprep.subr.bf16.mxu0 %v4627
        %5000 = vmatpush1.bf16.msra.mxu0 %v4626
        %5001 = vmatprep.subr.bf16.mxu0 %v4635
        %5002 = vmatpush1.bf16.msra.mxu0 %v4634
        %5003 = vmatprep.subr.bf16.mxu0 %v4643
        %5004 = vmatpush1.bf16.msra.mxu0 %v4642
        %5005 = vmatprep.subr.bf16.mxu0 %v4651
        %5006 = vmatpush1.bf16.msra.mxu0 %v4650
        %5007 = vmatprep.subr.bf16.mxu0 %v4659
        %5008 = vmatpush1.bf16.msra.mxu0 %v4658
        %5009 = vmatprep.subr.bf16.mxu0 %v4667
        %5010 = vmatpush1.bf16.msra.mxu0 %v4666
        %5011 = vmatprep.subr.bf16.mxu0 %v4675
        %5012 = vmatpush1.bf16.msra.mxu0 %v4674
        %5013 = vmatprep.mubr.bf16.mxu0 %v3359
        %5014 = vmatmul.mubr.bf16.gmra.mrb[0].mxu0 %v3358
        %v5015 = vpop.f32.mrb[0].mxu0
        %v5016 = vadd.f32 %v4973, %v5015
        %v5017 = vpop.f32.mrb[0].mxu0
        %v5018 = vadd.f32 %v4975, %v5017
        %v5019 = vpop.f32.mrb[0].mxu0
        %v5020 = vadd.f32 %v4977, %v5019
        %v5021 = vpop.f32.mrb[0].mxu0
        %v5022 = vadd.f32 %v4979, %v5021
        %5023 = vdwg.mxu0
        %5024 = vmatprep.subr.bf16.mxu0 %v4429
        %5025 = vmatpush1.bf16.msra.mxu0 %v4428
        %5026 = vmatprep.subr.bf16.mxu0 %v4437
        %5027 = vmatpush1.bf16.msra.mxu0 %v4436
        %5028 = vmatprep.subr.bf16.mxu0 %v4445
        %5029 = vmatpush1.bf16.msra.mxu0 %v4444
        %5030 = vmatprep.subr.bf16.mxu0 %v4453
        %5031 = vmatpush1.bf16.msra.mxu0 %v4452
        %5032 = vmatprep.subr.bf16.mxu0 %v4461
        %5033 = vmatpush1.bf16.msra.mxu0 %v4460
        %5034 = vmatprep.subr.bf16.mxu0 %v4469
        %5035 = vmatpush1.bf16.msra.mxu0 %v4468
        %5036 = vmatprep.subr.bf16.mxu0 %v4477
        %5037 = vmatpush1.bf16.msra.mxu0 %v4476
        %5038 = vmatprep.subr.bf16.mxu0 %v4485
        %5039 = vmatpush1.bf16.msra.mxu0 %v4484
        %5040 = vmatprep.subr.bf16.mxu0 %v4493
        %5041 = vmatpush1.bf16.msra.mxu0 %v4492
        %5042 = vmatprep.subr.bf16.mxu0 %v4501
        %5043 = vmatpush1.bf16.msra.mxu0 %v4500
        %5044 = vmatprep.subr.bf16.mxu0 %v4509
        %5045 = vmatpush1.bf16.msra.mxu0 %v4508
        %5046 = vmatprep.subr.bf16.mxu0 %v4517
        %5047 = vmatpush1.bf16.msra.mxu0 %v4516
        %5048 = vmatprep.subr.bf16.mxu0 %v4525
        %5049 = vmatpush1.bf16.msra.mxu0 %v4524
        %5050 = vmatprep.subr.bf16.mxu0 %v4533
        %5051 = vmatpush1.bf16.msra.mxu0 %v4532
        %5052 = vmatprep.subr.bf16.mxu0 %v4541
        %5053 = vmatpush1.bf16.msra.mxu0 %v4540
        %5054 = vmatprep.subr.bf16.mxu0 %v4549
        %5055 = vmatpush1.bf16.msra.mxu0 %v4548
        %5056 = vmatprep.mubr.bf16.mxu0 %v3357
        %5057 = vmatmul.mubr.bf16.gmra.mrb[0].mxu0 %v3356
        %v5058 = vpop.f32.mrb[0].mxu0
        %v5059 = vadd.f32 %v3629, %v5058
        %v5060 = vpop.f32.mrb[0].mxu0
        %v5061 = vadd.f32 %v3633, %v5060
        %v5062 = vpop.f32.mrb[0].mxu0
        %v5063 = vadd.f32 %v3629, %v5062
        %v5064 = vpop.f32.mrb[0].mxu0
        %v5065 = vadd.f32 %v3633, %v5064
        %5066 = vdwg.mxu0
        %5067 = vmatprep.subr.bf16.mxu0 %v4557
        %5068 = vmatpush1.bf16.msra.mxu0 %v4556
        %5069 = vmatprep.subr.bf16.mxu0 %v4565
        %5070 = vmatpush1.bf16.msra.mxu0 %v4564
        %5071 = vmatprep.subr.bf16.mxu0 %v4573
        %5072 = vmatpush1.bf16.msra.mxu0 %v4572
        %5073 = vmatprep.subr.bf16.mxu0 %v4581
        %5074 = vmatpush1.bf16.msra.mxu0 %v4580
        %5075 = vmatprep.subr.bf16.mxu0 %v4589
        %5076 = vmatpush1.bf16.msra.mxu0 %v4588
        %5077 = vmatprep.subr.bf16.mxu0 %v4597
        %5078 = vmatpush1.bf16.msra.mxu0 %v4596
        %5079 = vmatprep.subr.bf16.mxu0 %v4605
        %5080 = vmatpush1.bf16.msra.mxu0 %v4604
        %5081 = vmatprep.subr.bf16.mxu0 %v4613
        %5082 = vmatpush1.bf16.msra.mxu0 %v4612
        %5083 = vmatprep.subr.bf16.mxu0 %v4621
        %5084 = vmatpush1.bf16.msra.mxu0 %v4620
        %5085 = vmatprep.subr.bf16.mxu0 %v4629
        %5086 = vmatpush1.bf16.msra.mxu0 %v4628
        %5087 = vmatprep.subr.bf16.mxu0 %v4637
        %5088 = vmatpush1.bf16.msra.mxu0 %v4636
        %5089 = vmatprep.subr.bf16.mxu0 %v4645
        %5090 = vmatpush1.bf16.msra.mxu0 %v4644
        %5091 = vmatprep.subr.bf16.mxu0 %v4653
        %5092 = vmatpush1.bf16.msra.mxu0 %v4652
        %5093 = vmatprep.subr.bf16.mxu0 %v4661
        %5094 = vmatpush1.bf16.msra.mxu0 %v4660
        %5095 = vmatprep.subr.bf16.mxu0 %v4669
        %5096 = vmatpush1.bf16.msra.mxu0 %v4668
        %5097 = vmatprep.subr.bf16.mxu0 %v4677
        %5098 = vmatpush1.bf16.msra.mxu0 %v4676
        %5099 = vmatprep.mubr.bf16.mxu0 %v3359
        %5100 = vmatmul.mubr.bf16.gmra.mrb[0].mxu0 %v3358
        %v5101 = vpop.f32.mrb[0].mxu0
        %v5102 = vadd.f32 %v5059, %v5101
        %v5103 = vpop.f32.mrb[0].mxu0
        %v5104 = vadd.f32 %v5061, %v5103
        %v5105 = vpop.f32.mrb[0].mxu0
        %v5106 = vadd.f32 %v5063, %v5105
        %v5107 = vpop.f32.mrb[0].mxu0
        %v5108 = vadd.f32 %v5065, %v5107
        %5109 = vdwg.mxu0
        %5110 = vmatprep.subr.bf16.mxu0 %v4431
        %5111 = vmatpush1.bf16.msra.mxu0 %v4430
        %5112 = vmatprep.subr.bf16.mxu0 %v4439
        %5113 = vmatpush1.bf16.msra.mxu0 %v4438
        %5114 = vmatprep.subr.bf16.mxu0 %v4447
        %5115 = vmatpush1.bf16.msra.mxu0 %v4446
        %5116 = vmatprep.subr.bf16.mxu0 %v4455
        %5117 = vmatpush1.bf16.msra.mxu0 %v4454
        %5118 = vmatprep.subr.bf16.mxu0 %v4463
        %5119 = vmatpush1.bf16.msra.mxu0 %v4462
        %5120 = vmatprep.subr.bf16.mxu0 %v4471
        %5121 = vmatpush1.bf16.msra.mxu0 %v4470
        %5122 = vmatprep.subr.bf16.mxu0 %v4479
        %5123 = vmatpush1.bf16.msra.mxu0 %v4478
        %5124 = vmatprep.subr.bf16.mxu0 %v4487
        %5125 = vmatpush1.bf16.msra.mxu0 %v4486
        %5126 = vmatprep.subr.bf16.mxu0 %v4495
        %5127 = vmatpush1.bf16.msra.mxu0 %v4494
        %5128 = vmatprep.subr.bf16.mxu0 %v4503
        %5129 = vmatpush1.bf16.msra.mxu0 %v4502
        %5130 = vmatprep.subr.bf16.mxu0 %v4511
        %5131 = vmatpush1.bf16.msra.mxu0 %v4510
        %5132 = vmatprep.subr.bf16.mxu0 %v4519
        %5133 = vmatpush1.bf16.msra.mxu0 %v4518
        %5134 = vmatprep.subr.bf16.mxu0 %v4527
        %5135 = vmatpush1.bf16.msra.mxu0 %v4526
        %5136 = vmatprep.subr.bf16.mxu0 %v4535
        %5137 = vmatpush1.bf16.msra.mxu0 %v4534
        %5138 = vmatprep.subr.bf16.mxu0 %v4543
        %5139 = vmatpush1.bf16.msra.mxu0 %v4542
        %5140 = vmatprep.subr.bf16.mxu0 %v4551
        %5141 = vmatpush1.bf16.msra.mxu0 %v4550
        %5142 = vmatprep.mubr.bf16.mxu0 %v3357
        %5143 = vmatmul.mubr.bf16.gmra.mrb[0].mxu0 %v3356
        %v5144 = vpop.f32.mrb[0].mxu0
        %v5145 = vadd.f32 %v3637, %v5144
        %v5146 = vpop.f32.mrb[0].mxu0
        %v5147 = vadd.f32 %v3641, %v5146
        %v5148 = vpop.f32.mrb[0].mxu0
        %v5149 = vadd.f32 %v3637, %v5148
        %v5150 = vpop.f32.mrb[0].mxu0
        %v5151 = vadd.f32 %v3641, %v5150
        %5152 = vdwg.mxu0
        %5153 = vmatprep.subr.bf16.mxu0 %v4559
        %5154 = vmatpush1.bf16.msra.mxu0 %v4558
        %5155 = vmatprep.subr.bf16.mxu0 %v4567
        %5156 = vmatpush1.bf16.msra.mxu0 %v4566
        %5157 = vmatprep.subr.bf16.mxu0 %v4575
        %5158 = vmatpush1.bf16.msra.mxu0 %v4574
        %5159 = vmatprep.subr.bf16.mxu0 %v4583
        %5160 = vmatpush1.bf16.msra.mxu0 %v4582
        %5161 = vmatprep.subr.bf16.mxu0 %v4591
        %5162 = vmatpush1.bf16.msra.mxu0 %v4590
        %5163 = vmatprep.subr.bf16.mxu0 %v4599
        %5164 = vmatpush1.bf16.msra.mxu0 %v4598
        %5165 = vmatprep.subr.bf16.mxu0 %v4607
        %5166 = vmatpush1.bf16.msra.mxu0 %v4606
        %5167 = vmatprep.subr.bf16.mxu0 %v4615
        %5168 = vmatpush1.bf16.msra.mxu0 %v4614
        %5169 = vmatprep.subr.bf16.mxu0 %v4623
        %5170 = vmatpush1.bf16.msra.mxu0 %v4622
        %5171 = vmatprep.subr.bf16.mxu0 %v4631
        %5172 = vmatpush1.bf16.msra.mxu0 %v4630
        %5173 = vmatprep.subr.bf16.mxu0 %v4639
        %5174 = vmatpush1.bf16.msra.mxu0 %v4638
        %5175 = vmatprep.subr.bf16.mxu0 %v4647
        %5176 = vmatpush1.bf16.msra.mxu0 %v4646
        %5177 = vmatprep.subr.bf16.mxu0 %v4655
        %5178 = vmatpush1.bf16.msra.mxu0 %v4654
        %5179 = vmatprep.subr.bf16.mxu0 %v4663
        %5180 = vmatpush1.bf16.msra.mxu0 %v4662
        %5181 = vmatprep.subr.bf16.mxu0 %v4671
        %5182 = vmatpush1.bf16.msra.mxu0 %v4670
        %5183 = vmatprep.subr.bf16.mxu0 %v4679
        %5184 = vmatpush1.bf16.msra.mxu0 %v4678
        %5185 = vmatprep.mubr.bf16.mxu0 %v3359
        %5186 = vmatmul.mubr.bf16.gmra.mrb[0].mxu0 %v3358
        %v5187 = vpop.f32.mrb[0].mxu0
        %v5188 = vadd.f32 %v5145, %v5187
        %v5189 = vpop.f32.mrb[0].mxu0
        %v5190 = vadd.f32 %v5147, %v5189
        %v5191 = vpop.f32.mrb[0].mxu0
        %v5192 = vadd.f32 %v5149, %v5191
        %v5193 = vpop.f32.mrb[0].mxu0
        %v5194 = vadd.f32 %v5151, %v5193
        %5195 = vdwg.mxu0
        %5196 = vmatprep.subr.bf16.mxu0 %v4433
        %5197 = vmatpush1.bf16.msra.mxu0 %v4432
        %5198 = vmatprep.subr.bf16.mxu0 %v4441
        %5199 = vmatpush1.bf16.msra.mxu0 %v4440
        %5200 = vmatprep.subr.bf16.mxu0 %v4449
        %5201 = vmatpush1.bf16.msra.mxu0 %v4448
        %5202 = vmatprep.subr.bf16.mxu0 %v4457
        %5203 = vmatpush1.bf16.msra.mxu0 %v4456
        %5204 = vmatprep.subr.bf16.mxu0 %v4465
        %5205 = vmatpush1.bf16.msra.mxu0 %v4464
        %5206 = vmatprep.subr.bf16.mxu0 %v4473
        %5207 = vmatpush1.bf16.msra.mxu0 %v4472
        %5208 = vmatprep.subr.bf16.mxu0 %v4481
        %5209 = vmatpush1.bf16.msra.mxu0 %v4480
        %5210 = vmatprep.subr.bf16.mxu0 %v4489
        %5211 = vmatpush1.bf16.msra.mxu0 %v4488
        %5212 = vmatprep.subr.bf16.mxu0 %v4497
        %5213 = vmatpush1.bf16.msra.mxu0 %v4496
        %5214 = vmatprep.subr.bf16.mxu0 %v4505
        %5215 = vmatpush1.bf16.msra.mxu0 %v4504
        %5216 = vmatprep.subr.bf16.mxu0 %v4513
        %5217 = vmatpush1.bf16.msra.mxu0 %v4512
        %5218 = vmatprep.subr.bf16.mxu0 %v4521
        %5219 = vmatpush1.bf16.msra.mxu0 %v4520
        %5220 = vmatprep.subr.bf16.mxu0 %v4529
        %5221 = vmatpush1.bf16.msra.mxu0 %v4528
        %5222 = vmatprep.subr.bf16.mxu0 %v4537
        %5223 = vmatpush1.bf16.msra.mxu0 %v4536
        %5224 = vmatprep.subr.bf16.mxu0 %v4545
        %5225 = vmatpush1.bf16.msra.mxu0 %v4544
        %5226 = vmatprep.subr.bf16.mxu0 %v4553
        %5227 = vmatpush1.bf16.msra.mxu0 %v4552
        %5228 = vmatprep.mubr.bf16.mxu0 %v3357
        %5229 = vmatmul.mubr.bf16.gmra.mrb[0].mxu0 %v3356
        %v5230 = vpop.f32.mrb[0].mxu0
        %v5231 = vadd.f32 %v3645, %v5230
        %v5232 = vpop.f32.mrb[0].mxu0
        %v5233 = vadd.f32 %v3649, %v5232
        %v5234 = vpop.f32.mrb[0].mxu0
        %v5235 = vadd.f32 %v3645, %v5234
        %v5236 = vpop.f32.mrb[0].mxu0
        %v5237 = vadd.f32 %v3649, %v5236
        %5238 = vdwg.mxu0
        %5239 = vmatprep.subr.bf16.mxu0 %v4561
        %5240 = vmatpush1.bf16.msra.mxu0 %v4560
        %5241 = vmatprep.subr.bf16.mxu0 %v4569
        %5242 = vmatpush1.bf16.msra.mxu0 %v4568
        %5243 = vmatprep.subr.bf16.mxu0 %v4577
        %5244 = vmatpush1.bf16.msra.mxu0 %v4576
        %5245 = vmatprep.subr.bf16.mxu0 %v4585
        %5246 = vmatpush1.bf16.msra.mxu0 %v4584
        %5247 = vmatprep.subr.bf16.mxu0 %v4593
        %5248 = vmatpush1.bf16.msra.mxu0 %v4592
        %5249 = vmatprep.subr.bf16.mxu0 %v4601
        %5250 = vmatpush1.bf16.msra.mxu0 %v4600
        %5251 = vmatprep.subr.bf16.mxu0 %v4609
        %5252 = vmatpush1.bf16.msra.mxu0 %v4608
        %5253 = vmatprep.subr.bf16.mxu0 %v4617
        %5254 = vmatpush1.bf16.msra.mxu0 %v4616
        %5255 = vmatprep.subr.bf16.mxu0 %v4625
        %5256 = vmatpush1.bf16.msra.mxu0 %v4624
        %5257 = vmatprep.subr.bf16.mxu0 %v4633
        %5258 = vmatpush1.bf16.msra.mxu0 %v4632
        %5259 = vmatprep.subr.bf16.mxu0 %v4641
        %5260 = vmatpush1.bf16.msra.mxu0 %v4640
        %5261 = vmatprep.subr.bf16.mxu0 %v4649
        %5262 = vmatpush1.bf16.msra.mxu0 %v4648
        %5263 = vmatprep.subr.bf16.mxu0 %v4657
        %5264 = vmatpush1.bf16.msra.mxu0 %v4656
        %5265 = vmatprep.subr.bf16.mxu0 %v4665
        %5266 = vmatpush1.bf16.msra.mxu0 %v4664
        %5267 = vmatprep.subr.bf16.mxu0 %v4673
        %5268 = vmatpush1.bf16.msra.mxu0 %v4672
        %5269 = vmatprep.subr.bf16.mxu0 %v4681
        %5270 = vmatpush1.bf16.msra.mxu0 %v4680
        %5271 = vmatprep.mubr.bf16.mxu0 %v3359
        %5272 = vmatmul.mubr.bf16.gmra.mrb[0].mxu0 %v3358
        %v5273 = vpop.f32.mrb[0].mxu0
        %v5274 = vadd.f32 %v5231, %v5273
        %v5275 = vpop.f32.mrb[0].mxu0
        %v5276 = vadd.f32 %v5233, %v5275
        %v5277 = vpop.f32.mrb[0].mxu0
        %v5278 = vadd.f32 %v5235, %v5277
        %v5279 = vpop.f32.mrb[0].mxu0
        %v5280 = vadd.f32 %v5237, %v5279
        %5281 = vdwg.mxu0
        %vm5282 = vcmp.gt.f32.partialorder %v5016, 0.0
        %vm5283 = vcmp.gt.f32.partialorder %v5018, 0.0
        %vm5284 = vcmp.gt.f32.partialorder %v5102, 0.0
        %vm5285 = vcmp.gt.f32.partialorder %v5104, 0.0
        %vm5286 = vcmp.gt.f32.partialorder %v5188, 0.0
        %vm5287 = vcmp.gt.f32.partialorder %v5190, 0.0
        %vm5288 = vcmp.gt.f32.partialorder %v5274, 0.0
        %vm5289 = vcmp.gt.f32.partialorder %v5276, 0.0
        %vm5290 = vcmp.gt.f32.partialorder %v5020, 0.0
        %vm5291 = vcmp.gt.f32.partialorder %v5022, 0.0
        %vm5292 = vcmp.gt.f32.partialorder %v5106, 0.0
        %vm5293 = vcmp.gt.f32.partialorder %v5108, 0.0
        %vm5294 = vcmp.gt.f32.partialorder %v5192, 0.0
        %vm5295 = vcmp.gt.f32.partialorder %v5194, 0.0
        %vm5296 = vcmp.gt.f32.partialorder %v5278, 0.0
        %vm5297 = vcmp.gt.f32.partialorder %v5280, 0.0
        %v5298 = vmin.f32 %v5016, 0.0
        %v5299 = vmin.f32 %v5018, 0.0
        %v5300 = vmin.f32 %v5102, 0.0
        %v5301 = vmin.f32 %v5104, 0.0
        %v5302 = vmin.f32 %v5188, 0.0
        %v5303 = vmin.f32 %v5190, 0.0
        %v5304 = vmin.f32 %v5274, 0.0
        %v5305 = vmin.f32 %v5276, 0.0
        %v5306 = vmin.f32 %v5020, 0.0
        %v5307 = vmin.f32 %v5022, 0.0
        %v5308 = vmin.f32 %v5106, 0.0
        %v5309 = vmin.f32 %v5108, 0.0
        %v5310 = vmin.f32 %v5192, 0.0
        %v5311 = vmin.f32 %v5194, 0.0
        %v5312 = vmin.f32 %v5278, 0.0
        %v5313 = vmin.f32 %v5280, 0.0
        %v5314 = vmul.f32 %v5298, 1.442695
        %v5315 = vpow.pop %v5314
        %v5316 = vmul.f32 %v5299, 1.442695
        %v5317 = vpow.pop %v5316
        %v5318 = vmul.f32 %v5300, 1.442695
        %v5319 = vpow.pop %v5318
        %v5320 = vmul.f32 %v5301, 1.442695
        %v5321 = vpow.pop %v5320
        %v5322 = vmul.f32 %v5302, 1.442695
        %v5323 = vpow.pop %v5322
        %v5324 = vmul.f32 %v5303, 1.442695
        %v5325 = vpow.pop %v5324
        %v5326 = vmul.f32 %v5304, 1.442695
        %v5327 = vpow.pop %v5326
        %v5328 = vmul.f32 %v5305, 1.442695
        %v5329 = vpow.pop %v5328
        %v5330 = vmul.f32 %v5306, 1.442695
        %v5331 = vpow.pop %v5330
        %v5332 = vmul.f32 %v5307, 1.442695
        %v5333 = vpow.pop %v5332
        %v5334 = vmul.f32 %v5308, 1.442695
        %v5335 = vpow.pop %v5334
        %v5336 = vmul.f32 %v5309, 1.442695
        %v5337 = vpow.pop %v5336
        %v5338 = vmul.f32 %v5310, 1.442695
        %v5339 = vpow.pop %v5338
        %v5340 = vmul.f32 %v5311, 1.442695
        %v5341 = vpow.pop %v5340
        %v5342 = vmul.f32 %v5312, 1.442695
        %v5343 = vpow.pop %v5342
        %v5344 = vmul.f32 %v5313, 1.442695
        %v5345 = vpow.pop %v5344
        %v5346 = vsub.f32 %v5315, 1.0
        %v5347 = vsub.f32 %v5317, 1.0
        %v5348 = vsub.f32 %v5319, 1.0
        %v5349 = vsub.f32 %v5321, 1.0
        %v5350 = vsub.f32 %v5323, 1.0
        %v5351 = vsub.f32 %v5325, 1.0
        %v5352 = vsub.f32 %v5327, 1.0
        %v5353 = vsub.f32 %v5329, 1.0
        %v5354 = vsub.f32 %v5331, 1.0
        %v5355 = vsub.f32 %v5333, 1.0
        %v5356 = vsub.f32 %v5335, 1.0
        %v5357 = vsub.f32 %v5337, 1.0
        %v5358 = vsub.f32 %v5339, 1.0
        %v5359 = vsub.f32 %v5341, 1.0
        %v5360 = vsub.f32 %v5343, 1.0
        %v5361 = vsub.f32 %v5345, 1.0
        %v5362 = vsel %vm5282, %v5016, %v5346
        %v5363 = vsel %vm5283, %v5018, %v5347
        %v5364 = vsel %vm5284, %v5102, %v5348
        %v5365 = vsel %vm5285, %v5104, %v5349
        %v5366 = vsel %vm5286, %v5188, %v5350
        %v5367 = vsel %vm5287, %v5190, %v5351
        %v5368 = vsel %vm5288, %v5274, %v5352
        %v5369 = vsel %vm5289, %v5276, %v5353
        %v5370 = vsel %vm5290, %v5020, %v5354
        %v5371 = vsel %vm5291, %v5022, %v5355
        %v5372 = vsel %vm5292, %v5106, %v5356
        %v5373 = vsel %vm5293, %v5108, %v5357
        %v5374 = vsel %vm5294, %v5192, %v5358
        %v5375 = vsel %vm5295, %v5194, %v5359
        %v5376 = vsel %vm5296, %v5278, %v5360
        %v5377 = vsel %vm5297, %v5280, %v5361
        %5378 = vst [vmem:[%s437] sm:$0xff] %v2810
        %5379 = vst [vmem:[%s437 + $0x8] sm:$0xff] %v2811
        %5380 = vst [vmem:[%s437 + $0x10] sm:$0xff] %v2812
        %5381 = vst [vmem:[%s437 + $0x18] sm:$0xff] %v2813
        %5382 = vst [vmem:[%s444] sm:$0xff] %v3348
        %5383 = vst [vmem:[%s444 + $0x8] sm:$0xff] %v3349
        %5384 = vst [vmem:[%s444 + $0x10] sm:$0xff] %v3350
        %5385 = vst [vmem:[%s444 + $0x18] sm:$0xff] %v3351
        %5386 = vst [vmem:[%s444 + $0x20] sm:$0xff] %v3352
        %5387 = vst [vmem:[%s444 + $0x28] sm:$0xff] %v3353
        %5388 = vst [vmem:[%s444 + $0x30] sm:$0xff] %v3354
        %5389 = vst [vmem:[%s444 + $0x38] sm:$0xff] %v3355
        %v5390 = vadd.f32 %v5362, %v5370
        %v5391 = vrot.slane %v5390, 4
        %v5392 = vadd.f32 %v5390, %v5391
        %v5393 = vrot.slane %v5392, 2
        %v5394 = vadd.f32 %v5392, %v5393
        %v5395 = vrot.slane %v5394, 1
        %v5396 = vadd.f32 %v5394, %v5395
        %v5397 = vadd.f32 %v5363, %v5371
        %v5398 = vrot.slane %v5397, 4
        %v5399 = vadd.f32 %v5397, %v5398
        %v5400 = vrot.slane %v5399, 2
        %v5401 = vadd.f32 %v5399, %v5400
        %v5402 = vrot.slane %v5401, 1
        %v5403 = vadd.f32 %v5401, %v5402
        %v5404 = vadd.f32 %v5364, %v5372
        %v5405 = vrot.slane %v5404, 4
        %v5406 = vadd.f32 %v5404, %v5405
        %v5407 = vrot.slane %v5406, 2
        %v5408 = vadd.f32 %v5406, %v5407
        %v5409 = vrot.slane %v5408, 1
        %v5410 = vadd.f32 %v5408, %v5409
        %v5411 = vadd.f32 %v5365, %v5373
        %v5412 = vrot.slane %v5411, 4
        %v5413 = vadd.f32 %v5411, %v5412
        %v5414 = vrot.slane %v5413, 2
        %v5415 = vadd.f32 %v5413, %v5414
        %v5416 = vrot.slane %v5415, 1
        %v5417 = vadd.f32 %v5415, %v5416
        %v5418 = vadd.f32 %v5366, %v5374
        %v5419 = vrot.slane %v5418, 4
        %v5420 = vadd.f32 %v5418, %v5419
        %v5421 = vrot.slane %v5420, 2
        %v5422 = vadd.f32 %v5420, %v5421
        %v5423 = vrot.slane %v5422, 1
        %v5424 = vadd.f32 %v5422, %v5423
        %v5425 = vadd.f32 %v5367, %v5375
        %v5426 = vrot.slane %v5425, 4
        %v5427 = vadd.f32 %v5425, %v5426
        %v5428 = vrot.slane %v5427, 2
        %v5429 = vadd.f32 %v5427, %v5428
        %v5430 = vrot.slane %v5429, 1
        %v5431 = vadd.f32 %v5429, %v5430
        %v5432 = vadd.f32 %v5368, %v5376
        %v5433 = vrot.slane %v5432, 4
        %v5434 = vadd.f32 %v5432, %v5433
        %v5435 = vrot.slane %v5434, 2
        %v5436 = vadd.f32 %v5434, %v5435
        %v5437 = vrot.slane %v5436, 1
        %v5438 = vadd.f32 %v5436, %v5437
        %v5439 = vadd.f32 %v5369, %v5377
        %v5440 = vrot.slane %v5439, 4
        %v5441 = vadd.f32 %v5439, %v5440
        %v5442 = vrot.slane %v5441, 2
        %v5443 = vadd.f32 %v5441, %v5442
        %v5444 = vrot.slane %v5443, 1
        %v5445 = vadd.f32 %v5443, %v5444
        %v5446 = vrcp.pop 16.0
        %v5447 = vmul.f32 %v5396, %v5446
        %v5448 = vmul.f32 %v5403, %v5446
        %v5449 = vmul.f32 %v5410, %v5446
        %v5450 = vmul.f32 %v5417, %v5446
        %v5451 = vmul.f32 %v5424, %v5446
        %v5452 = vmul.f32 %v5431, %v5446
        %v5453 = vmul.f32 %v5438, %v5446
        %v5454 = vmul.f32 %v5445, %v5446
        %v5463 = vcombine.low %v5447, %v5448
        %v5464 = vcombine.low %v5449, %v5450
        %v5465 = vcombine.low %v5451, %v5452
        %v5466 = vcombine.low %v5453, %v5454
        %v5468 = vunpack.c.l.s4 1966171168
        %v5469 = vunpack.c.0.s8 %v5468
        %v5470 = vlaneseq
        %v5471 = vshrl.u32 %v5470, 7
        %v5472 = vsub.s32 %v5469, %v5471
        %v5473 = vrot.slane %v5463, %v5472
        %v5475 = vunpack.c.l.s4 1966171168
        %v5476 = vunpack.c.0.s8 %v5475
        %v5477 = vlaneseq
        %v5478 = vshrl.u32 %v5477, 7
        %v5479 = vsub.s32 %v5476, %v5478
        %v5480 = vrot.slane %v5464, %v5479
        %v5482 = vunpack.c.l.s4 1966171168
        %v5483 = vunpack.c.0.s8 %v5482
        %v5484 = vlaneseq
        %v5485 = vshrl.u32 %v5484, 7
        %v5486 = vsub.s32 %v5483, %v5485
        %v5487 = vrot.slane %v5465, %v5486
        %v5489 = vunpack.c.l.s4 1966171168
        %v5490 = vunpack.c.0.s8 %v5489
        %v5491 = vlaneseq
        %v5492 = vshrl.u32 %v5491, 7
        %v5493 = vsub.s32 %v5490, %v5492
        %v5494 = vrot.slane %v5466, %v5493
        %v5495 = vcombine.low %v5473, %v5480
        %v5496 = vcombine.low %v5487, %v5494
        %v5498 = vunpack.c.l.s4 1966171168
        %v5499 = vunpack.c.0.s8 %v5498
        %v5500 = vlaneseq
        %v5501 = vshrl.u32 %v5500, 7
        %v5502 = vsub.s32 %v5499, %v5501
        %v5503 = vrot.slane %v5495, %v5502
        %v5505 = vunpack.c.l.s4 1966171168
        %v5506 = vunpack.c.0.s8 %v5505
        %v5507 = vlaneseq
        %v5508 = vshrl.u32 %v5507, 7
        %v5509 = vsub.s32 %v5506, %v5508
        %v5510 = vrot.slane %v5496, %v5509
        %v5511 = vcombine.low %v5503, %v5510
        %5513 = vst [vmem:[%s459] sm:$0xff] %v5511
        %s5514 = sand.u32 %s275, 1
        %s5515 = scalar_lea.sflag [#allocation8], %s5514
        %s5516 = sand.u32 %s275, 1
        %s5517 = smul.addr %s5516, 32
        %s5518 = scalar_lea.vmem [#allocation7], %s5517
        %s5519 = sand.u32 %s301, 1
        %s5520 = scalar_lea.sflag [#allocation10], %s5519
        %s5521 = sand.u32 %s301, 1
        %s5522 = smul.addr %s5521, 64
        %s5523 = scalar_lea.vmem [#allocation9], %s5522
        %p5524 = scmp.lt.s32.totalorder %s31, 1
        %s5525 = scalar_select %p5524, %s31, 1
        %s5526 = smul.addr %s5525, 8
        %s5527 = scalar_lea.vmem %s13, %s5526
        // Predicated region
        $region65: #{posenet_feat_forward.1} parent=63 // pred_check
          %p5528 = pneg %p285
        $region66: #{posenet_feat_forward.1} parent=63 // pred_check_branch
          %5530 = sbr.rel (%p5528) target = $region68
        $region67: #{posenet_feat_forward.1} parent=63 // pred_region
          %s5532 = ssub.s32 512, 512
          %5533 = vsyncadd %s5515, %s5532
          %s5534 = smul.addr %s31, 4
          %s5535 = smul.addr %s5534, 128
          %s5536 = scalar_lea.hbm %s11, %s5535
          %s5537 = sshll.u32 %s5518, 4
          %s5538 = int_to_ptr.vmem [resolvable:$true] %s5537
          %5543 = dma.vmem_to_hbm [thread:$0]  %s5538, 512, %s5536, %s5515, 256, 256, 16
        $region68: #{posenet_feat_forward.1} parent=63 // pred_fallthru
          _
        // Predicated region
        $region69: #{posenet_feat_forward.1} parent=63 // pred_check
          %p5544 = pneg %p311
        $region70: #{posenet_feat_forward.1} parent=63 // pred_check_branch
          %5546 = sbr.rel (%p5544) target = $region72
        $region71: #{posenet_feat_forward.1} parent=63 // pred_region
          %s5548 = ssub.s32 1024, 1024
          %5549 = vsyncadd %s5520, %s5548
          %s5550 = smul.addr %s31, 8
          %s5551 = smul.addr %s5550, 128
          %s5552 = scalar_lea.hbm %s12, %s5551
          %s5553 = sshll.u32 %s5523, 4
          %s5554 = int_to_ptr.vmem [resolvable:$true] %s5553
          %5559 = dma.vmem_to_hbm [thread:$0]  %s5554, 1024, %s5552, %s5520, 512, 512, 32
        $region72: #{posenet_feat_forward.1} parent=63 // pred_fallthru
          _
        // Predicated region
        $region73: #{posenet_feat_forward.1} parent=63 // pred_check
          %p5560 = pneg %p337
        $region74: #{posenet_feat_forward.1} parent=63 // pred_check_branch
          %5562 = sbr.rel (%p5560) target = $region76
        $region75: #{posenet_feat_forward.1} parent=63 // pred_region
          _
        $region76: #{posenet_feat_forward.1} parent=63 // pred_fallthru
          _
      $region64: #{posenet_feat_forward.1} parent=5 // pred_fallthru
        _
      %p5563 = scmp.le.s32.totalorder 2, %s26
      // Predicated region
      $region77: #{posenet_feat_forward.1} parent=5 // pred_check
        %p5564 = pneg %p5563
      $region78: #{posenet_feat_forward.1} parent=5 // pred_check_branch
        %5566 = sbr.rel (%p5564) target = $region80
      $region79: #{posenet_feat_forward.1} parent=5 // pred_region
        %s5567 = ssub.s32 %s26, 2
        // Predicated region
        $region81: #{posenet_feat_forward.1} parent=79 // pred_check
          %p5568 = pneg %p291
        $region82: #{posenet_feat_forward.1} parent=79 // pred_check_branch
          %5570 = sbr.rel (%p5568) target = $region84
        $region83: #{posenet_feat_forward.1} parent=79 // pred_region
          %s5571 = sand.u32 %s276, 1
          %s5572 = scalar_lea.sflag [#allocation8], %s5571
          %s5573 = sand.u32 %s276, 1
          %s5574 = smul.addr %s5573, 32
          %s5575 = scalar_lea.vmem [#allocation7], %s5574
          %5576 = dma.done %s5572, 512
        $region84: #{posenet_feat_forward.1} parent=79 // pred_fallthru
          _
        // Predicated region
        $region85: #{posenet_feat_forward.1} parent=79 // pred_check
          %p5577 = pneg %p317
        $region86: #{posenet_feat_forward.1} parent=79 // pred_check_branch
          %5579 = sbr.rel (%p5577) target = $region88
        $region87: #{posenet_feat_forward.1} parent=79 // pred_region
          %s5580 = sand.u32 %s302, 1
          %s5581 = scalar_lea.sflag [#allocation10], %s5580
          %s5582 = sand.u32 %s302, 1
          %s5583 = smul.addr %s5582, 64
          %s5584 = scalar_lea.vmem [#allocation9], %s5583
          %5585 = dma.done %s5581, 1024
        $region88: #{posenet_feat_forward.1} parent=79 // pred_fallthru
          _
        // Predicated region
        $region89: #{posenet_feat_forward.1} parent=79 // pred_check
          %p5586 = pneg %p343
        $region90: #{posenet_feat_forward.1} parent=79 // pred_check_branch
          %5588 = sbr.rel (%p5586) target = $region92
        $region91: #{posenet_feat_forward.1} parent=79 // pred_region
          %p5589 = scmp.lt.s32.totalorder %s32, 1
          %s5590 = scalar_select %p5589, %s32, 1
          %s5591 = smul.addr %s5590, 8
          %s5592 = scalar_lea.vmem %s13, %s5591
        $region92: #{posenet_feat_forward.1} parent=79 // pred_fallthru
          _
      $region80: #{posenet_feat_forward.1} parent=5 // pred_fallthru
        _
    $region6: #{posenet_feat_forward.1} parent=1 // loop_footer
      %s30 = sadd.s32 1, %s26
    $region7: #{posenet_feat_forward.1} parent=1 // loop_footer_branch
      %25 = sbr.rel target = $region3
    $region8: #{posenet_feat_forward.1} parent=1 // loop_exit
      _
    %5593 = vsyncpa [#allocation8], 1
    %s5594 = scalar_lea.sflag [#allocation8], 1
    %5595 = vsyncpa %s5594, 1
    %5596 = vsyncpa [#allocation10], 1
    %s5597 = scalar_lea.sflag [#allocation10], 1
    %5598 = vsyncpa %s5597, 1

</llo_original>
